<compile_context>
chip_gen: v5e
topology: v5e:2x2
jax: 0.10.0
libtpu: 0.0.40
codegen_flags: <defaults>
</compile_context>

<pallas_src>
from dataclasses import dataclass, field
from typing import Any

import jax
import jax.numpy as jnp
from jax.experimental import pallas as pl
from jax.experimental.pallas import tpu as pltpu


# ----------------------------------------------------------------------------
# Fused Pallas kernel (hot path): x, eps -> mu/logvar -> z -> px -> rec/kl
# ----------------------------------------------------------------------------

def _fused_vae_kernel(x_ref,                          # (TILE_B, D) f32
                      eps_ref,                        # (TILE_B, L) f32
                      ew1_ref, eb1_ref,               # (D,H)  bf16, (1,H)  f32
                      ewmulv_ref, ebmulv_ref,         # (H,2L) bf16, (1,2L) f32
                      dw1_ref, db1_ref,               # (L,H)  bf16, (1,H)  f32
                      dw2_ref, db2_ref,               # (H,D)  bf16, (1,D)  f32
                      mu_ref, lv_ref, z_ref,          # (TILE_B, L) f32
                      px_ref,                         # (TILE_B, D) bf16
                      rec_ref, kl_ref):               # (1, 1, TILE_B) f32
    L = mu_ref.shape[-1]

    x = x_ref[...]                                    # f32, kept for the loss
    xb = x.astype(jnp.bfloat16)

    # ---- encoder (bf16 MXU, f32 accumulate) ----
    h = jnp.dot(xb, ew1_ref[...], preferred_element_type=jnp.float32)
    h = jnp.maximum(h + eb1_ref[...], 0.0)
    hb = h.astype(jnp.bfloat16)

    # fused mu/logvar projection: one N=2L matmul, slice at the 128-lane edge
    mulv = jnp.dot(hb, ewmulv_ref[...],
                   preferred_element_type=jnp.float32) + ebmulv_ref[...]
    mu = mulv[:, :L]
    lv = mulv[:, L:]

    # ---- reparameterize (eps streamed in; std reused below for KL) ----
    std = jnp.exp(0.5 * lv)                           # one EUP exp
    z = mu + std * eps_ref[...]

    # ---- decoder (bf16 MXU, f32 accumulate) ----
    zb = z.astype(jnp.bfloat16)
    hd = jnp.dot(zb, dw1_ref[...], preferred_element_type=jnp.float32)
    hd = jnp.maximum(hd + db1_ref[...], 0.0)
    hdb = hd.astype(jnp.bfloat16)
    px = jnp.dot(hdb, dw2_ref[...], preferred_element_type=jnp.float32) + db2_ref[...]

    # ---- per-observation losses (f32), lane-dense stores ----
    diff = x - px
    rec = 0.5 * jnp.sum(diff * diff, axis=-1)                         # (TILE_B,)
    kl = -0.5 * jnp.sum(1.0 + lv - mu * mu - std * std, axis=-1)      # (TILE_B,)

    mu_ref[...] = mu
    lv_ref[...] = lv
    z_ref[...] = z
    px_ref[...] = px.astype(px_ref.dtype)             # bf16 writeback (HBM saver)
    rec_ref[...] = rec[None, None, :]
    kl_ref[...] = kl[None, None, :]


def _round_up(x, m):
    return -(-x // m) * m


def fused_vae_forward(x, params, key, *, tile_b=512):
    """Whole VAE forward (encoder + reparam + decoder + per-obs loss) in one
    fused pallas_call over batch tiles."""
    B, D = x.shape
    H = params["enc_w1"].shape[1]
    L = params["enc_wmulv"].shape[1] // 2

    # Clamp tile to the (8-aligned) padded batch so tiny batches don't over-pad.
    tile_b = max(8, min(tile_b, _round_up(B, 8)))
    n_tiles = pl.cdiv(B, tile_b)
    B_pad = n_tiles * tile_b

    # jnp.pad fuses into the producer; no materialized extra copy of x.
    x_in = x if B_pad == B else jnp.pad(x, ((0, B_pad - B), (0, 0)))

    # Reparameterization noise: generated host-side per call (portable; the
    # in-kernel hardware PRNG has no lowering on non-Mosaic backends).
    eps = jax.random.normal(key, (B_pad, L), jnp.float32)

    def row_block(last):
        return pl.BlockSpec((tile_b, last), lambda i: (i, 0))

    def resident(shape):
        # weights / biases: full block, same block every grid step (VMEM-resident)
        return pl.BlockSpec(shape, lambda i: (0,) * len(shape))

    w = params
    in_specs = [
        row_block(D),                      # x tile
        row_block(L),                      # eps tile
        resident(w["enc_w1"].shape), resident(w["enc_b1"].shape),
        resident(w["enc_wmulv"].shape), resident(w["enc_bmulv"].shape),
        resident(w["dec_w1"].shape), resident(w["dec_b1"].shape),
        resident(w["dec_w2"].shape), resident(w["dec_b2"].shape),
    ]
    loss_spec = pl.BlockSpec((1, 1, tile_b), lambda i: (i, 0, 0))
    out_specs = (row_block(L), row_block(L), row_block(L), row_block(D),
                 loss_spec, loss_spec)
    out_shape = (
        jax.ShapeDtypeStruct((B_pad, L), jnp.float32),            # mu
        jax.ShapeDtypeStruct((B_pad, L), jnp.float32),            # logvar
        jax.ShapeDtypeStruct((B_pad, L), jnp.float32),            # z
        jax.ShapeDtypeStruct((B_pad, D), jnp.bfloat16),           # px (bf16 writeback)
        jax.ShapeDtypeStruct((n_tiles, 1, tile_b), jnp.float32),  # rec (lane-dense)
        jax.ShapeDtypeStruct((n_tiles, 1, tile_b), jnp.float32),  # kl  (lane-dense)
    )

    grid_spec = pltpu.PrefetchScalarGridSpec(
        num_scalar_prefetch=0,
        grid=(n_tiles,),
        in_specs=in_specs,
        out_specs=out_specs,
    )

    mu, lv, z, px, rec3, kl3 = pl.pallas_call(
        _fused_vae_kernel,
        out_shape=out_shape,
        grid_spec=grid_spec,
        compiler_params=pltpu.CompilerParams(
            dimension_semantics=("parallel",)),   # v7x: shard batch tiles over 2 TCs
    )(x_in, eps,
      w["enc_w1"], w["enc_b1"], w["enc_wmulv"], w["enc_bmulv"],
      w["dec_w1"], w["dec_b1"], w["dec_w2"], w["dec_b2"])

    rec = rec3.reshape(-1)[:B]
    kl = kl3.reshape(-1)[:B]
    return mu[:B], lv[:B], z[:B], px[:B], rec, kl


# ----------------------------------------------------------------------------
# LossOutput (faithful simplification of the flax.struct.dataclass version)
# ----------------------------------------------------------------------------

@dataclass
class LossOutput:
    loss: Any
    reconstruction_loss: Any = None
    kl_local: Any = None
    kl_global: Any = None
    classification_loss: Any = None
    logits: Any = None
    true_labels: Any = None
    extra_metrics: dict = field(default_factory=dict)
    n_obs_minibatch: int = None
    reconstruction_loss_sum: Any = None
    kl_local_sum: Any = None
    kl_global_sum: Any = None

    def __post_init__(self):
        self.loss = self.dict_sum(self.loss)
        if self.n_obs_minibatch is None and self.reconstruction_loss is None:
            raise ValueError("Must provide either n_obs_minibatch or reconstruction_loss")
        default = 0 * self.loss
        if self.reconstruction_loss is None:
            self.reconstruction_loss = default
        if self.kl_local is None:
            self.kl_local = default
        if self.kl_global is None:
            self.kl_global = default
        self.reconstruction_loss = self._as_dict("reconstruction_loss")
        self.kl_local = self._as_dict("kl_local")
        self.kl_global = self._as_dict("kl_global")
        self.reconstruction_loss_sum = self.dict_sum(self.reconstruction_loss).sum()
        self.kl_local_sum = self.dict_sum(self.kl_local).sum()
        self.kl_global_sum = self.dict_sum(self.kl_global)
        if self.reconstruction_loss is not None and self.n_obs_minibatch is None:
            rec_loss = self.reconstruction_loss
            self.n_obs_minibatch = list(rec_loss.values())[0].shape[0]

    @staticmethod
    def dict_sum(dictionary):
        if isinstance(dictionary, dict):
            return sum(dictionary.values())
        return dictionary

    def _as_dict(self, attr_name):
        attr = getattr(self, attr_name)
        if isinstance(attr, dict):
            return attr
        return {attr_name: attr}


# ----------------------------------------------------------------------------
# BaseModuleClass forward-pass plumbing (verbatim semantics)
# ----------------------------------------------------------------------------

def _get_dict_if_none(param):
    return {} if not isinstance(param, dict) else param


def _generic_forward(module, tensors, inference_kwargs, generative_kwargs,
                     loss_kwargs, get_inference_input_kwargs,
                     get_generative_input_kwargs, compute_loss):
    inference_kwargs = _get_dict_if_none(inference_kwargs)
    generative_kwargs = _get_dict_if_none(generative_kwargs)
    loss_kwargs = _get_dict_if_none(loss_kwargs)
    get_inference_input_kwargs = _get_dict_if_none(get_inference_input_kwargs)
    get_generative_input_kwargs = _get_dict_if_none(get_generative_input_kwargs)
    inference_inputs = module._get_inference_input(tensors, **get_inference_input_kwargs)
    inference_outputs = module.inference(**inference_inputs, **inference_kwargs)
    generative_inputs = module._get_generative_input(
        tensors, inference_outputs, **get_generative_input_kwargs)
    generative_outputs = module.generative(**generative_inputs, **generative_kwargs)
    if compute_loss:
        losses = module.loss(tensors, inference_outputs, generative_outputs, **loss_kwargs)
        return inference_outputs, generative_outputs, losses
    return inference_outputs, generative_outputs


class SyntheticVAEModule:
    """Concrete BaseModuleClass: minimal VAE whose whole forward runs in one
    fused Pallas kernel (encoder + reparameterization + decoder + loss)."""

    def __init__(self, n_input=256, n_hidden=256, n_latent=128, tile_b=512, seed=0):
        keys = jax.random.split(jax.random.PRNGKey(seed), 5)
        s = 0.05
        f32, bf16 = jnp.float32, jnp.bfloat16
        # weights stored bf16 (halves weight DMA bytes, native MXU rate);
        # biases stored f32 (elementwise adds stay f32, safe on v5e VPU).
        # mu/logvar projections concatenated into one (H, 2L) weight so the
        # encoder head is a single N=256 MXU matmul on v6e/v7x.
        wmu = s * jax.random.normal(keys[1], (n_hidden, n_latent), f32)
        wlv = s * jax.random.normal(keys[2], (n_hidden, n_latent), f32)
        self.params = {
            "enc_w1": (s * jax.random.normal(keys[0], (n_input, n_hidden), f32)).astype(bf16),
            "enc_b1": jnp.zeros((1, n_hidden), f32),
            "enc_wmulv": jnp.concatenate([wmu, wlv], axis=1).astype(bf16),
            "enc_bmulv": jnp.zeros((1, 2 * n_latent), f32),
            "dec_w1": (s * jax.random.normal(keys[3], (n_latent, n_hidden), f32)).astype(bf16),
            "dec_b1": jnp.zeros((1, n_hidden), f32),
            "dec_w2": (s * jax.random.normal(keys[4], (n_hidden, n_input), f32)).astype(bf16),
            "dec_b2": jnp.zeros((1, n_input), f32),
        }
        self.tile_b = tile_b
        # Per-call RNG: fold_in a Python step counter so each forward() draws
        # fresh noise.  NOTE: if the module itself is captured inside jax.jit,
        # the counter only advances at trace time — pass an explicit key via
        # inference_kwargs={"rng_key": ...} in that case.
        self._base_key = jax.random.PRNGKey(seed + 1)
        self._step = 0

    # -- BaseModuleClass.forward -------------------------------------------
    def forward(self, tensors, get_inference_input_kwargs=None,
                get_generative_input_kwargs=None, inference_kwargs=None,
                generative_kwargs=None, loss_kwargs=None, compute_loss=True):
        return _generic_forward(self, tensors, inference_kwargs, generative_kwargs,
                                loss_kwargs, get_inference_input_kwargs,
                                get_generative_input_kwargs, compute_loss)

    # -- abstract-method implementations -----------------------------------
    def _get_inference_input(self, tensors, **kwargs):
        return {"x": tensors["X"]}

    def inference(self, x, rng_key=None, **kwargs):
        # Encoder, reparam, decoder and per-obs losses are all produced by one
        # fused Pallas call; downstream generative()/loss() reuse the cached
        # results (pure function of the same inputs, semantics unchanged).
        if rng_key is None:
            rng_key = jax.random.fold_in(self._base_key, self._step)
            self._step += 1
        mu, logvar, z, px, rec, kl = fused_vae_forward(
            x, self.params, rng_key, tile_b=self.tile_b)
        return {"qz_m": mu, "qz_v_log": logvar, "z": z,
                "_px": px, "_rec": rec, "_kl": kl}

    def _get_generative_input(self, tensors, inference_outputs, **kwargs):
        return {"z": inference_outputs["z"], "px": inference_outputs["_px"]}

    def generative(self, z, px, **kwargs):
        # decoder already executed inside the fused Pallas kernel
        return {"px": px}

    def loss(self, tensors, inference_outputs, generative_outputs, **kwargs):
        rec = inference_outputs["_rec"]
        kl = inference_outputs["_kl"]
        total = jnp.mean(rec + kl)
        return LossOutput(loss=total, reconstruction_loss=rec, kl_local=kl)

    def sample(self, *args, **kwargs):
        # TODO(synk): sampling path (decode from prior) not exercised by forward().
        raise NotImplementedError


if __name__ == "__main__":
    key = jax.random.PRNGKey(0)
    # lane-friendly small shapes: batch=256, features=256, hidden=256, latent=128
    # (tile_b defaults to 512 but clamps to the batch, so this runs as one tile)
    B, D, H, L = 256, 256, 256, 128
    x = jax.random.normal(key, (B, D), jnp.float32)
    module = SyntheticVAEModule(n_input=D, n_hidden=H, n_latent=L, tile_b=512, seed=0)

    inference_outputs, generative_outputs, losses = module.forward({"X": x})

    jax.block_until_ready(losses.loss)
    jax.block_until_ready(generative_outputs["px"])
    assert losses.n_obs_minibatch == B
    assert losses.loss.shape == ()
    assert bool(jnp.isfinite(losses.loss))
    assert generative_outputs["px"].shape == (B, D)
    assert inference_outputs["qz_m"].shape == (B, L)
    assert losses.reconstruction_loss["reconstruction_loss"].shape == (B,)
    print("KERNEL_OK")
</pallas_src>

<mosaic_0001>
module attributes {stable_mosaic.version = 11 : i64} {
  func.func @_fused_vae_kernel(%arg0: i32, %arg1: memref<256x256xf32, #tpu.memory_space<vmem>>, %arg2: memref<256x128xf32, #tpu.memory_space<vmem>>, %arg3: memref<256x256xbf16, #tpu.memory_space<vmem>>, %arg4: memref<1x256xf32, #tpu.memory_space<vmem>>, %arg5: memref<256x256xbf16, #tpu.memory_space<vmem>>, %arg6: memref<1x256xf32, #tpu.memory_space<vmem>>, %arg7: memref<128x256xbf16, #tpu.memory_space<vmem>>, %arg8: memref<1x256xf32, #tpu.memory_space<vmem>>, %arg9: memref<256x256xbf16, #tpu.memory_space<vmem>>, %arg10: memref<1x256xf32, #tpu.memory_space<vmem>>, %arg11: memref<256x128xf32, #tpu.memory_space<vmem>>, %arg12: memref<256x128xf32, #tpu.memory_space<vmem>>, %arg13: memref<256x128xf32, #tpu.memory_space<vmem>>, %arg14: memref<256x256xbf16, #tpu.memory_space<vmem>>, %arg15: memref<1x1x256xf32, #tpu.memory_space<vmem>>, %arg16: memref<1x1x256xf32, #tpu.memory_space<vmem>>) attributes {dimension_semantics = [#tpu.dimension_semantics<parallel>], iteration_bounds = array<i64: 1>, scalar_prefetch = 0 : i64, scratch_operands = 0 : i64, tpu.core_type = #tpu.core_type<tc>, window_params = [{transform_indices = @transform_0, window_bounds = array<i64: 256, 256>}, {transform_indices = @transform_1, window_bounds = array<i64: 256, 128>}, {pipeline_mode = #tpu.pipeline_mode<synchronous>, transform_indices = @transform_2, window_bounds = array<i64: 256, 256>}, {pipeline_mode = #tpu.pipeline_mode<synchronous>, transform_indices = @transform_3, window_bounds = array<i64: 1, 256>}, {pipeline_mode = #tpu.pipeline_mode<synchronous>, transform_indices = @transform_4, window_bounds = array<i64: 256, 256>}, {pipeline_mode = #tpu.pipeline_mode<synchronous>, transform_indices = @transform_5, window_bounds = array<i64: 1, 256>}, {pipeline_mode = #tpu.pipeline_mode<synchronous>, transform_indices = @transform_6, window_bounds = array<i64: 128, 256>}, {pipeline_mode = #tpu.pipeline_mode<synchronous>, transform_indices = @transform_7, window_bounds = array<i64: 1, 256>}, {pipeline_mode = #tpu.pipeline_mode<synchronous>, transform_indices = @transform_8, window_bounds = array<i64: 256, 256>}, {pipeline_mode = #tpu.pipeline_mode<synchronous>, transform_indices = @transform_9, window_bounds = array<i64: 1, 256>}, {transform_indices = @transform_10, window_bounds = array<i64: 256, 128>}, {transform_indices = @transform_11, window_bounds = array<i64: 256, 128>}, {transform_indices = @transform_12, window_bounds = array<i64: 256, 128>}, {transform_indices = @transform_13, window_bounds = array<i64: 256, 256>}, {transform_indices = @transform_14, window_bounds = array<i64: 1, 1, 256>}, {transform_indices = @transform_15, window_bounds = array<i64: 1, 1, 256>}]} {
    %c0 = arith.constant 0 : index
    %c0_0 = arith.constant 0 : index
    %0 = vector.load %arg1[%c0, %c0_0] : memref<256x256xf32, #tpu.memory_space<vmem>>, vector<256x256xf32>
    %1 = arith.truncf %0 : vector<256x256xf32> to vector<256x256xbf16>
    %c0_1 = arith.constant 0 : index
    %c0_2 = arith.constant 0 : index
    %2 = vector.load %arg3[%c0_1, %c0_2] : memref<256x256xbf16, #tpu.memory_space<vmem>>, vector<256x256xbf16>
    %cst = arith.constant dense<0.000000e+00> : vector<256x256xf32>
    %3 = tpu.matmul %1, %2, %cst {dimension_numbers = #tpu.dot_dimension_numbers<[1], [0], [0], [1], [0, 0, 1, 1], [], []>} : vector<256x256xbf16>, vector<256x256xbf16>, vector<256x256xf32> -> vector<256x256xf32>
    %c0_3 = arith.constant 0 : index
    %c0_4 = arith.constant 0 : index
    %4 = vector.load %arg4[%c0_3, %c0_4] : memref<1x256xf32, #tpu.memory_space<vmem>>, vector<1x256xf32>
    %5 = vector.broadcast %4 : vector<1x256xf32> to vector<256x256xf32>
    %6 = arith.addf %3, %5 : vector<256x256xf32>
    %cst_5 = arith.constant 0.000000e+00 : f32
    %7 = vector.broadcast %cst_5 : f32 to vector<256x256xf32>
    %8 = arith.maximumf %6, %7 : vector<256x256xf32>
    %9 = arith.truncf %8 : vector<256x256xf32> to vector<256x256xbf16>
    %c0_6 = arith.constant 0 : index
    %c0_7 = arith.constant 0 : index
    %10 = vector.load %arg5[%c0_6, %c0_7] : memref<256x256xbf16, #tpu.memory_space<vmem>>, vector<256x256xbf16>
    %cst_8 = arith.constant dense<0.000000e+00> : vector<256x256xf32>
    %11 = tpu.matmul %9, %10, %cst_8 {dimension_numbers = #tpu.dot_dimension_numbers<[1], [0], [0], [1], [0, 0, 1, 1], [], []>} : vector<256x256xbf16>, vector<256x256xbf16>, vector<256x256xf32> -> vector<256x256xf32>
    %c0_9 = arith.constant 0 : index
    %c0_10 = arith.constant 0 : index
    %12 = vector.load %arg6[%c0_9, %c0_10] : memref<1x256xf32, #tpu.memory_space<vmem>>, vector<1x256xf32>
    %13 = vector.broadcast %12 : vector<1x256xf32> to vector<256x256xf32>
    %14 = arith.addf %11, %13 : vector<256x256xf32>
    %15 = vector.extract_strided_slice %14 {offsets = [0, 0], sizes = [256, 128], strides = [1, 1]} : vector<256x256xf32> to vector<256x128xf32>
    %16 = vector.extract_strided_slice %14 {offsets = [0, 128], sizes = [256, 128], strides = [1, 1]} : vector<256x256xf32> to vector<256x128xf32>
    %cst_11 = arith.constant 5.000000e-01 : f32
    %17 = vector.broadcast %cst_11 : f32 to vector<256x128xf32>
    %18 = arith.mulf %17, %16 : vector<256x128xf32>
    %19 = math.exp %18 : vector<256x128xf32>
    %c0_12 = arith.constant 0 : index
    %c0_13 = arith.constant 0 : index
    %20 = vector.load %arg2[%c0_12, %c0_13] : memref<256x128xf32, #tpu.memory_space<vmem>>, vector<256x128xf32>
    %21 = arith.mulf %19, %20 : vector<256x128xf32>
    %22 = arith.addf %15, %21 : vector<256x128xf32>
    %23 = arith.truncf %22 : vector<256x128xf32> to vector<256x128xbf16>
    %c0_14 = arith.constant 0 : index
    %c0_15 = arith.constant 0 : index
    %24 = vector.load %arg7[%c0_14, %c0_15] : memref<128x256xbf16, #tpu.memory_space<vmem>>, vector<128x256xbf16>
    %cst_16 = arith.constant dense<0.000000e+00> : vector<256x256xf32>
    %25 = tpu.matmul %23, %24, %cst_16 {dimension_numbers = #tpu.dot_dimension_numbers<[1], [0], [0], [1], [0, 0, 1, 1], [], []>} : vector<256x128xbf16>, vector<128x256xbf16>, vector<256x256xf32> -> vector<256x256xf32>
    %c0_17 = arith.constant 0 : index
    %c0_18 = arith.constant 0 : index
    %26 = vector.load %arg8[%c0_17, %c0_18] : memref<1x256xf32, #tpu.memory_space<vmem>>, vector<1x256xf32>
    %27 = vector.broadcast %26 : vector<1x256xf32> to vector<256x256xf32>
    %28 = arith.addf %25, %27 : vector<256x256xf32>
    %cst_19 = arith.constant 0.000000e+00 : f32
    %29 = vector.broadcast %cst_19 : f32 to vector<256x256xf32>
    %30 = arith.maximumf %28, %29 : vector<256x256xf32>
    %31 = arith.truncf %30 : vector<256x256xf32> to vector<256x256xbf16>
    %c0_20 = arith.constant 0 : index
    %c0_21 = arith.constant 0 : index
    %32 = vector.load %arg9[%c0_20, %c0_21] : memref<256x256xbf16, #tpu.memory_space<vmem>>, vector<256x256xbf16>
    %cst_22 = arith.constant dense<0.000000e+00> : vector<256x256xf32>
    %33 = tpu.matmul %31, %32, %cst_22 {dimension_numbers = #tpu.dot_dimension_numbers<[1], [0], [0], [1], [0, 0, 1, 1], [], []>} : vector<256x256xbf16>, vector<256x256xbf16>, vector<256x256xf32> -> vector<256x256xf32>
    %c0_23 = arith.constant 0 : index
    %c0_24 = arith.constant 0 : index
    %34 = vector.load %arg10[%c0_23, %c0_24] : memref<1x256xf32, #tpu.memory_space<vmem>>, vector<1x256xf32>
    %35 = vector.broadcast %34 : vector<1x256xf32> to vector<256x256xf32>
    %36 = arith.addf %33, %35 : vector<256x256xf32>
    %37 = arith.subf %0, %36 : vector<256x256xf32>
    %38 = arith.mulf %37, %37 : vector<256x256xf32>
    %cst_25 = arith.constant dense<0.000000e+00> : vector<256xf32>
    %39 = vector.multi_reduction <add>, %38, %cst_25 [1] : vector<256x256xf32> to vector<256xf32>
    %cst_26 = arith.constant 5.000000e-01 : f32
    %40 = vector.broadcast %cst_26 : f32 to vector<256xf32>
    %41 = arith.mulf %40, %39 : vector<256xf32>
    %cst_27 = arith.constant 1.000000e+00 : f32
    %42 = vector.broadcast %cst_27 : f32 to vector<256x128xf32>
    %43 = arith.addf %42, %16 : vector<256x128xf32>
    %44 = arith.mulf %15, %15 : vector<256x128xf32>
    %45 = arith.subf %43, %44 : vector<256x128xf32>
    %46 = arith.mulf %19, %19 : vector<256x128xf32>
    %47 = arith.subf %45, %46 : vector<256x128xf32>
    %cst_28 = arith.constant dense<0.000000e+00> : vector<256xf32>
    %48 = vector.multi_reduction <add>, %47, %cst_28 [1] : vector<256x128xf32> to vector<256xf32>
    %cst_29 = arith.constant -5.000000e-01 : f32
    %49 = vector.broadcast %cst_29 : f32 to vector<256xf32>
    %50 = arith.mulf %49, %48 : vector<256xf32>
    %c0_30 = arith.constant 0 : index
    %c0_31 = arith.constant 0 : index
    %51 = vector.load %arg11[%c0_30, %c0_31] : memref<256x128xf32, #tpu.memory_space<vmem>>, vector<256x128xf32>
    tpu.vector_store %arg11[%c0_30, %c0_31], %15 {strides = array<i32>} : memref<256x128xf32, #tpu.memory_space<vmem>>, vector<256x128xf32>,
    %c0_32 = arith.constant 0 : index
    %c0_33 = arith.constant 0 : index
    %52 = vector.load %arg12[%c0_32, %c0_33] : memref<256x128xf32, #tpu.memory_space<vmem>>, vector<256x128xf32>
    tpu.vector_store %arg12[%c0_32, %c0_33], %16 {strides = array<i32>} : memref<256x128xf32, #tpu.memory_space<vmem>>, vector<256x128xf32>,
    %c0_34 = arith.constant 0 : index
    %c0_35 = arith.constant 0 : index
    %53 = vector.load %arg13[%c0_34, %c0_35] : memref<256x128xf32, #tpu.memory_space<vmem>>, vector<256x128xf32>
    tpu.vector_store %arg13[%c0_34, %c0_35], %22 {strides = array<i32>} : memref<256x128xf32, #tpu.memory_space<vmem>>, vector<256x128xf32>,
    %54 = arith.truncf %36 : vector<256x256xf32> to vector<256x256xbf16>
    %c0_36 = arith.constant 0 : index
    %c0_37 = arith.constant 0 : index
    %55 = vector.load %arg14[%c0_36, %c0_37] : memref<256x256xbf16, #tpu.memory_space<vmem>>, vector<256x256xbf16>
    tpu.vector_store %arg14[%c0_36, %c0_37], %54 {strides = array<i32>} : memref<256x256xbf16, #tpu.memory_space<vmem>>, vector<256x256xbf16>,
    %56 = vector.shape_cast %41 : vector<256xf32> to vector<1x1x256xf32>
    %c0_38 = arith.constant 0 : index
    %c0_39 = arith.constant 0 : index
    %c0_40 = arith.constant 0 : index
    %57 = vector.load %arg15[%c0_38, %c0_39, %c0_40] : memref<1x1x256xf32, #tpu.memory_space<vmem>>, vector<1x1x256xf32>
    tpu.vector_store %arg15[%c0_38, %c0_39, %c0_40], %56 {strides = array<i32>} : memref<1x1x256xf32, #tpu.memory_space<vmem>>, vector<1x1x256xf32>,
    %58 = vector.shape_cast %50 : vector<256xf32> to vector<1x1x256xf32>
    %c0_41 = arith.constant 0 : index
    %c0_42 = arith.constant 0 : index
    %c0_43 = arith.constant 0 : index
    %59 = vector.load %arg16[%c0_41, %c0_42, %c0_43] : memref<1x1x256xf32, #tpu.memory_space<vmem>>, vector<1x1x256xf32>
    tpu.vector_store %arg16[%c0_41, %c0_42, %c0_43], %58 {strides = array<i32>} : memref<1x1x256xf32, #tpu.memory_space<vmem>>, vector<1x1x256xf32>,
    return
  }
  func.func @transform_0(%arg0: i32) -> (i32, i32) {
    %c0_i32 = arith.constant 0 : i32
    %c0_i32_0 = arith.constant 0 : i32
    return %arg0, %c0_i32 : i32, i32
  }
  func.func @transform_1(%arg0: i32) -> (i32, i32) {
    %c0_i32 = arith.constant 0 : i32
    %c0_i32_0 = arith.constant 0 : i32
    return %arg0, %c0_i32 : i32, i32
  }
  func.func @transform_2(%arg0: i32) -> (i32, i32) {
    %c0_i32 = arith.constant 0 : i32
    %c0_i32_0 = arith.constant 0 : i32
    %c0_i32_1 = arith.constant 0 : i32
    return %c0_i32, %c0_i32_0 : i32, i32
  }
  func.func @transform_3(%arg0: i32) -> (i32, i32) {
    %c0_i32 = arith.constant 0 : i32
    %c0_i32_0 = arith.constant 0 : i32
    %c0_i32_1 = arith.constant 0 : i32
    return %c0_i32, %c0_i32_0 : i32, i32
  }
  func.func @transform_4(%arg0: i32) -> (i32, i32) {
    %c0_i32 = arith.constant 0 : i32
    %c0_i32_0 = arith.constant 0 : i32
    %c0_i32_1 = arith.constant 0 : i32
    return %c0_i32, %c0_i32_0 : i32, i32
  }
  func.func @transform_5(%arg0: i32) -> (i32, i32) {
    %c0_i32 = arith.constant 0 : i32
    %c0_i32_0 = arith.constant 0 : i32
    %c0_i32_1 = arith.constant 0 : i32
    return %c0_i32, %c0_i32_0 : i32, i32
  }
  func.func @transform_6(%arg0: i32) -> (i32, i32) {
    %c0_i32 = arith.constant 0 : i32
    %c0_i32_0 = arith.constant 0 : i32
    %c0_i32_1 = arith.constant 0 : i32
    return %c0_i32, %c0_i32_0 : i32, i32
  }
  func.func @transform_7(%arg0: i32) -> (i32, i32) {
    %c0_i32 = arith.constant 0 : i32
    %c0_i32_0 = arith.constant 0 : i32
    %c0_i32_1 = arith.constant 0 : i32
    return %c0_i32, %c0_i32_0 : i32, i32
  }
  func.func @transform_8(%arg0: i32) -> (i32, i32) {
    %c0_i32 = arith.constant 0 : i32
    %c0_i32_0 = arith.constant 0 : i32
    %c0_i32_1 = arith.constant 0 : i32
    return %c0_i32, %c0_i32_0 : i32, i32
  }
  func.func @transform_9(%arg0: i32) -> (i32, i32) {
    %c0_i32 = arith.constant 0 : i32
    %c0_i32_0 = arith.constant 0 : i32
    %c0_i32_1 = arith.constant 0 : i32
    return %c0_i32, %c0_i32_0 : i32, i32
  }
  func.func @transform_10(%arg0: i32) -> (i32, i32) {
    %c0_i32 = arith.constant 0 : i32
    %c0_i32_0 = arith.constant 0 : i32
    return %arg0, %c0_i32 : i32, i32
  }
  func.func @transform_11(%arg0: i32) -> (i32, i32) {
    %c0_i32 = arith.constant 0 : i32
    %c0_i32_0 = arith.constant 0 : i32
    return %arg0, %c0_i32 : i32, i32
  }
  func.func @transform_12(%arg0: i32) -> (i32, i32) {
    %c0_i32 = arith.constant 0 : i32
    %c0_i32_0 = arith.constant 0 : i32
    return %arg0, %c0_i32 : i32, i32
  }
  func.func @transform_13(%arg0: i32) -> (i32, i32) {
    %c0_i32 = arith.constant 0 : i32
    %c0_i32_0 = arith.constant 0 : i32
    return %arg0, %c0_i32 : i32, i32
  }
  func.func @transform_14(%arg0: i32) -> (i32, i32, i32) {
    %c0_i32 = arith.constant 0 : i32
    %c0_i32_0 = arith.constant 0 : i32
    %c0_i32_1 = arith.constant 0 : i32
    return %arg0, %c0_i32, %c0_i32_0 : i32, i32, i32
  }
  func.func @transform_15(%arg0: i32) -> (i32, i32, i32) {
    %c0_i32 = arith.constant 0 : i32
    %c0_i32_0 = arith.constant 0 : i32
    %c0_i32_1 = arith.constant 0 : i32
    return %arg0, %c0_i32, %c0_i32_0 : i32, i32, i32
  }
}

</mosaic_0001>

<llo_original>
// kernel: tpu_custom_call.1
$region0: #{tpu_custom_call.1}
  #allocation0 [shape = 'u32[]', space=smem, size = 0x4, offset = 0x4, fixed_abs, tag = 'smem constant byte address 0x4 - core index']
  #allocation1 [shape = 'u32[72,128]{1,0:T(1,128)}', space=vmem, size = 0x9000, scoped, tag = 'internal scratch']
  %s0 = inlined_call_operand.hbm [shape: f32[256,256], index: 0, kind: input, shape index: {}]
  %s1 = inlined_call_operand.hbm [shape: f32[256,128], index: 1, kind: input, shape index: {}]
  %s2 = inlined_call_operand.hbm [shape: bf16[256,256], index: 2, kind: input, shape index: {}]
  %s3 = inlined_call_operand.vmem [shape: f32[1,256], index: 3, kind: input, shape index: {}]
  %s4 = inlined_call_operand.hbm [shape: bf16[256,256], index: 4, kind: input, shape index: {}]
  %s5 = inlined_call_operand.vmem [shape: f32[1,256], index: 5, kind: input, shape index: {}]
  %s6 = inlined_call_operand.hbm [shape: bf16[128,256], index: 6, kind: input, shape index: {}]
  %s7 = inlined_call_operand.vmem [shape: f32[1,256], index: 7, kind: input, shape index: {}]
  %s8 = inlined_call_operand.hbm [shape: bf16[256,256], index: 8, kind: input, shape index: {}]
  %s9 = inlined_call_operand.vmem [shape: f32[1,256], index: 9, kind: input, shape index: {}]
  %s10 = inlined_call_operand.hbm [shape: f32[256,128], index: 10, kind: output, shape index: {0}]
  %s11 = inlined_call_operand.hbm [shape: f32[256,128], index: 11, kind: output, shape index: {1}]
  %s12 = inlined_call_operand.hbm [shape: f32[256,128], index: 12, kind: output, shape index: {2}]
  %s13 = inlined_call_operand.hbm [shape: bf16[256,256], index: 13, kind: output, shape index: {3}]
  %s14 = inlined_call_operand.hbm [shape: f32[1,1,256], index: 14, kind: output, shape index: {4}]
  %s15 = inlined_call_operand.hbm [shape: f32[1,1,256], index: 15, kind: output, shape index: {5}]
  %16 = xla_tuple %s10, %s11, %s12, %s13, %s14, %s15
  %s17 = sld [smem:[#allocation0]]
  $region114: #{tpu_custom_call.1} parent=0
    _
  %s19 = ssub.s32 1, %s17
  %s20 = scalar_select 0, %s19, %s17
  $region1: #{tpu_custom_call.1} parent=0
    #allocation2 [shape = 'u8[262144]{0}', space=vmem, size = 0x40000, scoped, tag = 'input window, operand 0, single buffered']
    #allocation3 [shape = 's32[1]{0}', space=sflag, size = 0x4, scoped, tag = 'scoped memory for tpu_custom_call.1']
    #allocation4 [shape = 's32[1]{0}', space=sflag, size = 0x4, scoped, tag = 'scoped memory for tpu_custom_call.1']
    #allocation5 [shape = 'u8[131072]{0}', space=vmem, size = 0x20000, scoped, tag = 'input window, operand 1, single buffered']
    #allocation6 [shape = 's32[1]{0}', space=sflag, size = 0x4, scoped, tag = 'scoped memory for tpu_custom_call.1']
    #allocation7 [shape = 'u8[131072]{0}', space=vmem, size = 0x20000, scoped, tag = 'input window, operand 2, single buffered']
    #allocation8 [shape = 'u8[131072]{0}', space=vmem, size = 0x20000, scoped, tag = 'input window, operand 4, single buffered']
    #allocation9 [shape = 's32[1]{0}', space=sflag, size = 0x4, scoped, tag = 'scoped memory for tpu_custom_call.1']
    #allocation10 [shape = 'u8[65536]{0}', space=vmem, size = 0x10000, scoped, tag = 'input window, operand 6, single buffered']
    #allocation11 [shape = 'u8[131072]{0}', space=vmem, size = 0x20000, scoped, tag = 'input window, operand 8, single buffered']
    #allocation12 [shape = 's32[1]{0}', space=sflag, size = 0x4, scoped, tag = 'scoped memory for tpu_custom_call.1']
    #allocation13 [shape = 'u8[131072]{0}', space=vmem, size = 0x20000, scoped, tag = 'output window, operand 0, single buffered']
    #allocation14 [shape = 'u8[131072]{0}', space=vmem, size = 0x20000, scoped, tag = 'output window, operand 1, single buffered']
    #allocation15 [shape = 's32[1]{0}', space=sflag, size = 0x4, scoped, tag = 'scoped memory for tpu_custom_call.1']
    #allocation16 [shape = 'u8[131072]{0}', space=vmem, size = 0x20000, scoped, tag = 'output window, operand 2, single buffered']
    #allocation17 [shape = 'u8[131072]{0}', space=vmem, size = 0x20000, scoped, tag = 'output window, operand 3, single buffered']
    #allocation18 [shape = 's32[1]{0}', space=sflag, size = 0x4, scoped, tag = 'scoped memory for tpu_custom_call.1']
    #allocation19 [shape = 'u8[1024]{0}', space=vmem, size = 0x400, scoped, tag = 'output window, operand 4, single buffered']
    #allocation20 [shape = 'u8[1024]{0}', space=vmem, size = 0x400, scoped, tag = 'output window, operand 5, single buffered']
    #allocation21 [shape = 's32[1]{0}', space=sflag, size = 0x4, scoped, tag = 'scoped memory for tpu_custom_call.1']
    %21 = vsyncpa [#allocation3], 0
    %22 = vsyncpa [#allocation6], 0
    %23 = vsyncpa [#allocation9], 0
    %24 = vsyncpa [#allocation12], 0
    %25 = vsyncpa [#allocation4], 0
    %26 = vsyncpa [#allocation15], 0
    %27 = vsyncpa [#allocation18], 0
    %28 = vsyncpa [#allocation21], 0
    // Predicated region
    $region2: #{tpu_custom_call.1} parent=1 // pred_check
      _
    $region3: #{tpu_custom_call.1} parent=1 // pred_check_branch
      %30 = sbr.rel (0) target = $region5
    $region4: #{tpu_custom_call.1} parent=1 // pred_region
      %32 = vsyncadd [#allocation3], 0
      %s33 = sshll.u32 %s0, 4
      %s34 = int_to_ptr.hbm [resolvable:$true] %s33
      %s35 = sshll.u32 [#allocation2], 4
      %s36 = int_to_ptr.vmem [resolvable:$true] %s35
      %41 = dma.hbm_to_vmem [thread:$0]  %s34, 8192, %s36, [#allocation3], 256, 256, 16
    $region5: #{tpu_custom_call.1} parent=1 // pred_fallthru
      _
    // Predicated region
    $region6: #{tpu_custom_call.1} parent=1 // pred_check
      _
    $region7: #{tpu_custom_call.1} parent=1 // pred_check_branch
      %43 = sbr.rel (0) target = $region9
    $region8: #{tpu_custom_call.1} parent=1 // pred_region
      %45 = vsyncadd [#allocation6], 0
      %s46 = sshll.u32 %s1, 4
      %s47 = int_to_ptr.hbm [resolvable:$true] %s46
      %s48 = sshll.u32 [#allocation5], 4
      %s49 = int_to_ptr.vmem [resolvable:$true] %s48
      %54 = dma.hbm_to_vmem [thread:$0]  %s47, 4096, %s49, [#allocation6], 128, 128, 8
    $region9: #{tpu_custom_call.1} parent=1 // pred_fallthru
      _
    // Predicated region
    $region10: #{tpu_custom_call.1} parent=1 // pred_check
      _
    $region11: #{tpu_custom_call.1} parent=1 // pred_check_branch
      %56 = sbr.rel (0) target = $region13
    $region12: #{tpu_custom_call.1} parent=1 // pred_region
      %58 = vsyncadd [#allocation6], 0
      %s59 = sshll.u32 %s2, 4
      %s60 = int_to_ptr.hbm [resolvable:$true] %s59
      %s61 = sshll.u32 [#allocation7], 4
      %s62 = int_to_ptr.vmem [resolvable:$true] %s61
      %67 = dma.hbm_to_vmem [thread:$0]  %s60, 4096, %s62, [#allocation6], 128, 128, 8
    $region13: #{tpu_custom_call.1} parent=1 // pred_fallthru
      _
    // Predicated region
    $region14: #{tpu_custom_call.1} parent=1 // pred_check
      _
    $region15: #{tpu_custom_call.1} parent=1 // pred_check_branch
      %69 = sbr.rel (0) target = $region17
    $region16: #{tpu_custom_call.1} parent=1 // pred_region
      _
    $region17: #{tpu_custom_call.1} parent=1 // pred_fallthru
      _
    // Predicated region
    $region18: #{tpu_custom_call.1} parent=1 // pred_check
      _
    $region19: #{tpu_custom_call.1} parent=1 // pred_check_branch
      %71 = sbr.rel (0) target = $region21
    $region20: #{tpu_custom_call.1} parent=1 // pred_region
      %73 = vsyncadd [#allocation9], 0
      %s74 = sshll.u32 %s4, 4
      %s75 = int_to_ptr.hbm [resolvable:$true] %s74
      %s76 = sshll.u32 [#allocation8], 4
      %s77 = int_to_ptr.vmem [resolvable:$true] %s76
      %82 = dma.hbm_to_vmem [thread:$0]  %s75, 4096, %s77, [#allocation9], 128, 128, 8
    $region21: #{tpu_custom_call.1} parent=1 // pred_fallthru
      _
    // Predicated region
    $region22: #{tpu_custom_call.1} parent=1 // pred_check
      _
    $region23: #{tpu_custom_call.1} parent=1 // pred_check_branch
      %84 = sbr.rel (0) target = $region25
    $region24: #{tpu_custom_call.1} parent=1 // pred_region
      _
    $region25: #{tpu_custom_call.1} parent=1 // pred_fallthru
      _
    // Predicated region
    $region26: #{tpu_custom_call.1} parent=1 // pred_check
      _
    $region27: #{tpu_custom_call.1} parent=1 // pred_check_branch
      %86 = sbr.rel (0) target = $region29
    $region28: #{tpu_custom_call.1} parent=1 // pred_region
      %88 = vsyncadd [#allocation9], 0
      %s89 = sshll.u32 %s6, 4
      %s90 = int_to_ptr.hbm [resolvable:$true] %s89
      %s91 = sshll.u32 [#allocation10], 4
      %s92 = int_to_ptr.vmem [resolvable:$true] %s91
      %97 = dma.hbm_to_vmem [thread:$0]  %s90, 2048, %s92, [#allocation9], 128, 128, 8
    $region29: #{tpu_custom_call.1} parent=1 // pred_fallthru
      _
    // Predicated region
    $region30: #{tpu_custom_call.1} parent=1 // pred_check
      _
    $region31: #{tpu_custom_call.1} parent=1 // pred_check_branch
      %99 = sbr.rel (0) target = $region33
    $region32: #{tpu_custom_call.1} parent=1 // pred_region
      _
    $region33: #{tpu_custom_call.1} parent=1 // pred_fallthru
      _
    // Predicated region
    $region34: #{tpu_custom_call.1} parent=1 // pred_check
      _
    $region35: #{tpu_custom_call.1} parent=1 // pred_check_branch
      %101 = sbr.rel (0) target = $region37
    $region36: #{tpu_custom_call.1} parent=1 // pred_region
      %103 = vsyncadd [#allocation12], 0
      %s104 = sshll.u32 %s8, 4
      %s105 = int_to_ptr.hbm [resolvable:$true] %s104
      %s106 = sshll.u32 [#allocation11], 4
      %s107 = int_to_ptr.vmem [resolvable:$true] %s106
      %112 = dma.hbm_to_vmem [thread:$0]  %s105, 4096, %s107, [#allocation12], 128, 128, 8
    $region37: #{tpu_custom_call.1} parent=1 // pred_fallthru
      _
    // Predicated region
    $region38: #{tpu_custom_call.1} parent=1 // pred_check
      _
    $region39: #{tpu_custom_call.1} parent=1 // pred_check_branch
      %114 = sbr.rel (0) target = $region41
    $region40: #{tpu_custom_call.1} parent=1 // pred_region
      _
    $region41: #{tpu_custom_call.1} parent=1 // pred_fallthru
      _
    // Predicated region
    $region42: #{tpu_custom_call.1} parent=1 // pred_check
      _
    $region43: #{tpu_custom_call.1} parent=1 // pred_check_branch
      %116 = sbr.rel (0) target = $region45
    $region44: #{tpu_custom_call.1} parent=1 // pred_region
      %118 = dma.done [#allocation3], 8192
    $region45: #{tpu_custom_call.1} parent=1 // pred_fallthru
      _
    // Predicated region
    $region46: #{tpu_custom_call.1} parent=1 // pred_check
      _
    $region47: #{tpu_custom_call.1} parent=1 // pred_check_branch
      %120 = sbr.rel (0) target = $region49
    $region48: #{tpu_custom_call.1} parent=1 // pred_region
      %122 = dma.done [#allocation6], 4096
    $region49: #{tpu_custom_call.1} parent=1 // pred_fallthru
      _
    // Predicated region
    $region50: #{tpu_custom_call.1} parent=1 // pred_check
      _
    $region51: #{tpu_custom_call.1} parent=1 // pred_check_branch
      %124 = sbr.rel (0) target = $region53
    $region52: #{tpu_custom_call.1} parent=1 // pred_region
      %126 = dma.done [#allocation6], 4096
    $region53: #{tpu_custom_call.1} parent=1 // pred_fallthru
      _
    // Predicated region
    $region54: #{tpu_custom_call.1} parent=1 // pred_check
      _
    $region55: #{tpu_custom_call.1} parent=1 // pred_check_branch
      %128 = sbr.rel (0) target = $region57
    $region56: #{tpu_custom_call.1} parent=1 // pred_region
      %130 = dma.done [#allocation9], 4096
    $region57: #{tpu_custom_call.1} parent=1 // pred_fallthru
      _
    // Predicated region
    $region58: #{tpu_custom_call.1} parent=1 // pred_check
      _
    $region59: #{tpu_custom_call.1} parent=1 // pred_check_branch
      %132 = sbr.rel (0) target = $region61
    $region60: #{tpu_custom_call.1} parent=1 // pred_region
      %134 = dma.done [#allocation9], 2048
    $region61: #{tpu_custom_call.1} parent=1 // pred_fallthru
      _
    // Predicated region
    $region62: #{tpu_custom_call.1} parent=1 // pred_check
      _
    $region63: #{tpu_custom_call.1} parent=1 // pred_check_branch
      %136 = sbr.rel (0) target = $region65
    $region64: #{tpu_custom_call.1} parent=1 // pred_region
      %138 = dma.done [#allocation12], 4096
    $region65: #{tpu_custom_call.1} parent=1 // pred_fallthru
      _
    %v139 = vld [vmem:[#allocation2] sm:$0xff]
    %v140 = vld [vmem:[#allocation2 + $0x8] sm:$0xff]
    %v141 = vld [vmem:[#allocation2 + $0x10] sm:$0xff]
    %v142 = vld [vmem:[#allocation2 + $0x18] sm:$0xff]
    %v143 = vld [vmem:[#allocation2 + $0x20] sm:$0xff]
    %v144 = vld [vmem:[#allocation2 + $0x28] sm:$0xff]
    %v145 = vld [vmem:[#allocation2 + $0x30] sm:$0xff]
    %v146 = vld [vmem:[#allocation2 + $0x38] sm:$0xff]
    %v147 = vld [vmem:[#allocation2 + $0x40] sm:$0xff]
    %v148 = vld [vmem:[#allocation2 + $0x48] sm:$0xff]
    %v149 = vld [vmem:[#allocation2 + $0x50] sm:$0xff]
    %v150 = vld [vmem:[#allocation2 + $0x58] sm:$0xff]
    %v151 = vld [vmem:[#allocation2 + $0x60] sm:$0xff]
    %v152 = vld [vmem:[#allocation2 + $0x68] sm:$0xff]
    %v153 = vld [vmem:[#allocation2 + $0x70] sm:$0xff]
    %v154 = vld [vmem:[#allocation2 + $0x78] sm:$0xff]
    %v155 = vld [vmem:[#allocation2 + $0x80] sm:$0xff]
    %v156 = vld [vmem:[#allocation2 + $0x88] sm:$0xff]
    %v157 = vld [vmem:[#allocation2 + $0x90] sm:$0xff]
    %v158 = vld [vmem:[#allocation2 + $0x98] sm:$0xff]
    %v159 = vld [vmem:[#allocation2 + $0xa0] sm:$0xff]
    %v160 = vld [vmem:[#allocation2 + $0xa8] sm:$0xff]
    %v161 = vld [vmem:[#allocation2 + $0xb0] sm:$0xff]
    %v162 = vld [vmem:[#allocation2 + $0xb8] sm:$0xff]
    %v163 = vld [vmem:[#allocation2 + $0xc0] sm:$0xff]
    %v164 = vld [vmem:[#allocation2 + $0xc8] sm:$0xff]
    %v165 = vld [vmem:[#allocation2 + $0xd0] sm:$0xff]
    %v166 = vld [vmem:[#allocation2 + $0xd8] sm:$0xff]
    %v167 = vld [vmem:[#allocation2 + $0xe0] sm:$0xff]
    %v168 = vld [vmem:[#allocation2 + $0xe8] sm:$0xff]
    %v169 = vld [vmem:[#allocation2 + $0xf0] sm:$0xff]
    %v170 = vld [vmem:[#allocation2 + $0xf8] sm:$0xff]
    %v171 = vld [vmem:[#allocation2 + $0x100] sm:$0xff]
    %v172 = vld [vmem:[#allocation2 + $0x108] sm:$0xff]
    %v173 = vld [vmem:[#allocation2 + $0x110] sm:$0xff]
    %v174 = vld [vmem:[#allocation2 + $0x118] sm:$0xff]
    %v175 = vld [vmem:[#allocation2 + $0x120] sm:$0xff]
    %v176 = vld [vmem:[#allocation2 + $0x128] sm:$0xff]
    %v177 = vld [vmem:[#allocation2 + $0x130] sm:$0xff]
    %v178 = vld [vmem:[#allocation2 + $0x138] sm:$0xff]
    %v179 = vld [vmem:[#allocation2 + $0x140] sm:$0xff]
    %v180 = vld [vmem:[#allocation2 + $0x148] sm:$0xff]
    %v181 = vld [vmem:[#allocation2 + $0x150] sm:$0xff]
    %v182 = vld [vmem:[#allocation2 + $0x158] sm:$0xff]
    %v183 = vld [vmem:[#allocation2 + $0x160] sm:$0xff]
    %v184 = vld [vmem:[#allocation2 + $0x168] sm:$0xff]
    %v185 = vld [vmem:[#allocation2 + $0x170] sm:$0xff]
    %v186 = vld [vmem:[#allocation2 + $0x178] sm:$0xff]
    %v187 = vld [vmem:[#allocation2 + $0x180] sm:$0xff]
    %v188 = vld [vmem:[#allocation2 + $0x188] sm:$0xff]
    %v189 = vld [vmem:[#allocation2 + $0x190] sm:$0xff]
    %v190 = vld [vmem:[#allocation2 + $0x198] sm:$0xff]
    %v191 = vld [vmem:[#allocation2 + $0x1a0] sm:$0xff]
    %v192 = vld [vmem:[#allocation2 + $0x1a8] sm:$0xff]
    %v193 = vld [vmem:[#allocation2 + $0x1b0] sm:$0xff]
    %v194 = vld [vmem:[#allocation2 + $0x1b8] sm:$0xff]
    %v195 = vld [vmem:[#allocation2 + $0x1c0] sm:$0xff]
    %v196 = vld [vmem:[#allocation2 + $0x1c8] sm:$0xff]
    %v197 = vld [vmem:[#allocation2 + $0x1d0] sm:$0xff]
    %v198 = vld [vmem:[#allocation2 + $0x1d8] sm:$0xff]
    %v199 = vld [vmem:[#allocation2 + $0x1e0] sm:$0xff]
    %v200 = vld [vmem:[#allocation2 + $0x1e8] sm:$0xff]
    %v201 = vld [vmem:[#allocation2 + $0x1f0] sm:$0xff]
    %v202 = vld [vmem:[#allocation2 + $0x1f8] sm:$0xff]
    %v203 = vpack.c.bf16 %v141, %v139
    %v204 = vpack.c.bf16 %v142, %v140
    %v205 = vpack.c.bf16 %v145, %v143
    %v206 = vpack.c.bf16 %v146, %v144
    %v207 = vpack.c.bf16 %v149, %v147
    %v208 = vpack.c.bf16 %v150, %v148
    %v209 = vpack.c.bf16 %v153, %v151
    %v210 = vpack.c.bf16 %v154, %v152
    %v211 = vpack.c.bf16 %v157, %v155
    %v212 = vpack.c.bf16 %v158, %v156
    %v213 = vpack.c.bf16 %v161, %v159
    %v214 = vpack.c.bf16 %v162, %v160
    %v215 = vpack.c.bf16 %v165, %v163
    %v216 = vpack.c.bf16 %v166, %v164
    %v217 = vpack.c.bf16 %v169, %v167
    %v218 = vpack.c.bf16 %v170, %v168
    %v219 = vpack.c.bf16 %v173, %v171
    %v220 = vpack.c.bf16 %v174, %v172
    %v221 = vpack.c.bf16 %v177, %v175
    %v222 = vpack.c.bf16 %v178, %v176
    %v223 = vpack.c.bf16 %v181, %v179
    %v224 = vpack.c.bf16 %v182, %v180
    %v225 = vpack.c.bf16 %v185, %v183
    %v226 = vpack.c.bf16 %v186, %v184
    %v227 = vpack.c.bf16 %v189, %v187
    %v228 = vpack.c.bf16 %v190, %v188
    %v229 = vpack.c.bf16 %v193, %v191
    %v230 = vpack.c.bf16 %v194, %v192
    %v231 = vpack.c.bf16 %v197, %v195
    %v232 = vpack.c.bf16 %v198, %v196
    %v233 = vpack.c.bf16 %v201, %v199
    %v234 = vpack.c.bf16 %v202, %v200
    %v235 = vld [vmem:[#allocation7] sm:$0xff]
    %v236 = vld [vmem:[#allocation7 + $0x8] sm:$0xff]
    %v237 = vld [vmem:[#allocation7 + $0x10] sm:$0xff]
    %v238 = vld [vmem:[#allocation7 + $0x18] sm:$0xff]
    %v239 = vld [vmem:[#allocation7 + $0x20] sm:$0xff]
    %v240 = vld [vmem:[#allocation7 + $0x28] sm:$0xff]
    %v241 = vld [vmem:[#allocation7 + $0x30] sm:$0xff]
    %v242 = vld [vmem:[#allocation7 + $0x38] sm:$0xff]
    %v243 = vld [vmem:[#allocation7 + $0x40] sm:$0xff]
    %v244 = vld [vmem:[#allocation7 + $0x48] sm:$0xff]
    %v245 = vld [vmem:[#allocation7 + $0x50] sm:$0xff]
    %v246 = vld [vmem:[#allocation7 + $0x58] sm:$0xff]
    %v247 = vld [vmem:[#allocation7 + $0x60] sm:$0xff]
    %v248 = vld [vmem:[#allocation7 + $0x68] sm:$0xff]
    %v249 = vld [vmem:[#allocation7 + $0x70] sm:$0xff]
    %v250 = vld [vmem:[#allocation7 + $0x78] sm:$0xff]
    %v251 = vld [vmem:[#allocation7 + $0x80] sm:$0xff]
    %v252 = vld [vmem:[#allocation7 + $0x88] sm:$0xff]
    %v253 = vld [vmem:[#allocation7 + $0x90] sm:$0xff]
    %v254 = vld [vmem:[#allocation7 + $0x98] sm:$0xff]
    %v255 = vld [vmem:[#allocation7 + $0xa0] sm:$0xff]
    %v256 = vld [vmem:[#allocation7 + $0xa8] sm:$0xff]
    %v257 = vld [vmem:[#allocation7 + $0xb0] sm:$0xff]
    %v258 = vld [vmem:[#allocation7 + $0xb8] sm:$0xff]
    %v259 = vld [vmem:[#allocation7 + $0xc0] sm:$0xff]
    %v260 = vld [vmem:[#allocation7 + $0xc8] sm:$0xff]
    %v261 = vld [vmem:[#allocation7 + $0xd0] sm:$0xff]
    %v262 = vld [vmem:[#allocation7 + $0xd8] sm:$0xff]
    %v263 = vld [vmem:[#allocation7 + $0xe0] sm:$0xff]
    %v264 = vld [vmem:[#allocation7 + $0xe8] sm:$0xff]
    %v265 = vld [vmem:[#allocation7 + $0xf0] sm:$0xff]
    %v266 = vld [vmem:[#allocation7 + $0xf8] sm:$0xff]
    %v267 = vld [vmem:[%s3] sm:$0x3]
    %v269 = vperm.slane %v267, 0
    %v270 = vperm.slane %v267, 1
    %v305 = vunpack.c.l.b16 %v235
    %v306 = vunpack.c.h.b16 %v235
    %v307 = vunpack.c.l.b16 %v236
    %v308 = vunpack.c.h.b16 %v236
    %v309 = vunpack.c.l.b16 %v237
    %v310 = vunpack.c.h.b16 %v237
    %v311 = vunpack.c.l.b16 %v238
    %v312 = vunpack.c.h.b16 %v238
    %v313 = vunpack.c.l.b16 %v239
    %v314 = vunpack.c.h.b16 %v239
    %v315 = vunpack.c.l.b16 %v240
    %v316 = vunpack.c.h.b16 %v240
    %v317 = vunpack.c.l.b16 %v241
    %v318 = vunpack.c.h.b16 %v241
    %v319 = vunpack.c.l.b16 %v242
    %v320 = vunpack.c.h.b16 %v242
    %v321 = vunpack.c.l.b16 %v243
    %v322 = vunpack.c.h.b16 %v243
    %v323 = vunpack.c.l.b16 %v244
    %v324 = vunpack.c.h.b16 %v244
    %v325 = vunpack.c.l.b16 %v245
    %v326 = vunpack.c.h.b16 %v245
    %v327 = vunpack.c.l.b16 %v246
    %v328 = vunpack.c.h.b16 %v246
    %v329 = vunpack.c.l.b16 %v247
    %v330 = vunpack.c.h.b16 %v247
    %v331 = vunpack.c.l.b16 %v248
    %v332 = vunpack.c.h.b16 %v248
    %v333 = vunpack.c.l.b16 %v249
    %v334 = vunpack.c.h.b16 %v249
    %v335 = vunpack.c.l.b16 %v250
    %v336 = vunpack.c.h.b16 %v250
    %v337 = vunpack.c.l.b16 %v251
    %v338 = vunpack.c.h.b16 %v251
    %v339 = vunpack.c.l.b16 %v252
    %v340 = vunpack.c.h.b16 %v252
    %v341 = vunpack.c.l.b16 %v253
    %v342 = vunpack.c.h.b16 %v253
    %v343 = vunpack.c.l.b16 %v254
    %v344 = vunpack.c.h.b16 %v254
    %v345 = vunpack.c.l.b16 %v255
    %v346 = vunpack.c.h.b16 %v255
    %v347 = vunpack.c.l.b16 %v256
    %v348 = vunpack.c.h.b16 %v256
    %v349 = vunpack.c.l.b16 %v257
    %v350 = vunpack.c.h.b16 %v257
    %v351 = vunpack.c.l.b16 %v258
    %v352 = vunpack.c.h.b16 %v258
    %v353 = vunpack.c.l.b16 %v259
    %v354 = vunpack.c.h.b16 %v259
    %v355 = vunpack.c.l.b16 %v260
    %v356 = vunpack.c.h.b16 %v260
    %v357 = vunpack.c.l.b16 %v261
    %v358 = vunpack.c.h.b16 %v261
    %v359 = vunpack.c.l.b16 %v262
    %v360 = vunpack.c.h.b16 %v262
    %v361 = vunpack.c.l.b16 %v263
    %v362 = vunpack.c.h.b16 %v263
    %v363 = vunpack.c.l.b16 %v264
    %v364 = vunpack.c.h.b16 %v264
    %v365 = vunpack.c.l.b16 %v265
    %v366 = vunpack.c.h.b16 %v265
    %v367 = vunpack.c.l.b16 %v266
    %v368 = vunpack.c.h.b16 %v266
    %v369 = vpack.c.b16 %v307, %v305
    %v370 = vpack.c.b16 %v308, %v306
    %v371 = vpack.c.b16 %v311, %v309
    %v372 = vpack.c.b16 %v312, %v310
    %v373 = vpack.c.b16 %v315, %v313
    %v374 = vpack.c.b16 %v316, %v314
    %v375 = vpack.c.b16 %v319, %v317
    %v376 = vpack.c.b16 %v320, %v318
    %v377 = vpack.c.b16 %v323, %v321
    %v378 = vpack.c.b16 %v324, %v322
    %v379 = vpack.c.b16 %v327, %v325
    %v380 = vpack.c.b16 %v328, %v326
    %v381 = vpack.c.b16 %v331, %v329
    %v382 = vpack.c.b16 %v332, %v330
    %v383 = vpack.c.b16 %v335, %v333
    %v384 = vpack.c.b16 %v336, %v334
    %v385 = vpack.c.b16 %v339, %v337
    %v386 = vpack.c.b16 %v340, %v338
    %v387 = vpack.c.b16 %v343, %v341
    %v388 = vpack.c.b16 %v344, %v342
    %v389 = vpack.c.b16 %v347, %v345
    %v390 = vpack.c.b16 %v348, %v346
    %v391 = vpack.c.b16 %v351, %v349
    %v392 = vpack.c.b16 %v352, %v350
    %v393 = vpack.c.b16 %v355, %v353
    %v394 = vpack.c.b16 %v356, %v354
    %v395 = vpack.c.b16 %v359, %v357
    %v396 = vpack.c.b16 %v360, %v358
    %v397 = vpack.c.b16 %v363, %v361
    %v398 = vpack.c.b16 %v364, %v362
    %v399 = vpack.c.b16 %v367, %v365
    %v400 = vpack.c.b16 %v368, %v366
    %433 = vmatpush.bf16.msra.mxu0 %v383
    %434 = vmatpush.bf16.msra.mxu0 %v381
    %435 = vmatpush.bf16.msra.mxu0 %v379
    %436 = vmatpush.bf16.msra.mxu0 %v377
    %437 = vmatpush.bf16.msra.mxu0 %v375
    %438 = vmatpush.bf16.msra.mxu0 %v373
    %439 = vmatpush.bf16.msra.mxu0 %v371
    %440 = vmatpush.bf16.msra.mxu0 %v369
    %441 = vmatmul.bf16.gmra.mxu0 %v203
    %v442 = vpop.f32.mrf.mxu0
    %v443 = vadd.f32 %v269, %v442
    %v444 = vpop.f32.mrf.mxu0
    %v445 = vadd.f32 %v269, %v444
    %446 = vmatmul.bf16.gmra.mxu0 %v205
    %v447 = vpop.f32.mrf.mxu0
    %v448 = vadd.f32 %v269, %v447
    %v449 = vpop.f32.mrf.mxu0
    %v450 = vadd.f32 %v269, %v449
    %451 = vmatmul.bf16.gmra.mxu0 %v207
    %v452 = vpop.f32.mrf.mxu0
    %v453 = vadd.f32 %v269, %v452
    %v454 = vpop.f32.mrf.mxu0
    %v455 = vadd.f32 %v269, %v454
    %456 = vmatmul.bf16.gmra.mxu0 %v209
    %v457 = vpop.f32.mrf.mxu0
    %v458 = vadd.f32 %v269, %v457
    %v459 = vpop.f32.mrf.mxu0
    %v460 = vadd.f32 %v269, %v459
    %461 = vmatmul.bf16.gmra.mxu0 %v211
    %v462 = vpop.f32.mrf.mxu0
    %v463 = vadd.f32 %v269, %v462
    %v464 = vpop.f32.mrf.mxu0
    %v465 = vadd.f32 %v269, %v464
    %466 = vmatmul.bf16.gmra.mxu0 %v213
    %v467 = vpop.f32.mrf.mxu0
    %v468 = vadd.f32 %v269, %v467
    %v469 = vpop.f32.mrf.mxu0
    %v470 = vadd.f32 %v269, %v469
    %471 = vmatmul.bf16.gmra.mxu0 %v215
    %v472 = vpop.f32.mrf.mxu0
    %v473 = vadd.f32 %v269, %v472
    %v474 = vpop.f32.mrf.mxu0
    %v475 = vadd.f32 %v269, %v474
    %476 = vmatmul.bf16.gmra.mxu0 %v217
    %v477 = vpop.f32.mrf.mxu0
    %v478 = vadd.f32 %v269, %v477
    %v479 = vpop.f32.mrf.mxu0
    %v480 = vadd.f32 %v269, %v479
    %481 = vmatmul.bf16.gmra.mxu0 %v219
    %v482 = vpop.f32.mrf.mxu0
    %v483 = vadd.f32 %v269, %v482
    %v484 = vpop.f32.mrf.mxu0
    %v485 = vadd.f32 %v269, %v484
    %486 = vmatmul.bf16.gmra.mxu0 %v221
    %v487 = vpop.f32.mrf.mxu0
    %v488 = vadd.f32 %v269, %v487
    %v489 = vpop.f32.mrf.mxu0
    %v490 = vadd.f32 %v269, %v489
    %491 = vmatmul.bf16.gmra.mxu0 %v223
    %v492 = vpop.f32.mrf.mxu0
    %v493 = vadd.f32 %v269, %v492
    %v494 = vpop.f32.mrf.mxu0
    %v495 = vadd.f32 %v269, %v494
    %496 = vmatmul.bf16.gmra.mxu0 %v225
    %v497 = vpop.f32.mrf.mxu0
    %v498 = vadd.f32 %v269, %v497
    %v499 = vpop.f32.mrf.mxu0
    %v500 = vadd.f32 %v269, %v499
    %501 = vmatmul.bf16.gmra.mxu0 %v227
    %v502 = vpop.f32.mrf.mxu0
    %v503 = vadd.f32 %v269, %v502
    %v504 = vpop.f32.mrf.mxu0
    %v505 = vadd.f32 %v269, %v504
    %506 = vmatmul.bf16.gmra.mxu0 %v229
    %v507 = vpop.f32.mrf.mxu0
    %v508 = vadd.f32 %v269, %v507
    %v509 = vpop.f32.mrf.mxu0
    %v510 = vadd.f32 %v269, %v509
    %511 = vmatmul.bf16.gmra.mxu0 %v231
    %v512 = vpop.f32.mrf.mxu0
    %v513 = vadd.f32 %v269, %v512
    %v514 = vpop.f32.mrf.mxu0
    %v515 = vadd.f32 %v269, %v514
    %516 = vmatmul.bf16.gmra.mxu0 %v233
    %v517 = vpop.f32.mrf.mxu0
    %v518 = vadd.f32 %v269, %v517
    %v519 = vpop.f32.mrf.mxu0
    %v520 = vadd.f32 %v269, %v519
    %521 = vdwg.mxu0
    %522 = vmatpush.bf16.msra.mxu0 %v399
    %523 = vmatpush.bf16.msra.mxu0 %v397
    %524 = vmatpush.bf16.msra.mxu0 %v395
    %525 = vmatpush.bf16.msra.mxu0 %v393
    %526 = vmatpush.bf16.msra.mxu0 %v391
    %527 = vmatpush.bf16.msra.mxu0 %v389
    %528 = vmatpush.bf16.msra.mxu0 %v387
    %529 = vmatpush.bf16.msra.mxu0 %v385
    %530 = vmatmul.bf16.gmra.mxu0 %v204
    %v531 = vpop.f32.mrf.mxu0
    %v532 = vadd.f32 %v443, %v531
    %v533 = vpop.f32.mrf.mxu0
    %v534 = vadd.f32 %v445, %v533
    %535 = vmatmul.bf16.gmra.mxu0 %v206
    %v536 = vpop.f32.mrf.mxu0
    %v537 = vadd.f32 %v448, %v536
    %v538 = vpop.f32.mrf.mxu0
    %v539 = vadd.f32 %v450, %v538
    %540 = vmatmul.bf16.gmra.mxu0 %v208
    %v541 = vpop.f32.mrf.mxu0
    %v542 = vadd.f32 %v453, %v541
    %v543 = vpop.f32.mrf.mxu0
    %v544 = vadd.f32 %v455, %v543
    %545 = vmatmul.bf16.gmra.mxu0 %v210
    %v546 = vpop.f32.mrf.mxu0
    %v547 = vadd.f32 %v458, %v546
    %v548 = vpop.f32.mrf.mxu0
    %v549 = vadd.f32 %v460, %v548
    %550 = vmatmul.bf16.gmra.mxu0 %v212
    %v551 = vpop.f32.mrf.mxu0
    %v552 = vadd.f32 %v463, %v551
    %v553 = vpop.f32.mrf.mxu0
    %v554 = vadd.f32 %v465, %v553
    %555 = vmatmul.bf16.gmra.mxu0 %v214
    %v556 = vpop.f32.mrf.mxu0
    %v557 = vadd.f32 %v468, %v556
    %v558 = vpop.f32.mrf.mxu0
    %v559 = vadd.f32 %v470, %v558
    %560 = vmatmul.bf16.gmra.mxu0 %v216
    %v561 = vpop.f32.mrf.mxu0
    %v562 = vadd.f32 %v473, %v561
    %v563 = vpop.f32.mrf.mxu0
    %v564 = vadd.f32 %v475, %v563
    %565 = vmatmul.bf16.gmra.mxu0 %v218
    %v566 = vpop.f32.mrf.mxu0
    %v567 = vadd.f32 %v478, %v566
    %v568 = vpop.f32.mrf.mxu0
    %v569 = vadd.f32 %v480, %v568
    %570 = vmatmul.bf16.gmra.mxu0 %v220
    %v571 = vpop.f32.mrf.mxu0
    %v572 = vadd.f32 %v483, %v571
    %v573 = vpop.f32.mrf.mxu0
    %v574 = vadd.f32 %v485, %v573
    %575 = vmatmul.bf16.gmra.mxu0 %v222
    %v576 = vpop.f32.mrf.mxu0
    %v577 = vadd.f32 %v488, %v576
    %v578 = vpop.f32.mrf.mxu0
    %v579 = vadd.f32 %v490, %v578
    %580 = vmatmul.bf16.gmra.mxu0 %v224
    %v581 = vpop.f32.mrf.mxu0
    %v582 = vadd.f32 %v493, %v581
    %v583 = vpop.f32.mrf.mxu0
    %v584 = vadd.f32 %v495, %v583
    %585 = vmatmul.bf16.gmra.mxu0 %v226
    %v586 = vpop.f32.mrf.mxu0
    %v587 = vadd.f32 %v498, %v586
    %v588 = vpop.f32.mrf.mxu0
    %v589 = vadd.f32 %v500, %v588
    %590 = vmatmul.bf16.gmra.mxu0 %v228
    %v591 = vpop.f32.mrf.mxu0
    %v592 = vadd.f32 %v503, %v591
    %v593 = vpop.f32.mrf.mxu0
    %v594 = vadd.f32 %v505, %v593
    %595 = vmatmul.bf16.gmra.mxu0 %v230
    %v596 = vpop.f32.mrf.mxu0
    %v597 = vadd.f32 %v508, %v596
    %v598 = vpop.f32.mrf.mxu0
    %v599 = vadd.f32 %v510, %v598
    %600 = vmatmul.bf16.gmra.mxu0 %v232
    %v601 = vpop.f32.mrf.mxu0
    %v602 = vadd.f32 %v513, %v601
    %v603 = vpop.f32.mrf.mxu0
    %v604 = vadd.f32 %v515, %v603
    %605 = vmatmul.bf16.gmra.mxu0 %v234
    %v606 = vpop.f32.mrf.mxu0
    %v607 = vadd.f32 %v518, %v606
    %v608 = vpop.f32.mrf.mxu0
    %v609 = vadd.f32 %v520, %v608
    %610 = vdwg.mxu0
    %611 = vmatpush.bf16.msra.mxu0 %v384
    %612 = vmatpush.bf16.msra.mxu0 %v382
    %613 = vmatpush.bf16.msra.mxu0 %v380
    %614 = vmatpush.bf16.msra.mxu0 %v378
    %615 = vmatpush.bf16.msra.mxu0 %v376
    %616 = vmatpush.bf16.msra.mxu0 %v374
    %617 = vmatpush.bf16.msra.mxu0 %v372
    %618 = vmatpush.bf16.msra.mxu0 %v370
    %619 = vmatmul.bf16.gmra.mxu0 %v203
    %v620 = vpop.f32.mrf.mxu0
    %v621 = vadd.f32 %v270, %v620
    %v622 = vpop.f32.mrf.mxu0
    %v623 = vadd.f32 %v270, %v622
    %624 = vmatmul.bf16.gmra.mxu0 %v205
    %v625 = vpop.f32.mrf.mxu0
    %v626 = vadd.f32 %v270, %v625
    %v627 = vpop.f32.mrf.mxu0
    %v628 = vadd.f32 %v270, %v627
    %629 = vmatmul.bf16.gmra.mxu0 %v207
    %v630 = vpop.f32.mrf.mxu0
    %v631 = vadd.f32 %v270, %v630
    %v632 = vpop.f32.mrf.mxu0
    %v633 = vadd.f32 %v270, %v632
    %634 = vmatmul.bf16.gmra.mxu0 %v209
    %v635 = vpop.f32.mrf.mxu0
    %v636 = vadd.f32 %v270, %v635
    %v637 = vpop.f32.mrf.mxu0
    %v638 = vadd.f32 %v270, %v637
    %639 = vmatmul.bf16.gmra.mxu0 %v211
    %v640 = vpop.f32.mrf.mxu0
    %v641 = vadd.f32 %v270, %v640
    %v642 = vpop.f32.mrf.mxu0
    %v643 = vadd.f32 %v270, %v642
    %644 = vmatmul.bf16.gmra.mxu0 %v213
    %v645 = vpop.f32.mrf.mxu0
    %v646 = vadd.f32 %v270, %v645
    %v647 = vpop.f32.mrf.mxu0
    %v648 = vadd.f32 %v270, %v647
    %649 = vmatmul.bf16.gmra.mxu0 %v215
    %v650 = vpop.f32.mrf.mxu0
    %v651 = vadd.f32 %v270, %v650
    %v652 = vpop.f32.mrf.mxu0
    %v653 = vadd.f32 %v270, %v652
    %654 = vmatmul.bf16.gmra.mxu0 %v217
    %v655 = vpop.f32.mrf.mxu0
    %v656 = vadd.f32 %v270, %v655
    %v657 = vpop.f32.mrf.mxu0
    %v658 = vadd.f32 %v270, %v657
    %659 = vmatmul.bf16.gmra.mxu0 %v219
    %v660 = vpop.f32.mrf.mxu0
    %v661 = vadd.f32 %v270, %v660
    %v662 = vpop.f32.mrf.mxu0
    %v663 = vadd.f32 %v270, %v662
    %664 = vmatmul.bf16.gmra.mxu0 %v221
    %v665 = vpop.f32.mrf.mxu0
    %v666 = vadd.f32 %v270, %v665
    %v667 = vpop.f32.mrf.mxu0
    %v668 = vadd.f32 %v270, %v667
    %669 = vmatmul.bf16.gmra.mxu0 %v223
    %v670 = vpop.f32.mrf.mxu0
    %v671 = vadd.f32 %v270, %v670
    %v672 = vpop.f32.mrf.mxu0
    %v673 = vadd.f32 %v270, %v672
    %674 = vmatmul.bf16.gmra.mxu0 %v225
    %v675 = vpop.f32.mrf.mxu0
    %v676 = vadd.f32 %v270, %v675
    %v677 = vpop.f32.mrf.mxu0
    %v678 = vadd.f32 %v270, %v677
    %679 = vmatmul.bf16.gmra.mxu0 %v227
    %v680 = vpop.f32.mrf.mxu0
    %v681 = vadd.f32 %v270, %v680
    %v682 = vpop.f32.mrf.mxu0
    %v683 = vadd.f32 %v270, %v682
    %684 = vmatmul.bf16.gmra.mxu0 %v229
    %v685 = vpop.f32.mrf.mxu0
    %v686 = vadd.f32 %v270, %v685
    %v687 = vpop.f32.mrf.mxu0
    %v688 = vadd.f32 %v270, %v687
    %689 = vmatmul.bf16.gmra.mxu0 %v231
    %v690 = vpop.f32.mrf.mxu0
    %v691 = vadd.f32 %v270, %v690
    %v692 = vpop.f32.mrf.mxu0
    %v693 = vadd.f32 %v270, %v692
    %694 = vmatmul.bf16.gmra.mxu0 %v233
    %v695 = vpop.f32.mrf.mxu0
    %v696 = vadd.f32 %v270, %v695
    %v697 = vpop.f32.mrf.mxu0
    %v698 = vadd.f32 %v270, %v697
    %699 = vdwg.mxu0
    %700 = vmatpush.bf16.msra.mxu0 %v400
    %701 = vmatpush.bf16.msra.mxu0 %v398
    %702 = vmatpush.bf16.msra.mxu0 %v396
    %703 = vmatpush.bf16.msra.mxu0 %v394
    %704 = vmatpush.bf16.msra.mxu0 %v392
    %705 = vmatpush.bf16.msra.mxu0 %v390
    %706 = vmatpush.bf16.msra.mxu0 %v388
    %707 = vmatpush.bf16.msra.mxu0 %v386
    %708 = vmatmul.bf16.gmra.mxu0 %v204
    %v709 = vpop.f32.mrf.mxu0
    %v710 = vadd.f32 %v621, %v709
    %v711 = vpop.f32.mrf.mxu0
    %v712 = vadd.f32 %v623, %v711
    %713 = vmatmul.bf16.gmra.mxu0 %v206
    %v714 = vpop.f32.mrf.mxu0
    %v715 = vadd.f32 %v626, %v714
    %v716 = vpop.f32.mrf.mxu0
    %v717 = vadd.f32 %v628, %v716
    %718 = vmatmul.bf16.gmra.mxu0 %v208
    %v719 = vpop.f32.mrf.mxu0
    %v720 = vadd.f32 %v631, %v719
    %v721 = vpop.f32.mrf.mxu0
    %v722 = vadd.f32 %v633, %v721
    %723 = vmatmul.bf16.gmra.mxu0 %v210
    %v724 = vpop.f32.mrf.mxu0
    %v725 = vadd.f32 %v636, %v724
    %v726 = vpop.f32.mrf.mxu0
    %v727 = vadd.f32 %v638, %v726
    %728 = vmatmul.bf16.gmra.mxu0 %v212
    %v729 = vpop.f32.mrf.mxu0
    %v730 = vadd.f32 %v641, %v729
    %v731 = vpop.f32.mrf.mxu0
    %v732 = vadd.f32 %v643, %v731
    %733 = vmatmul.bf16.gmra.mxu0 %v214
    %v734 = vpop.f32.mrf.mxu0
    %v735 = vadd.f32 %v646, %v734
    %v736 = vpop.f32.mrf.mxu0
    %v737 = vadd.f32 %v648, %v736
    %738 = vmatmul.bf16.gmra.mxu0 %v216
    %v739 = vpop.f32.mrf.mxu0
    %v740 = vadd.f32 %v651, %v739
    %v741 = vpop.f32.mrf.mxu0
    %v742 = vadd.f32 %v653, %v741
    %743 = vmatmul.bf16.gmra.mxu0 %v218
    %v744 = vpop.f32.mrf.mxu0
    %v745 = vadd.f32 %v656, %v744
    %v746 = vpop.f32.mrf.mxu0
    %v747 = vadd.f32 %v658, %v746
    %748 = vmatmul.bf16.gmra.mxu0 %v220
    %v749 = vpop.f32.mrf.mxu0
    %v750 = vadd.f32 %v661, %v749
    %v751 = vpop.f32.mrf.mxu0
    %v752 = vadd.f32 %v663, %v751
    %753 = vmatmul.bf16.gmra.mxu0 %v222
    %v754 = vpop.f32.mrf.mxu0
    %v755 = vadd.f32 %v666, %v754
    %v756 = vpop.f32.mrf.mxu0
    %v757 = vadd.f32 %v668, %v756
    %758 = vmatmul.bf16.gmra.mxu0 %v224
    %v759 = vpop.f32.mrf.mxu0
    %v760 = vadd.f32 %v671, %v759
    %v761 = vpop.f32.mrf.mxu0
    %v762 = vadd.f32 %v673, %v761
    %763 = vmatmul.bf16.gmra.mxu0 %v226
    %v764 = vpop.f32.mrf.mxu0
    %v765 = vadd.f32 %v676, %v764
    %v766 = vpop.f32.mrf.mxu0
    %v767 = vadd.f32 %v678, %v766
    %768 = vmatmul.bf16.gmra.mxu0 %v228
    %v769 = vpop.f32.mrf.mxu0
    %v770 = vadd.f32 %v681, %v769
    %v771 = vpop.f32.mrf.mxu0
    %v772 = vadd.f32 %v683, %v771
    %773 = vmatmul.bf16.gmra.mxu0 %v230
    %v774 = vpop.f32.mrf.mxu0
    %v775 = vadd.f32 %v686, %v774
    %v776 = vpop.f32.mrf.mxu0
    %v777 = vadd.f32 %v688, %v776
    %778 = vmatmul.bf16.gmra.mxu0 %v232
    %v779 = vpop.f32.mrf.mxu0
    %v780 = vadd.f32 %v691, %v779
    %v781 = vpop.f32.mrf.mxu0
    %v782 = vadd.f32 %v693, %v781
    %783 = vmatmul.bf16.gmra.mxu0 %v234
    %v784 = vpop.f32.mrf.mxu0
    %v785 = vadd.f32 %v696, %v784
    %v786 = vpop.f32.mrf.mxu0
    %v787 = vadd.f32 %v698, %v786
    %788 = vdwg.mxu0
    %v789 = vmax.f32 %v532, 0.0
    %v790 = vmax.f32 %v710, 0.0
    %v791 = vmax.f32 %v534, 0.0
    %v792 = vmax.f32 %v712, 0.0
    %v793 = vmax.f32 %v537, 0.0
    %v794 = vmax.f32 %v715, 0.0
    %v795 = vmax.f32 %v539, 0.0
    %v796 = vmax.f32 %v717, 0.0
    %v797 = vmax.f32 %v542, 0.0
    %v798 = vmax.f32 %v720, 0.0
    %v799 = vmax.f32 %v544, 0.0
    %v800 = vmax.f32 %v722, 0.0
    %v801 = vmax.f32 %v547, 0.0
    %v802 = vmax.f32 %v725, 0.0
    %v803 = vmax.f32 %v549, 0.0
    %v804 = vmax.f32 %v727, 0.0
    %v805 = vmax.f32 %v552, 0.0
    %v806 = vmax.f32 %v730, 0.0
    %v807 = vmax.f32 %v554, 0.0
    %v808 = vmax.f32 %v732, 0.0
    %v809 = vmax.f32 %v557, 0.0
    %v810 = vmax.f32 %v735, 0.0
    %v811 = vmax.f32 %v559, 0.0
    %v812 = vmax.f32 %v737, 0.0
    %v813 = vmax.f32 %v562, 0.0
    %v814 = vmax.f32 %v740, 0.0
    %v815 = vmax.f32 %v564, 0.0
    %v816 = vmax.f32 %v742, 0.0
    %v817 = vmax.f32 %v567, 0.0
    %v818 = vmax.f32 %v745, 0.0
    %v819 = vmax.f32 %v569, 0.0
    %v820 = vmax.f32 %v747, 0.0
    %v821 = vmax.f32 %v572, 0.0
    %v822 = vmax.f32 %v750, 0.0
    %v823 = vmax.f32 %v574, 0.0
    %v824 = vmax.f32 %v752, 0.0
    %v825 = vmax.f32 %v577, 0.0
    %v826 = vmax.f32 %v755, 0.0
    %v827 = vmax.f32 %v579, 0.0
    %v828 = vmax.f32 %v757, 0.0
    %v829 = vmax.f32 %v582, 0.0
    %v830 = vmax.f32 %v760, 0.0
    %v831 = vmax.f32 %v584, 0.0
    %v832 = vmax.f32 %v762, 0.0
    %v833 = vmax.f32 %v587, 0.0
    %v834 = vmax.f32 %v765, 0.0
    %v835 = vmax.f32 %v589, 0.0
    %v836 = vmax.f32 %v767, 0.0
    %v837 = vmax.f32 %v592, 0.0
    %v838 = vmax.f32 %v770, 0.0
    %v839 = vmax.f32 %v594, 0.0
    %v840 = vmax.f32 %v772, 0.0
    %v841 = vmax.f32 %v597, 0.0
    %v842 = vmax.f32 %v775, 0.0
    %v843 = vmax.f32 %v599, 0.0
    %v844 = vmax.f32 %v777, 0.0
    %v845 = vmax.f32 %v602, 0.0
    %v846 = vmax.f32 %v780, 0.0
    %v847 = vmax.f32 %v604, 0.0
    %v848 = vmax.f32 %v782, 0.0
    %v849 = vmax.f32 %v607, 0.0
    %v850 = vmax.f32 %v785, 0.0
    %v851 = vmax.f32 %v609, 0.0
    %v852 = vmax.f32 %v787, 0.0
    %v853 = vpack.c.bf16 %v791, %v789
    %v854 = vpack.c.bf16 %v792, %v790
    %v855 = vpack.c.bf16 %v795, %v793
    %v856 = vpack.c.bf16 %v796, %v794
    %v857 = vpack.c.bf16 %v799, %v797
    %v858 = vpack.c.bf16 %v800, %v798
    %v859 = vpack.c.bf16 %v803, %v801
    %v860 = vpack.c.bf16 %v804, %v802
    %v861 = vpack.c.bf16 %v807, %v805
    %v862 = vpack.c.bf16 %v808, %v806
    %v863 = vpack.c.bf16 %v811, %v809
    %v864 = vpack.c.bf16 %v812, %v810
    %v865 = vpack.c.bf16 %v815, %v813
    %v866 = vpack.c.bf16 %v816, %v814
    %v867 = vpack.c.bf16 %v819, %v817
    %v868 = vpack.c.bf16 %v820, %v818
    %v869 = vpack.c.bf16 %v823, %v821
    %v870 = vpack.c.bf16 %v824, %v822
    %v871 = vpack.c.bf16 %v827, %v825
    %v872 = vpack.c.bf16 %v828, %v826
    %v873 = vpack.c.bf16 %v831, %v829
    %v874 = vpack.c.bf16 %v832, %v830
    %v875 = vpack.c.bf16 %v835, %v833
    %v876 = vpack.c.bf16 %v836, %v834
    %v877 = vpack.c.bf16 %v839, %v837
    %v878 = vpack.c.bf16 %v840, %v838
    %v879 = vpack.c.bf16 %v843, %v841
    %v880 = vpack.c.bf16 %v844, %v842
    %v881 = vpack.c.bf16 %v847, %v845
    %v882 = vpack.c.bf16 %v848, %v846
    %v883 = vpack.c.bf16 %v851, %v849
    %v884 = vpack.c.bf16 %v852, %v850
    %v885 = vld [vmem:[#allocation8] sm:$0xff]
    %v886 = vld [vmem:[#allocation8 + $0x8] sm:$0xff]
    %v887 = vld [vmem:[#allocation8 + $0x10] sm:$0xff]
    %v888 = vld [vmem:[#allocation8 + $0x18] sm:$0xff]
    %v889 = vld [vmem:[#allocation8 + $0x20] sm:$0xff]
    %v890 = vld [vmem:[#allocation8 + $0x28] sm:$0xff]
    %v891 = vld [vmem:[#allocation8 + $0x30] sm:$0xff]
    %v892 = vld [vmem:[#allocation8 + $0x38] sm:$0xff]
    %v893 = vld [vmem:[#allocation8 + $0x40] sm:$0xff]
    %v894 = vld [vmem:[#allocation8 + $0x48] sm:$0xff]
    %v895 = vld [vmem:[#allocation8 + $0x50] sm:$0xff]
    %v896 = vld [vmem:[#allocation8 + $0x58] sm:$0xff]
    %v897 = vld [vmem:[#allocation8 + $0x60] sm:$0xff]
    %v898 = vld [vmem:[#allocation8 + $0x68] sm:$0xff]
    %v899 = vld [vmem:[#allocation8 + $0x70] sm:$0xff]
    %v900 = vld [vmem:[#allocation8 + $0x78] sm:$0xff]
    %v901 = vld [vmem:[#allocation8 + $0x80] sm:$0xff]
    %v902 = vld [vmem:[#allocation8 + $0x88] sm:$0xff]
    %v903 = vld [vmem:[#allocation8 + $0x90] sm:$0xff]
    %v904 = vld [vmem:[#allocation8 + $0x98] sm:$0xff]
    %v905 = vld [vmem:[#allocation8 + $0xa0] sm:$0xff]
    %v906 = vld [vmem:[#allocation8 + $0xa8] sm:$0xff]
    %v907 = vld [vmem:[#allocation8 + $0xb0] sm:$0xff]
    %v908 = vld [vmem:[#allocation8 + $0xb8] sm:$0xff]
    %v909 = vld [vmem:[#allocation8 + $0xc0] sm:$0xff]
    %v910 = vld [vmem:[#allocation8 + $0xc8] sm:$0xff]
    %v911 = vld [vmem:[#allocation8 + $0xd0] sm:$0xff]
    %v912 = vld [vmem:[#allocation8 + $0xd8] sm:$0xff]
    %v913 = vld [vmem:[#allocation8 + $0xe0] sm:$0xff]
    %v914 = vld [vmem:[#allocation8 + $0xe8] sm:$0xff]
    %v915 = vld [vmem:[#allocation8 + $0xf0] sm:$0xff]
    %v916 = vld [vmem:[#allocation8 + $0xf8] sm:$0xff]
    %v917 = vld [vmem:[%s5] sm:$0x3]
    %v919 = vperm.slane %v917, 0
    %v920 = vperm.slane %v917, 1
    %v955 = vunpack.c.l.b16 %v885
    %v956 = vunpack.c.h.b16 %v885
    %v957 = vunpack.c.l.b16 %v886
    %v958 = vunpack.c.h.b16 %v886
    %v959 = vunpack.c.l.b16 %v887
    %v960 = vunpack.c.h.b16 %v887
    %v961 = vunpack.c.l.b16 %v888
    %v962 = vunpack.c.h.b16 %v888
    %v963 = vunpack.c.l.b16 %v889
    %v964 = vunpack.c.h.b16 %v889
    %v965 = vunpack.c.l.b16 %v890
    %v966 = vunpack.c.h.b16 %v890
    %v967 = vunpack.c.l.b16 %v891
    %v968 = vunpack.c.h.b16 %v891
    %v969 = vunpack.c.l.b16 %v892
    %v970 = vunpack.c.h.b16 %v892
    %v971 = vunpack.c.l.b16 %v893
    %v972 = vunpack.c.h.b16 %v893
    %v973 = vunpack.c.l.b16 %v894
    %v974 = vunpack.c.h.b16 %v894
    %v975 = vunpack.c.l.b16 %v895
    %v976 = vunpack.c.h.b16 %v895
    %v977 = vunpack.c.l.b16 %v896
    %v978 = vunpack.c.h.b16 %v896
    %v979 = vunpack.c.l.b16 %v897
    %v980 = vunpack.c.h.b16 %v897
    %v981 = vunpack.c.l.b16 %v898
    %v982 = vunpack.c.h.b16 %v898
    %v983 = vunpack.c.l.b16 %v899
    %v984 = vunpack.c.h.b16 %v899
    %v985 = vunpack.c.l.b16 %v900
    %v986 = vunpack.c.h.b16 %v900
    %v987 = vunpack.c.l.b16 %v901
    %v988 = vunpack.c.h.b16 %v901
    %v989 = vunpack.c.l.b16 %v902
    %v990 = vunpack.c.h.b16 %v902
    %v991 = vunpack.c.l.b16 %v903
    %v992 = vunpack.c.h.b16 %v903
    %v993 = vunpack.c.l.b16 %v904
    %v994 = vunpack.c.h.b16 %v904
    %v995 = vunpack.c.l.b16 %v905
    %v996 = vunpack.c.h.b16 %v905
    %v997 = vunpack.c.l.b16 %v906
    %v998 = vunpack.c.h.b16 %v906
    %v999 = vunpack.c.l.b16 %v907
    %v1000 = vunpack.c.h.b16 %v907
    %v1001 = vunpack.c.l.b16 %v908
    %v1002 = vunpack.c.h.b16 %v908
    %v1003 = vunpack.c.l.b16 %v909
    %v1004 = vunpack.c.h.b16 %v909
    %v1005 = vunpack.c.l.b16 %v910
    %v1006 = vunpack.c.h.b16 %v910
    %v1007 = vunpack.c.l.b16 %v911
    %v1008 = vunpack.c.h.b16 %v911
    %v1009 = vunpack.c.l.b16 %v912
    %v1010 = vunpack.c.h.b16 %v912
    %v1011 = vunpack.c.l.b16 %v913
    %v1012 = vunpack.c.h.b16 %v913
    %v1013 = vunpack.c.l.b16 %v914
    %v1014 = vunpack.c.h.b16 %v914
    %v1015 = vunpack.c.l.b16 %v915
    %v1016 = vunpack.c.h.b16 %v915
    %v1017 = vunpack.c.l.b16 %v916
    %v1018 = vunpack.c.h.b16 %v916
    %v1019 = vpack.c.b16 %v957, %v955
    %v1020 = vpack.c.b16 %v958, %v956
    %v1021 = vpack.c.b16 %v961, %v959
    %v1022 = vpack.c.b16 %v962, %v960
    %v1023 = vpack.c.b16 %v965, %v963
    %v1024 = vpack.c.b16 %v966, %v964
    %v1025 = vpack.c.b16 %v969, %v967
    %v1026 = vpack.c.b16 %v970, %v968
    %v1027 = vpack.c.b16 %v973, %v971
    %v1028 = vpack.c.b16 %v974, %v972
    %v1029 = vpack.c.b16 %v977, %v975
    %v1030 = vpack.c.b16 %v978, %v976
    %v1031 = vpack.c.b16 %v981, %v979
    %v1032 = vpack.c.b16 %v982, %v980
    %v1033 = vpack.c.b16 %v985, %v983
    %v1034 = vpack.c.b16 %v986, %v984
    %v1035 = vpack.c.b16 %v989, %v987
    %v1036 = vpack.c.b16 %v990, %v988
    %v1037 = vpack.c.b16 %v993, %v991
    %v1038 = vpack.c.b16 %v994, %v992
    %v1039 = vpack.c.b16 %v997, %v995
    %v1040 = vpack.c.b16 %v998, %v996
    %v1041 = vpack.c.b16 %v1001, %v999
    %v1042 = vpack.c.b16 %v1002, %v1000
    %v1043 = vpack.c.b16 %v1005, %v1003
    %v1044 = vpack.c.b16 %v1006, %v1004
    %v1045 = vpack.c.b16 %v1009, %v1007
    %v1046 = vpack.c.b16 %v1010, %v1008
    %v1047 = vpack.c.b16 %v1013, %v1011
    %v1048 = vpack.c.b16 %v1014, %v1012
    %v1049 = vpack.c.b16 %v1017, %v1015
    %v1050 = vpack.c.b16 %v1018, %v1016
    %1083 = vmatpush.bf16.msra.mxu0 %v1033
    %1084 = vmatpush.bf16.msra.mxu0 %v1031
    %1085 = vmatpush.bf16.msra.mxu0 %v1029
    %1086 = vmatpush.bf16.msra.mxu0 %v1027
    %1087 = vmatpush.bf16.msra.mxu0 %v1025
    %1088 = vmatpush.bf16.msra.mxu0 %v1023
    %1089 = vmatpush.bf16.msra.mxu0 %v1021
    %1090 = vmatpush.bf16.msra.mxu0 %v1019
    %1091 = vmatmul.bf16.gmra.mxu0 %v853
    %v1092 = vpop.f32.mrf.mxu0
    %v1093 = vadd.f32 %v919, %v1092
    %v1094 = vpop.f32.mrf.mxu0
    %v1095 = vadd.f32 %v919, %v1094
    %1096 = vmatmul.bf16.gmra.mxu0 %v855
    %v1097 = vpop.f32.mrf.mxu0
    %v1098 = vadd.f32 %v919, %v1097
    %v1099 = vpop.f32.mrf.mxu0
    %v1100 = vadd.f32 %v919, %v1099
    %1101 = vmatmul.bf16.gmra.mxu0 %v857
    %v1102 = vpop.f32.mrf.mxu0
    %v1103 = vadd.f32 %v919, %v1102
    %v1104 = vpop.f32.mrf.mxu0
    %v1105 = vadd.f32 %v919, %v1104
    %1106 = vmatmul.bf16.gmra.mxu0 %v859
    %v1107 = vpop.f32.mrf.mxu0
    %v1108 = vadd.f32 %v919, %v1107
    %v1109 = vpop.f32.mrf.mxu0
    %v1110 = vadd.f32 %v919, %v1109
    %1111 = vmatmul.bf16.gmra.mxu0 %v861
    %v1112 = vpop.f32.mrf.mxu0
    %v1113 = vadd.f32 %v919, %v1112
    %v1114 = vpop.f32.mrf.mxu0
    %v1115 = vadd.f32 %v919, %v1114
    %1116 = vmatmul.bf16.gmra.mxu0 %v863
    %v1117 = vpop.f32.mrf.mxu0
    %v1118 = vadd.f32 %v919, %v1117
    %v1119 = vpop.f32.mrf.mxu0
    %v1120 = vadd.f32 %v919, %v1119
    %1121 = vmatmul.bf16.gmra.mxu0 %v865
    %v1122 = vpop.f32.mrf.mxu0
    %v1123 = vadd.f32 %v919, %v1122
    %v1124 = vpop.f32.mrf.mxu0
    %v1125 = vadd.f32 %v919, %v1124
    %1126 = vmatmul.bf16.gmra.mxu0 %v867
    %v1127 = vpop.f32.mrf.mxu0
    %v1128 = vadd.f32 %v919, %v1127
    %v1129 = vpop.f32.mrf.mxu0
    %v1130 = vadd.f32 %v919, %v1129
    %1131 = vmatmul.bf16.gmra.mxu0 %v869
    %v1132 = vpop.f32.mrf.mxu0
    %v1133 = vadd.f32 %v919, %v1132
    %v1134 = vpop.f32.mrf.mxu0
    %v1135 = vadd.f32 %v919, %v1134
    %1136 = vmatmul.bf16.gmra.mxu0 %v871
    %v1137 = vpop.f32.mrf.mxu0
    %v1138 = vadd.f32 %v919, %v1137
    %v1139 = vpop.f32.mrf.mxu0
    %v1140 = vadd.f32 %v919, %v1139
    %1141 = vmatmul.bf16.gmra.mxu0 %v873
    %v1142 = vpop.f32.mrf.mxu0
    %v1143 = vadd.f32 %v919, %v1142
    %v1144 = vpop.f32.mrf.mxu0
    %v1145 = vadd.f32 %v919, %v1144
    %1146 = vmatmul.bf16.gmra.mxu0 %v875
    %v1147 = vpop.f32.mrf.mxu0
    %v1148 = vadd.f32 %v919, %v1147
    %v1149 = vpop.f32.mrf.mxu0
    %v1150 = vadd.f32 %v919, %v1149
    %1151 = vmatmul.bf16.gmra.mxu0 %v877
    %v1152 = vpop.f32.mrf.mxu0
    %v1153 = vadd.f32 %v919, %v1152
    %v1154 = vpop.f32.mrf.mxu0
    %v1155 = vadd.f32 %v919, %v1154
    %1156 = vmatmul.bf16.gmra.mxu0 %v879
    %v1157 = vpop.f32.mrf.mxu0
    %v1158 = vadd.f32 %v919, %v1157
    %v1159 = vpop.f32.mrf.mxu0
    %v1160 = vadd.f32 %v919, %v1159
    %1161 = vmatmul.bf16.gmra.mxu0 %v881
    %v1162 = vpop.f32.mrf.mxu0
    %v1163 = vadd.f32 %v919, %v1162
    %v1164 = vpop.f32.mrf.mxu0
    %v1165 = vadd.f32 %v919, %v1164
    %1166 = vmatmul.bf16.gmra.mxu0 %v883
    %v1167 = vpop.f32.mrf.mxu0
    %v1168 = vadd.f32 %v919, %v1167
    %v1169 = vpop.f32.mrf.mxu0
    %v1170 = vadd.f32 %v919, %v1169
    %1171 = vdwg.mxu0
    %1172 = vmatpush.bf16.msra.mxu0 %v1049
    %1173 = vmatpush.bf16.msra.mxu0 %v1047
    %1174 = vmatpush.bf16.msra.mxu0 %v1045
    %1175 = vmatpush.bf16.msra.mxu0 %v1043
    %1176 = vmatpush.bf16.msra.mxu0 %v1041
    %1177 = vmatpush.bf16.msra.mxu0 %v1039
    %1178 = vmatpush.bf16.msra.mxu0 %v1037
    %1179 = vmatpush.bf16.msra.mxu0 %v1035
    %1180 = vmatmul.bf16.gmra.mxu0 %v854
    %v1181 = vpop.f32.mrf.mxu0
    %v1182 = vadd.f32 %v1093, %v1181
    %v1183 = vpop.f32.mrf.mxu0
    %v1184 = vadd.f32 %v1095, %v1183
    %1185 = vmatmul.bf16.gmra.mxu0 %v856
    %v1186 = vpop.f32.mrf.mxu0
    %v1187 = vadd.f32 %v1098, %v1186
    %v1188 = vpop.f32.mrf.mxu0
    %v1189 = vadd.f32 %v1100, %v1188
    %1190 = vmatmul.bf16.gmra.mxu0 %v858
    %v1191 = vpop.f32.mrf.mxu0
    %v1192 = vadd.f32 %v1103, %v1191
    %v1193 = vpop.f32.mrf.mxu0
    %v1194 = vadd.f32 %v1105, %v1193
    %1195 = vmatmul.bf16.gmra.mxu0 %v860
    %v1196 = vpop.f32.mrf.mxu0
    %v1197 = vadd.f32 %v1108, %v1196
    %v1198 = vpop.f32.mrf.mxu0
    %v1199 = vadd.f32 %v1110, %v1198
    %1200 = vmatmul.bf16.gmra.mxu0 %v862
    %v1201 = vpop.f32.mrf.mxu0
    %v1202 = vadd.f32 %v1113, %v1201
    %v1203 = vpop.f32.mrf.mxu0
    %v1204 = vadd.f32 %v1115, %v1203
    %1205 = vmatmul.bf16.gmra.mxu0 %v864
    %v1206 = vpop.f32.mrf.mxu0
    %v1207 = vadd.f32 %v1118, %v1206
    %v1208 = vpop.f32.mrf.mxu0
    %v1209 = vadd.f32 %v1120, %v1208
    %1210 = vmatmul.bf16.gmra.mxu0 %v866
    %v1211 = vpop.f32.mrf.mxu0
    %v1212 = vadd.f32 %v1123, %v1211
    %v1213 = vpop.f32.mrf.mxu0
    %v1214 = vadd.f32 %v1125, %v1213
    %1215 = vmatmul.bf16.gmra.mxu0 %v868
    %v1216 = vpop.f32.mrf.mxu0
    %v1217 = vadd.f32 %v1128, %v1216
    %v1218 = vpop.f32.mrf.mxu0
    %v1219 = vadd.f32 %v1130, %v1218
    %1220 = vmatmul.bf16.gmra.mxu0 %v870
    %v1221 = vpop.f32.mrf.mxu0
    %v1222 = vadd.f32 %v1133, %v1221
    %v1223 = vpop.f32.mrf.mxu0
    %v1224 = vadd.f32 %v1135, %v1223
    %1225 = vmatmul.bf16.gmra.mxu0 %v872
    %v1226 = vpop.f32.mrf.mxu0
    %v1227 = vadd.f32 %v1138, %v1226
    %v1228 = vpop.f32.mrf.mxu0
    %v1229 = vadd.f32 %v1140, %v1228
    %1230 = vmatmul.bf16.gmra.mxu0 %v874
    %v1231 = vpop.f32.mrf.mxu0
    %v1232 = vadd.f32 %v1143, %v1231
    %v1233 = vpop.f32.mrf.mxu0
    %v1234 = vadd.f32 %v1145, %v1233
    %1235 = vmatmul.bf16.gmra.mxu0 %v876
    %v1236 = vpop.f32.mrf.mxu0
    %v1237 = vadd.f32 %v1148, %v1236
    %v1238 = vpop.f32.mrf.mxu0
    %v1239 = vadd.f32 %v1150, %v1238
    %1240 = vmatmul.bf16.gmra.mxu0 %v878
    %v1241 = vpop.f32.mrf.mxu0
    %v1242 = vadd.f32 %v1153, %v1241
    %v1243 = vpop.f32.mrf.mxu0
    %v1244 = vadd.f32 %v1155, %v1243
    %1245 = vmatmul.bf16.gmra.mxu0 %v880
    %v1246 = vpop.f32.mrf.mxu0
    %v1247 = vadd.f32 %v1158, %v1246
    %v1248 = vpop.f32.mrf.mxu0
    %v1249 = vadd.f32 %v1160, %v1248
    %1250 = vmatmul.bf16.gmra.mxu0 %v882
    %v1251 = vpop.f32.mrf.mxu0
    %v1252 = vadd.f32 %v1163, %v1251
    %v1253 = vpop.f32.mrf.mxu0
    %v1254 = vadd.f32 %v1165, %v1253
    %1255 = vmatmul.bf16.gmra.mxu0 %v884
    %v1256 = vpop.f32.mrf.mxu0
    %v1257 = vadd.f32 %v1168, %v1256
    %v1258 = vpop.f32.mrf.mxu0
    %v1259 = vadd.f32 %v1170, %v1258
    %1260 = vdwg.mxu0
    %1261 = vmatpush.bf16.msra.mxu0 %v1034
    %1262 = vmatpush.bf16.msra.mxu0 %v1032
    %1263 = vmatpush.bf16.msra.mxu0 %v1030
    %1264 = vmatpush.bf16.msra.mxu0 %v1028
    %1265 = vmatpush.bf16.msra.mxu0 %v1026
    %1266 = vmatpush.bf16.msra.mxu0 %v1024
    %1267 = vmatpush.bf16.msra.mxu0 %v1022
    %1268 = vmatpush.bf16.msra.mxu0 %v1020
    %1269 = vmatmul.bf16.gmra.mxu0 %v853
    %v1270 = vpop.f32.mrf.mxu0
    %v1271 = vadd.f32 %v920, %v1270
    %v1272 = vpop.f32.mrf.mxu0
    %v1273 = vadd.f32 %v920, %v1272
    %1274 = vmatmul.bf16.gmra.mxu0 %v855
    %v1275 = vpop.f32.mrf.mxu0
    %v1276 = vadd.f32 %v920, %v1275
    %v1277 = vpop.f32.mrf.mxu0
    %v1278 = vadd.f32 %v920, %v1277
    %1279 = vmatmul.bf16.gmra.mxu0 %v857
    %v1280 = vpop.f32.mrf.mxu0
    %v1281 = vadd.f32 %v920, %v1280
    %v1282 = vpop.f32.mrf.mxu0
    %v1283 = vadd.f32 %v920, %v1282
    %1284 = vmatmul.bf16.gmra.mxu0 %v859
    %v1285 = vpop.f32.mrf.mxu0
    %v1286 = vadd.f32 %v920, %v1285
    %v1287 = vpop.f32.mrf.mxu0
    %v1288 = vadd.f32 %v920, %v1287
    %1289 = vmatmul.bf16.gmra.mxu0 %v861
    %v1290 = vpop.f32.mrf.mxu0
    %v1291 = vadd.f32 %v920, %v1290
    %v1292 = vpop.f32.mrf.mxu0
    %v1293 = vadd.f32 %v920, %v1292
    %1294 = vmatmul.bf16.gmra.mxu0 %v863
    %v1295 = vpop.f32.mrf.mxu0
    %v1296 = vadd.f32 %v920, %v1295
    %v1297 = vpop.f32.mrf.mxu0
    %v1298 = vadd.f32 %v920, %v1297
    %1299 = vmatmul.bf16.gmra.mxu0 %v865
    %v1300 = vpop.f32.mrf.mxu0
    %v1301 = vadd.f32 %v920, %v1300
    %v1302 = vpop.f32.mrf.mxu0
    %v1303 = vadd.f32 %v920, %v1302
    %1304 = vmatmul.bf16.gmra.mxu0 %v867
    %v1305 = vpop.f32.mrf.mxu0
    %v1306 = vadd.f32 %v920, %v1305
    %v1307 = vpop.f32.mrf.mxu0
    %v1308 = vadd.f32 %v920, %v1307
    %1309 = vmatmul.bf16.gmra.mxu0 %v869
    %v1310 = vpop.f32.mrf.mxu0
    %v1311 = vadd.f32 %v920, %v1310
    %v1312 = vpop.f32.mrf.mxu0
    %v1313 = vadd.f32 %v920, %v1312
    %1314 = vmatmul.bf16.gmra.mxu0 %v871
    %v1315 = vpop.f32.mrf.mxu0
    %v1316 = vadd.f32 %v920, %v1315
    %v1317 = vpop.f32.mrf.mxu0
    %v1318 = vadd.f32 %v920, %v1317
    %1319 = vmatmul.bf16.gmra.mxu0 %v873
    %v1320 = vpop.f32.mrf.mxu0
    %v1321 = vadd.f32 %v920, %v1320
    %v1322 = vpop.f32.mrf.mxu0
    %v1323 = vadd.f32 %v920, %v1322
    %1324 = vmatmul.bf16.gmra.mxu0 %v875
    %v1325 = vpop.f32.mrf.mxu0
    %v1326 = vadd.f32 %v920, %v1325
    %v1327 = vpop.f32.mrf.mxu0
    %v1328 = vadd.f32 %v920, %v1327
    %1329 = vmatmul.bf16.gmra.mxu0 %v877
    %v1330 = vpop.f32.mrf.mxu0
    %v1331 = vadd.f32 %v920, %v1330
    %v1332 = vpop.f32.mrf.mxu0
    %v1333 = vadd.f32 %v920, %v1332
    %1334 = vmatmul.bf16.gmra.mxu0 %v879
    %v1335 = vpop.f32.mrf.mxu0
    %v1336 = vadd.f32 %v920, %v1335
    %v1337 = vpop.f32.mrf.mxu0
    %v1338 = vadd.f32 %v920, %v1337
    %1339 = vmatmul.bf16.gmra.mxu0 %v881
    %v1340 = vpop.f32.mrf.mxu0
    %v1341 = vadd.f32 %v920, %v1340
    %v1342 = vpop.f32.mrf.mxu0
    %v1343 = vadd.f32 %v920, %v1342
    %1344 = vmatmul.bf16.gmra.mxu0 %v883
    %v1345 = vpop.f32.mrf.mxu0
    %v1346 = vadd.f32 %v920, %v1345
    %v1347 = vpop.f32.mrf.mxu0
    %v1348 = vadd.f32 %v920, %v1347
    %1349 = vdwg.mxu0
    %1350 = vmatpush.bf16.msra.mxu0 %v1050
    %1351 = vmatpush.bf16.msra.mxu0 %v1048
    %1352 = vmatpush.bf16.msra.mxu0 %v1046
    %1353 = vmatpush.bf16.msra.mxu0 %v1044
    %1354 = vmatpush.bf16.msra.mxu0 %v1042
    %1355 = vmatpush.bf16.msra.mxu0 %v1040
    %1356 = vmatpush.bf16.msra.mxu0 %v1038
    %1357 = vmatpush.bf16.msra.mxu0 %v1036
    %1358 = vmatmul.bf16.gmra.mxu0 %v854
    %v1359 = vpop.f32.mrf.mxu0
    %v1360 = vadd.f32 %v1271, %v1359
    %v1361 = vpop.f32.mrf.mxu0
    %v1362 = vadd.f32 %v1273, %v1361
    %1363 = vmatmul.bf16.gmra.mxu0 %v856
    %v1364 = vpop.f32.mrf.mxu0
    %v1365 = vadd.f32 %v1276, %v1364
    %v1366 = vpop.f32.mrf.mxu0
    %v1367 = vadd.f32 %v1278, %v1366
    %1368 = vmatmul.bf16.gmra.mxu0 %v858
    %v1369 = vpop.f32.mrf.mxu0
    %v1370 = vadd.f32 %v1281, %v1369
    %v1371 = vpop.f32.mrf.mxu0
    %v1372 = vadd.f32 %v1283, %v1371
    %1373 = vmatmul.bf16.gmra.mxu0 %v860
    %v1374 = vpop.f32.mrf.mxu0
    %v1375 = vadd.f32 %v1286, %v1374
    %v1376 = vpop.f32.mrf.mxu0
    %v1377 = vadd.f32 %v1288, %v1376
    %1378 = vmatmul.bf16.gmra.mxu0 %v862
    %v1379 = vpop.f32.mrf.mxu0
    %v1380 = vadd.f32 %v1291, %v1379
    %v1381 = vpop.f32.mrf.mxu0
    %v1382 = vadd.f32 %v1293, %v1381
    %1383 = vmatmul.bf16.gmra.mxu0 %v864
    %v1384 = vpop.f32.mrf.mxu0
    %v1385 = vadd.f32 %v1296, %v1384
    %v1386 = vpop.f32.mrf.mxu0
    %v1387 = vadd.f32 %v1298, %v1386
    %1388 = vmatmul.bf16.gmra.mxu0 %v866
    %v1389 = vpop.f32.mrf.mxu0
    %v1390 = vadd.f32 %v1301, %v1389
    %v1391 = vpop.f32.mrf.mxu0
    %v1392 = vadd.f32 %v1303, %v1391
    %1393 = vmatmul.bf16.gmra.mxu0 %v868
    %v1394 = vpop.f32.mrf.mxu0
    %v1395 = vadd.f32 %v1306, %v1394
    %v1396 = vpop.f32.mrf.mxu0
    %v1397 = vadd.f32 %v1308, %v1396
    %1398 = vmatmul.bf16.gmra.mxu0 %v870
    %v1399 = vpop.f32.mrf.mxu0
    %v1400 = vadd.f32 %v1311, %v1399
    %v1401 = vpop.f32.mrf.mxu0
    %v1402 = vadd.f32 %v1313, %v1401
    %1403 = vmatmul.bf16.gmra.mxu0 %v872
    %v1404 = vpop.f32.mrf.mxu0
    %v1405 = vadd.f32 %v1316, %v1404
    %v1406 = vpop.f32.mrf.mxu0
    %v1407 = vadd.f32 %v1318, %v1406
    %1408 = vmatmul.bf16.gmra.mxu0 %v874
    %v1409 = vpop.f32.mrf.mxu0
    %v1410 = vadd.f32 %v1321, %v1409
    %v1411 = vpop.f32.mrf.mxu0
    %v1412 = vadd.f32 %v1323, %v1411
    %1413 = vmatmul.bf16.gmra.mxu0 %v876
    %v1414 = vpop.f32.mrf.mxu0
    %v1415 = vadd.f32 %v1326, %v1414
    %v1416 = vpop.f32.mrf.mxu0
    %v1417 = vadd.f32 %v1328, %v1416
    %1418 = vmatmul.bf16.gmra.mxu0 %v878
    %v1419 = vpop.f32.mrf.mxu0
    %v1420 = vadd.f32 %v1331, %v1419
    %v1421 = vpop.f32.mrf.mxu0
    %v1422 = vadd.f32 %v1333, %v1421
    %1423 = vmatmul.bf16.gmra.mxu0 %v880
    %v1424 = vpop.f32.mrf.mxu0
    %v1425 = vadd.f32 %v1336, %v1424
    %v1426 = vpop.f32.mrf.mxu0
    %v1427 = vadd.f32 %v1338, %v1426
    %1428 = vmatmul.bf16.gmra.mxu0 %v882
    %v1429 = vpop.f32.mrf.mxu0
    %v1430 = vadd.f32 %v1341, %v1429
    %v1431 = vpop.f32.mrf.mxu0
    %v1432 = vadd.f32 %v1343, %v1431
    %1433 = vmatmul.bf16.gmra.mxu0 %v884
    %v1434 = vpop.f32.mrf.mxu0
    %v1435 = vadd.f32 %v1346, %v1434
    %v1436 = vpop.f32.mrf.mxu0
    %v1437 = vadd.f32 %v1348, %v1436
    %1438 = vdwg.mxu0
    %v1439 = vmul.f32 %v1360, 0.5
    %v1440 = vmul.f32 %v1362, 0.5
    %v1441 = vmul.f32 %v1365, 0.5
    %v1442 = vmul.f32 %v1367, 0.5
    %v1443 = vmul.f32 %v1370, 0.5
    %v1444 = vmul.f32 %v1372, 0.5
    %v1445 = vmul.f32 %v1375, 0.5
    %v1446 = vmul.f32 %v1377, 0.5
    %v1447 = vmul.f32 %v1380, 0.5
    %v1448 = vmul.f32 %v1382, 0.5
    %v1449 = vmul.f32 %v1385, 0.5
    %v1450 = vmul.f32 %v1387, 0.5
    %v1451 = vmul.f32 %v1390, 0.5
    %v1452 = vmul.f32 %v1392, 0.5
    %v1453 = vmul.f32 %v1395, 0.5
    %v1454 = vmul.f32 %v1397, 0.5
    %v1455 = vmul.f32 %v1400, 0.5
    %v1456 = vmul.f32 %v1402, 0.5
    %v1457 = vmul.f32 %v1405, 0.5
    %v1458 = vmul.f32 %v1407, 0.5
    %v1459 = vmul.f32 %v1410, 0.5
    %v1460 = vmul.f32 %v1412, 0.5
    %v1461 = vmul.f32 %v1415, 0.5
    %v1462 = vmul.f32 %v1417, 0.5
    %v1463 = vmul.f32 %v1420, 0.5
    %v1464 = vmul.f32 %v1422, 0.5
    %v1465 = vmul.f32 %v1425, 0.5
    %v1466 = vmul.f32 %v1427, 0.5
    %v1467 = vmul.f32 %v1430, 0.5
    %v1468 = vmul.f32 %v1432, 0.5
    %v1469 = vmul.f32 %v1435, 0.5
    %v1470 = vmul.f32 %v1437, 0.5
    %v1471 = vmul.f32 %v1439, 1.442695
    %v1472 = vpow.pop %v1471
    %v1473 = vmul.f32 %v1440, 1.442695
    %v1474 = vpow.pop %v1473
    %v1475 = vmul.f32 %v1441, 1.442695
    %v1476 = vpow.pop %v1475
    %v1477 = vmul.f32 %v1442, 1.442695
    %v1478 = vpow.pop %v1477
    %v1479 = vmul.f32 %v1443, 1.442695
    %v1480 = vpow.pop %v1479
    %v1481 = vmul.f32 %v1444, 1.442695
    %v1482 = vpow.pop %v1481
    %v1483 = vmul.f32 %v1445, 1.442695
    %v1484 = vpow.pop %v1483
    %v1485 = vmul.f32 %v1446, 1.442695
    %v1486 = vpow.pop %v1485
    %v1487 = vmul.f32 %v1447, 1.442695
    %v1488 = vpow.pop %v1487
    %v1489 = vmul.f32 %v1448, 1.442695
    %v1490 = vpow.pop %v1489
    %v1491 = vmul.f32 %v1449, 1.442695
    %v1492 = vpow.pop %v1491
    %v1493 = vmul.f32 %v1450, 1.442695
    %v1494 = vpow.pop %v1493
    %v1495 = vmul.f32 %v1451, 1.442695
    %v1496 = vpow.pop %v1495
    %v1497 = vmul.f32 %v1452, 1.442695
    %v1498 = vpow.pop %v1497
    %v1499 = vmul.f32 %v1453, 1.442695
    %v1500 = vpow.pop %v1499
    %v1501 = vmul.f32 %v1454, 1.442695
    %v1502 = vpow.pop %v1501
    %v1503 = vmul.f32 %v1455, 1.442695
    %v1504 = vpow.pop %v1503
    %v1505 = vmul.f32 %v1456, 1.442695
    %v1506 = vpow.pop %v1505
    %v1507 = vmul.f32 %v1457, 1.442695
    %v1508 = vpow.pop %v1507
    %v1509 = vmul.f32 %v1458, 1.442695
    %v1510 = vpow.pop %v1509
    %v1511 = vmul.f32 %v1459, 1.442695
    %v1512 = vpow.pop %v1511
    %v1513 = vmul.f32 %v1460, 1.442695
    %v1514 = vpow.pop %v1513
    %v1515 = vmul.f32 %v1461, 1.442695
    %v1516 = vpow.pop %v1515
    %v1517 = vmul.f32 %v1462, 1.442695
    %v1518 = vpow.pop %v1517
    %v1519 = vmul.f32 %v1463, 1.442695
    %v1520 = vpow.pop %v1519
    %v1521 = vmul.f32 %v1464, 1.442695
    %v1522 = vpow.pop %v1521
    %v1523 = vmul.f32 %v1465, 1.442695
    %v1524 = vpow.pop %v1523
    %v1525 = vmul.f32 %v1466, 1.442695
    %v1526 = vpow.pop %v1525
    %v1527 = vmul.f32 %v1467, 1.442695
    %v1528 = vpow.pop %v1527
    %v1529 = vmul.f32 %v1468, 1.442695
    %v1530 = vpow.pop %v1529
    %v1531 = vmul.f32 %v1469, 1.442695
    %v1532 = vpow.pop %v1531
    %v1533 = vmul.f32 %v1470, 1.442695
    %v1534 = vpow.pop %v1533
    %v1535 = vld [vmem:[#allocation5] sm:$0xff]
    %v1536 = vld [vmem:[#allocation5 + $0x8] sm:$0xff]
    %v1537 = vld [vmem:[#allocation5 + $0x10] sm:$0xff]
    %v1538 = vld [vmem:[#allocation5 + $0x18] sm:$0xff]
    %v1539 = vld [vmem:[#allocation5 + $0x20] sm:$0xff]
    %v1540 = vld [vmem:[#allocation5 + $0x28] sm:$0xff]
    %v1541 = vld [vmem:[#allocation5 + $0x30] sm:$0xff]
    %v1542 = vld [vmem:[#allocation5 + $0x38] sm:$0xff]
    %v1543 = vld [vmem:[#allocation5 + $0x40] sm:$0xff]
    %v1544 = vld [vmem:[#allocation5 + $0x48] sm:$0xff]
    %v1545 = vld [vmem:[#allocation5 + $0x50] sm:$0xff]
    %v1546 = vld [vmem:[#allocation5 + $0x58] sm:$0xff]
    %v1547 = vld [vmem:[#allocation5 + $0x60] sm:$0xff]
    %v1548 = vld [vmem:[#allocation5 + $0x68] sm:$0xff]
    %v1549 = vld [vmem:[#allocation5 + $0x70] sm:$0xff]
    %v1550 = vld [vmem:[#allocation5 + $0x78] sm:$0xff]
    %v1551 = vld [vmem:[#allocation5 + $0x80] sm:$0xff]
    %v1552 = vld [vmem:[#allocation5 + $0x88] sm:$0xff]
    %v1553 = vld [vmem:[#allocation5 + $0x90] sm:$0xff]
    %v1554 = vld [vmem:[#allocation5 + $0x98] sm:$0xff]
    %v1555 = vld [vmem:[#allocation5 + $0xa0] sm:$0xff]
    %v1556 = vld [vmem:[#allocation5 + $0xa8] sm:$0xff]
    %v1557 = vld [vmem:[#allocation5 + $0xb0] sm:$0xff]
    %v1558 = vld [vmem:[#allocation5 + $0xb8] sm:$0xff]
    %v1559 = vld [vmem:[#allocation5 + $0xc0] sm:$0xff]
    %v1560 = vld [vmem:[#allocation5 + $0xc8] sm:$0xff]
    %v1561 = vld [vmem:[#allocation5 + $0xd0] sm:$0xff]
    %v1562 = vld [vmem:[#allocation5 + $0xd8] sm:$0xff]
    %v1563 = vld [vmem:[#allocation5 + $0xe0] sm:$0xff]
    %v1564 = vld [vmem:[#allocation5 + $0xe8] sm:$0xff]
    %v1565 = vld [vmem:[#allocation5 + $0xf0] sm:$0xff]
    %v1566 = vld [vmem:[#allocation5 + $0xf8] sm:$0xff]
    %v1567 = vmul.f32 %v1472, %v1535
    %v1568 = vmul.f32 %v1474, %v1536
    %v1569 = vmul.f32 %v1476, %v1537
    %v1570 = vmul.f32 %v1478, %v1538
    %v1571 = vmul.f32 %v1480, %v1539
    %v1572 = vmul.f32 %v1482, %v1540
    %v1573 = vmul.f32 %v1484, %v1541
    %v1574 = vmul.f32 %v1486, %v1542
    %v1575 = vmul.f32 %v1488, %v1543
    %v1576 = vmul.f32 %v1490, %v1544
    %v1577 = vmul.f32 %v1492, %v1545
    %v1578 = vmul.f32 %v1494, %v1546
    %v1579 = vmul.f32 %v1496, %v1547
    %v1580 = vmul.f32 %v1498, %v1548
    %v1581 = vmul.f32 %v1500, %v1549
    %v1582 = vmul.f32 %v1502, %v1550
    %v1583 = vmul.f32 %v1504, %v1551
    %v1584 = vmul.f32 %v1506, %v1552
    %v1585 = vmul.f32 %v1508, %v1553
    %v1586 = vmul.f32 %v1510, %v1554
    %v1587 = vmul.f32 %v1512, %v1555
    %v1588 = vmul.f32 %v1514, %v1556
    %v1589 = vmul.f32 %v1516, %v1557
    %v1590 = vmul.f32 %v1518, %v1558
    %v1591 = vmul.f32 %v1520, %v1559
    %v1592 = vmul.f32 %v1522, %v1560
    %v1593 = vmul.f32 %v1524, %v1561
    %v1594 = vmul.f32 %v1526, %v1562
    %v1595 = vmul.f32 %v1528, %v1563
    %v1596 = vmul.f32 %v1530, %v1564
    %v1597 = vmul.f32 %v1532, %v1565
    %v1598 = vmul.f32 %v1534, %v1566
    %v1599 = vadd.f32 %v1182, %v1567
    %v1600 = vadd.f32 %v1184, %v1568
    %v1601 = vadd.f32 %v1187, %v1569
    %v1602 = vadd.f32 %v1189, %v1570
    %v1603 = vadd.f32 %v1192, %v1571
    %v1604 = vadd.f32 %v1194, %v1572
    %v1605 = vadd.f32 %v1197, %v1573
    %v1606 = vadd.f32 %v1199, %v1574
    %v1607 = vadd.f32 %v1202, %v1575
    %v1608 = vadd.f32 %v1204, %v1576
    %v1609 = vadd.f32 %v1207, %v1577
    %v1610 = vadd.f32 %v1209, %v1578
    %v1611 = vadd.f32 %v1212, %v1579
    %v1612 = vadd.f32 %v1214, %v1580
    %v1613 = vadd.f32 %v1217, %v1581
    %v1614 = vadd.f32 %v1219, %v1582
    %v1615 = vadd.f32 %v1222, %v1583
    %v1616 = vadd.f32 %v1224, %v1584
    %v1617 = vadd.f32 %v1227, %v1585
    %v1618 = vadd.f32 %v1229, %v1586
    %v1619 = vadd.f32 %v1232, %v1587
    %v1620 = vadd.f32 %v1234, %v1588
    %v1621 = vadd.f32 %v1237, %v1589
    %v1622 = vadd.f32 %v1239, %v1590
    %v1623 = vadd.f32 %v1242, %v1591
    %v1624 = vadd.f32 %v1244, %v1592
    %v1625 = vadd.f32 %v1247, %v1593
    %v1626 = vadd.f32 %v1249, %v1594
    %v1627 = vadd.f32 %v1252, %v1595
    %v1628 = vadd.f32 %v1254, %v1596
    %v1629 = vadd.f32 %v1257, %v1597
    %v1630 = vadd.f32 %v1259, %v1598
    %v1631 = vpack.c.bf16 %v1600, %v1599
    %v1632 = vpack.c.bf16 %v1602, %v1601
    %v1633 = vpack.c.bf16 %v1604, %v1603
    %v1634 = vpack.c.bf16 %v1606, %v1605
    %v1635 = vpack.c.bf16 %v1608, %v1607
    %v1636 = vpack.c.bf16 %v1610, %v1609
    %v1637 = vpack.c.bf16 %v1612, %v1611
    %v1638 = vpack.c.bf16 %v1614, %v1613
    %v1639 = vpack.c.bf16 %v1616, %v1615
    %v1640 = vpack.c.bf16 %v1618, %v1617
    %v1641 = vpack.c.bf16 %v1620, %v1619
    %v1642 = vpack.c.bf16 %v1622, %v1621
    %v1643 = vpack.c.bf16 %v1624, %v1623
    %v1644 = vpack.c.bf16 %v1626, %v1625
    %v1645 = vpack.c.bf16 %v1628, %v1627
    %v1646 = vpack.c.bf16 %v1630, %v1629
    %v1647 = vld [vmem:[#allocation10] sm:$0xff]
    %v1648 = vld [vmem:[#allocation10 + $0x8] sm:$0xff]
    %v1649 = vld [vmem:[#allocation10 + $0x10] sm:$0xff]
    %v1650 = vld [vmem:[#allocation10 + $0x18] sm:$0xff]
    %v1651 = vld [vmem:[#allocation10 + $0x20] sm:$0xff]
    %v1652 = vld [vmem:[#allocation10 + $0x28] sm:$0xff]
    %v1653 = vld [vmem:[#allocation10 + $0x30] sm:$0xff]
    %v1654 = vld [vmem:[#allocation10 + $0x38] sm:$0xff]
    %v1655 = vld [vmem:[#allocation10 + $0x40] sm:$0xff]
    %v1656 = vld [vmem:[#allocation10 + $0x48] sm:$0xff]
    %v1657 = vld [vmem:[#allocation10 + $0x50] sm:$0xff]
    %v1658 = vld [vmem:[#allocation10 + $0x58] sm:$0xff]
    %v1659 = vld [vmem:[#allocation10 + $0x60] sm:$0xff]
    %v1660 = vld [vmem:[#allocation10 + $0x68] sm:$0xff]
    %v1661 = vld [vmem:[#allocation10 + $0x70] sm:$0xff]
    %v1662 = vld [vmem:[#allocation10 + $0x78] sm:$0xff]
    %v1663 = vld [vmem:[%s7] sm:$0x3]
    %v1665 = vperm.slane %v1663, 0
    %v1666 = vperm.slane %v1663, 1
    %v1685 = vunpack.c.l.b16 %v1647
    %v1686 = vunpack.c.h.b16 %v1647
    %v1687 = vunpack.c.l.b16 %v1648
    %v1688 = vunpack.c.h.b16 %v1648
    %v1689 = vunpack.c.l.b16 %v1649
    %v1690 = vunpack.c.h.b16 %v1649
    %v1691 = vunpack.c.l.b16 %v1650
    %v1692 = vunpack.c.h.b16 %v1650
    %v1693 = vunpack.c.l.b16 %v1651
    %v1694 = vunpack.c.h.b16 %v1651
    %v1695 = vunpack.c.l.b16 %v1652
    %v1696 = vunpack.c.h.b16 %v1652
    %v1697 = vunpack.c.l.b16 %v1653
    %v1698 = vunpack.c.h.b16 %v1653
    %v1699 = vunpack.c.l.b16 %v1654
    %v1700 = vunpack.c.h.b16 %v1654
    %v1701 = vunpack.c.l.b16 %v1655
    %v1702 = vunpack.c.h.b16 %v1655
    %v1703 = vunpack.c.l.b16 %v1656
    %v1704 = vunpack.c.h.b16 %v1656
    %v1705 = vunpack.c.l.b16 %v1657
    %v1706 = vunpack.c.h.b16 %v1657
    %v1707 = vunpack.c.l.b16 %v1658
    %v1708 = vunpack.c.h.b16 %v1658
    %v1709 = vunpack.c.l.b16 %v1659
    %v1710 = vunpack.c.h.b16 %v1659
    %v1711 = vunpack.c.l.b16 %v1660
    %v1712 = vunpack.c.h.b16 %v1660
    %v1713 = vunpack.c.l.b16 %v1661
    %v1714 = vunpack.c.h.b16 %v1661
    %v1715 = vunpack.c.l.b16 %v1662
    %v1716 = vunpack.c.h.b16 %v1662
    %v1717 = vpack.c.b16 %v1687, %v1685
    %v1718 = vpack.c.b16 %v1688, %v1686
    %v1719 = vpack.c.b16 %v1691, %v1689
    %v1720 = vpack.c.b16 %v1692, %v1690
    %v1721 = vpack.c.b16 %v1695, %v1693
    %v1722 = vpack.c.b16 %v1696, %v1694
    %v1723 = vpack.c.b16 %v1699, %v1697
    %v1724 = vpack.c.b16 %v1700, %v1698
    %v1725 = vpack.c.b16 %v1703, %v1701
    %v1726 = vpack.c.b16 %v1704, %v1702
    %v1727 = vpack.c.b16 %v1707, %v1705
    %v1728 = vpack.c.b16 %v1708, %v1706
    %v1729 = vpack.c.b16 %v1711, %v1709
    %v1730 = vpack.c.b16 %v1712, %v1710
    %v1731 = vpack.c.b16 %v1715, %v1713
    %v1732 = vpack.c.b16 %v1716, %v1714
    %1749 = vmatpush.bf16.msra.mxu0 %v1731
    %1750 = vmatpush.bf16.msra.mxu0 %v1729
    %1751 = vmatpush.bf16.msra.mxu0 %v1727
    %1752 = vmatpush.bf16.msra.mxu0 %v1725
    %1753 = vmatpush.bf16.msra.mxu0 %v1723
    %1754 = vmatpush.bf16.msra.mxu0 %v1721
    %1755 = vmatpush.bf16.msra.mxu0 %v1719
    %1756 = vmatpush.bf16.msra.mxu0 %v1717
    %1757 = vmatmul.bf16.gmra.mxu0 %v1631
    %v1758 = vpop.f32.mrf.mxu0
    %v1759 = vadd.f32 %v1665, %v1758
    %v1760 = vpop.f32.mrf.mxu0
    %v1761 = vadd.f32 %v1665, %v1760
    %1762 = vmatmul.bf16.gmra.mxu0 %v1632
    %v1763 = vpop.f32.mrf.mxu0
    %v1764 = vadd.f32 %v1665, %v1763
    %v1765 = vpop.f32.mrf.mxu0
    %v1766 = vadd.f32 %v1665, %v1765
    %1767 = vmatmul.bf16.gmra.mxu0 %v1633
    %v1768 = vpop.f32.mrf.mxu0
    %v1769 = vadd.f32 %v1665, %v1768
    %v1770 = vpop.f32.mrf.mxu0
    %v1771 = vadd.f32 %v1665, %v1770
    %1772 = vmatmul.bf16.gmra.mxu0 %v1634
    %v1773 = vpop.f32.mrf.mxu0
    %v1774 = vadd.f32 %v1665, %v1773
    %v1775 = vpop.f32.mrf.mxu0
    %v1776 = vadd.f32 %v1665, %v1775
    %1777 = vmatmul.bf16.gmra.mxu0 %v1635
    %v1778 = vpop.f32.mrf.mxu0
    %v1779 = vadd.f32 %v1665, %v1778
    %v1780 = vpop.f32.mrf.mxu0
    %v1781 = vadd.f32 %v1665, %v1780
    %1782 = vmatmul.bf16.gmra.mxu0 %v1636
    %v1783 = vpop.f32.mrf.mxu0
    %v1784 = vadd.f32 %v1665, %v1783
    %v1785 = vpop.f32.mrf.mxu0
    %v1786 = vadd.f32 %v1665, %v1785
    %1787 = vmatmul.bf16.gmra.mxu0 %v1637
    %v1788 = vpop.f32.mrf.mxu0
    %v1789 = vadd.f32 %v1665, %v1788
    %v1790 = vpop.f32.mrf.mxu0
    %v1791 = vadd.f32 %v1665, %v1790
    %1792 = vmatmul.bf16.gmra.mxu0 %v1638
    %v1793 = vpop.f32.mrf.mxu0
    %v1794 = vadd.f32 %v1665, %v1793
    %v1795 = vpop.f32.mrf.mxu0
    %v1796 = vadd.f32 %v1665, %v1795
    %1797 = vmatmul.bf16.gmra.mxu0 %v1639
    %v1798 = vpop.f32.mrf.mxu0
    %v1799 = vadd.f32 %v1665, %v1798
    %v1800 = vpop.f32.mrf.mxu0
    %v1801 = vadd.f32 %v1665, %v1800
    %1802 = vmatmul.bf16.gmra.mxu0 %v1640
    %v1803 = vpop.f32.mrf.mxu0
    %v1804 = vadd.f32 %v1665, %v1803
    %v1805 = vpop.f32.mrf.mxu0
    %v1806 = vadd.f32 %v1665, %v1805
    %1807 = vmatmul.bf16.gmra.mxu0 %v1641
    %v1808 = vpop.f32.mrf.mxu0
    %v1809 = vadd.f32 %v1665, %v1808
    %v1810 = vpop.f32.mrf.mxu0
    %v1811 = vadd.f32 %v1665, %v1810
    %1812 = vmatmul.bf16.gmra.mxu0 %v1642
    %v1813 = vpop.f32.mrf.mxu0
    %v1814 = vadd.f32 %v1665, %v1813
    %v1815 = vpop.f32.mrf.mxu0
    %v1816 = vadd.f32 %v1665, %v1815
    %1817 = vmatmul.bf16.gmra.mxu0 %v1643
    %v1818 = vpop.f32.mrf.mxu0
    %v1819 = vadd.f32 %v1665, %v1818
    %v1820 = vpop.f32.mrf.mxu0
    %v1821 = vadd.f32 %v1665, %v1820
    %1822 = vmatmul.bf16.gmra.mxu0 %v1644
    %v1823 = vpop.f32.mrf.mxu0
    %v1824 = vadd.f32 %v1665, %v1823
    %v1825 = vpop.f32.mrf.mxu0
    %v1826 = vadd.f32 %v1665, %v1825
    %1827 = vmatmul.bf16.gmra.mxu0 %v1645
    %v1828 = vpop.f32.mrf.mxu0
    %v1829 = vadd.f32 %v1665, %v1828
    %v1830 = vpop.f32.mrf.mxu0
    %v1831 = vadd.f32 %v1665, %v1830
    %1832 = vmatmul.bf16.gmra.mxu0 %v1646
    %v1833 = vpop.f32.mrf.mxu0
    %v1834 = vadd.f32 %v1665, %v1833
    %v1835 = vpop.f32.mrf.mxu0
    %v1836 = vadd.f32 %v1665, %v1835
    %1837 = vdwg.mxu0
    %1838 = vmatpush.bf16.msra.mxu0 %v1732
    %1839 = vmatpush.bf16.msra.mxu0 %v1730
    %1840 = vmatpush.bf16.msra.mxu0 %v1728
    %1841 = vmatpush.bf16.msra.mxu0 %v1726
    %1842 = vmatpush.bf16.msra.mxu0 %v1724
    %1843 = vmatpush.bf16.msra.mxu0 %v1722
    %1844 = vmatpush.bf16.msra.mxu0 %v1720
    %1845 = vmatpush.bf16.msra.mxu0 %v1718
    %1846 = vmatmul.bf16.gmra.mxu0 %v1631
    %v1847 = vpop.f32.mrf.mxu0
    %v1848 = vadd.f32 %v1666, %v1847
    %v1849 = vpop.f32.mrf.mxu0
    %v1850 = vadd.f32 %v1666, %v1849
    %1851 = vmatmul.bf16.gmra.mxu0 %v1632
    %v1852 = vpop.f32.mrf.mxu0
    %v1853 = vadd.f32 %v1666, %v1852
    %v1854 = vpop.f32.mrf.mxu0
    %v1855 = vadd.f32 %v1666, %v1854
    %1856 = vmatmul.bf16.gmra.mxu0 %v1633
    %v1857 = vpop.f32.mrf.mxu0
    %v1858 = vadd.f32 %v1666, %v1857
    %v1859 = vpop.f32.mrf.mxu0
    %v1860 = vadd.f32 %v1666, %v1859
    %1861 = vmatmul.bf16.gmra.mxu0 %v1634
    %v1862 = vpop.f32.mrf.mxu0
    %v1863 = vadd.f32 %v1666, %v1862
    %v1864 = vpop.f32.mrf.mxu0
    %v1865 = vadd.f32 %v1666, %v1864
    %1866 = vmatmul.bf16.gmra.mxu0 %v1635
    %v1867 = vpop.f32.mrf.mxu0
    %v1868 = vadd.f32 %v1666, %v1867
    %v1869 = vpop.f32.mrf.mxu0
    %v1870 = vadd.f32 %v1666, %v1869
    %1871 = vmatmul.bf16.gmra.mxu0 %v1636
    %v1872 = vpop.f32.mrf.mxu0
    %v1873 = vadd.f32 %v1666, %v1872
    %v1874 = vpop.f32.mrf.mxu0
    %v1875 = vadd.f32 %v1666, %v1874
    %1876 = vmatmul.bf16.gmra.mxu0 %v1637
    %v1877 = vpop.f32.mrf.mxu0
    %v1878 = vadd.f32 %v1666, %v1877
    %v1879 = vpop.f32.mrf.mxu0
    %v1880 = vadd.f32 %v1666, %v1879
    %1881 = vmatmul.bf16.gmra.mxu0 %v1638
    %v1882 = vpop.f32.mrf.mxu0
    %v1883 = vadd.f32 %v1666, %v1882
    %v1884 = vpop.f32.mrf.mxu0
    %v1885 = vadd.f32 %v1666, %v1884
    %1886 = vmatmul.bf16.gmra.mxu0 %v1639
    %v1887 = vpop.f32.mrf.mxu0
    %v1888 = vadd.f32 %v1666, %v1887
    %v1889 = vpop.f32.mrf.mxu0
    %v1890 = vadd.f32 %v1666, %v1889
    %1891 = vmatmul.bf16.gmra.mxu0 %v1640
    %v1892 = vpop.f32.mrf.mxu0
    %v1893 = vadd.f32 %v1666, %v1892
    %v1894 = vpop.f32.mrf.mxu0
    %v1895 = vadd.f32 %v1666, %v1894
    %1896 = vmatmul.bf16.gmra.mxu0 %v1641
    %v1897 = vpop.f32.mrf.mxu0
    %v1898 = vadd.f32 %v1666, %v1897
    %v1899 = vpop.f32.mrf.mxu0
    %v1900 = vadd.f32 %v1666, %v1899
    %1901 = vmatmul.bf16.gmra.mxu0 %v1642
    %v1902 = vpop.f32.mrf.mxu0
    %v1903 = vadd.f32 %v1666, %v1902
    %v1904 = vpop.f32.mrf.mxu0
    %v1905 = vadd.f32 %v1666, %v1904
    %1906 = vmatmul.bf16.gmra.mxu0 %v1643
    %v1907 = vpop.f32.mrf.mxu0
    %v1908 = vadd.f32 %v1666, %v1907
    %v1909 = vpop.f32.mrf.mxu0
    %v1910 = vadd.f32 %v1666, %v1909
    %1911 = vmatmul.bf16.gmra.mxu0 %v1644
    %v1912 = vpop.f32.mrf.mxu0
    %v1913 = vadd.f32 %v1666, %v1912
    %v1914 = vpop.f32.mrf.mxu0
    %v1915 = vadd.f32 %v1666, %v1914
    %1916 = vmatmul.bf16.gmra.mxu0 %v1645
    %v1917 = vpop.f32.mrf.mxu0
    %v1918 = vadd.f32 %v1666, %v1917
    %v1919 = vpop.f32.mrf.mxu0
    %v1920 = vadd.f32 %v1666, %v1919
    %1921 = vmatmul.bf16.gmra.mxu0 %v1646
    %v1922 = vpop.f32.mrf.mxu0
    %v1923 = vadd.f32 %v1666, %v1922
    %v1924 = vpop.f32.mrf.mxu0
    %v1925 = vadd.f32 %v1666, %v1924
    %1926 = vdwg.mxu0
    %v1927 = vmax.f32 %v1759, 0.0
    %v1928 = vmax.f32 %v1848, 0.0
    %v1929 = vmax.f32 %v1761, 0.0
    %v1930 = vmax.f32 %v1850, 0.0
    %v1931 = vmax.f32 %v1764, 0.0
    %v1932 = vmax.f32 %v1853, 0.0
    %v1933 = vmax.f32 %v1766, 0.0
    %v1934 = vmax.f32 %v1855, 0.0
    %v1935 = vmax.f32 %v1769, 0.0
    %v1936 = vmax.f32 %v1858, 0.0
    %v1937 = vmax.f32 %v1771, 0.0
    %v1938 = vmax.f32 %v1860, 0.0
    %v1939 = vmax.f32 %v1774, 0.0
    %v1940 = vmax.f32 %v1863, 0.0
    %v1941 = vmax.f32 %v1776, 0.0
    %v1942 = vmax.f32 %v1865, 0.0
    %v1943 = vmax.f32 %v1779, 0.0
    %v1944 = vmax.f32 %v1868, 0.0
    %v1945 = vmax.f32 %v1781, 0.0
    %v1946 = vmax.f32 %v1870, 0.0
    %v1947 = vmax.f32 %v1784, 0.0
    %v1948 = vmax.f32 %v1873, 0.0
    %v1949 = vmax.f32 %v1786, 0.0
    %v1950 = vmax.f32 %v1875, 0.0
    %v1951 = vmax.f32 %v1789, 0.0
    %v1952 = vmax.f32 %v1878, 0.0
    %v1953 = vmax.f32 %v1791, 0.0
    %v1954 = vmax.f32 %v1880, 0.0
    %v1955 = vmax.f32 %v1794, 0.0
    %v1956 = vmax.f32 %v1883, 0.0
    %v1957 = vmax.f32 %v1796, 0.0
    %v1958 = vmax.f32 %v1885, 0.0
    %v1959 = vmax.f32 %v1799, 0.0
    %v1960 = vmax.f32 %v1888, 0.0
    %v1961 = vmax.f32 %v1801, 0.0
    %v1962 = vmax.f32 %v1890, 0.0
    %v1963 = vmax.f32 %v1804, 0.0
    %v1964 = vmax.f32 %v1893, 0.0
    %v1965 = vmax.f32 %v1806, 0.0
    %v1966 = vmax.f32 %v1895, 0.0
    %v1967 = vmax.f32 %v1809, 0.0
    %v1968 = vmax.f32 %v1898, 0.0
    %v1969 = vmax.f32 %v1811, 0.0
    %v1970 = vmax.f32 %v1900, 0.0
    %v1971 = vmax.f32 %v1814, 0.0
    %v1972 = vmax.f32 %v1903, 0.0
    %v1973 = vmax.f32 %v1816, 0.0
    %v1974 = vmax.f32 %v1905, 0.0
    %v1975 = vmax.f32 %v1819, 0.0
    %v1976 = vmax.f32 %v1908, 0.0
    %v1977 = vmax.f32 %v1821, 0.0
    %v1978 = vmax.f32 %v1910, 0.0
    %v1979 = vmax.f32 %v1824, 0.0
    %v1980 = vmax.f32 %v1913, 0.0
    %v1981 = vmax.f32 %v1826, 0.0
    %v1982 = vmax.f32 %v1915, 0.0
    %v1983 = vmax.f32 %v1829, 0.0
    %v1984 = vmax.f32 %v1918, 0.0
    %v1985 = vmax.f32 %v1831, 0.0
    %v1986 = vmax.f32 %v1920, 0.0
    %v1987 = vmax.f32 %v1834, 0.0
    %v1988 = vmax.f32 %v1923, 0.0
    %v1989 = vmax.f32 %v1836, 0.0
    %v1990 = vmax.f32 %v1925, 0.0
    %v1991 = vpack.c.bf16 %v1929, %v1927
    %v1992 = vpack.c.bf16 %v1930, %v1928
    %v1993 = vpack.c.bf16 %v1933, %v1931
    %v1994 = vpack.c.bf16 %v1934, %v1932
    %v1995 = vpack.c.bf16 %v1937, %v1935
    %v1996 = vpack.c.bf16 %v1938, %v1936
    %v1997 = vpack.c.bf16 %v1941, %v1939
    %v1998 = vpack.c.bf16 %v1942, %v1940
    %v1999 = vpack.c.bf16 %v1945, %v1943
    %v2000 = vpack.c.bf16 %v1946, %v1944
    %v2001 = vpack.c.bf16 %v1949, %v1947
    %v2002 = vpack.c.bf16 %v1950, %v1948
    %v2003 = vpack.c.bf16 %v1953, %v1951
    %v2004 = vpack.c.bf16 %v1954, %v1952
    %v2005 = vpack.c.bf16 %v1957, %v1955
    %v2006 = vpack.c.bf16 %v1958, %v1956
    %v2007 = vpack.c.bf16 %v1961, %v1959
    %v2008 = vpack.c.bf16 %v1962, %v1960
    %v2009 = vpack.c.bf16 %v1965, %v1963
    %v2010 = vpack.c.bf16 %v1966, %v1964
    %v2011 = vpack.c.bf16 %v1969, %v1967
    %v2012 = vpack.c.bf16 %v1970, %v1968
    %v2013 = vpack.c.bf16 %v1973, %v1971
    %v2014 = vpack.c.bf16 %v1974, %v1972
    %v2015 = vpack.c.bf16 %v1977, %v1975
    %v2016 = vpack.c.bf16 %v1978, %v1976
    %v2017 = vpack.c.bf16 %v1981, %v1979
    %v2018 = vpack.c.bf16 %v1982, %v1980
    %v2019 = vpack.c.bf16 %v1985, %v1983
    %v2020 = vpack.c.bf16 %v1986, %v1984
    %v2021 = vpack.c.bf16 %v1989, %v1987
    %v2022 = vpack.c.bf16 %v1990, %v1988
    %v2023 = vld [vmem:[#allocation11] sm:$0xff]
    %v2024 = vld [vmem:[#allocation11 + $0x8] sm:$0xff]
    %v2025 = vld [vmem:[#allocation11 + $0x10] sm:$0xff]
    %v2026 = vld [vmem:[#allocation11 + $0x18] sm:$0xff]
    %v2027 = vld [vmem:[#allocation11 + $0x20] sm:$0xff]
    %v2028 = vld [vmem:[#allocation11 + $0x28] sm:$0xff]
    %v2029 = vld [vmem:[#allocation11 + $0x30] sm:$0xff]
    %v2030 = vld [vmem:[#allocation11 + $0x38] sm:$0xff]
    %v2031 = vld [vmem:[#allocation11 + $0x40] sm:$0xff]
    %v2032 = vld [vmem:[#allocation11 + $0x48] sm:$0xff]
    %v2033 = vld [vmem:[#allocation11 + $0x50] sm:$0xff]
    %v2034 = vld [vmem:[#allocation11 + $0x58] sm:$0xff]
    %v2035 = vld [vmem:[#allocation11 + $0x60] sm:$0xff]
    %v2036 = vld [vmem:[#allocation11 + $0x68] sm:$0xff]
    %v2037 = vld [vmem:[#allocation11 + $0x70] sm:$0xff]
    %v2038 = vld [vmem:[#allocation11 + $0x78] sm:$0xff]
    %v2039 = vld [vmem:[#allocation11 + $0x80] sm:$0xff]
    %v2040 = vld [vmem:[#allocation11 + $0x88] sm:$0xff]
    %v2041 = vld [vmem:[#allocation11 + $0x90] sm:$0xff]
    %v2042 = vld [vmem:[#allocation11 + $0x98] sm:$0xff]
    %v2043 = vld [vmem:[#allocation11 + $0xa0] sm:$0xff]
    %v2044 = vld [vmem:[#allocation11 + $0xa8] sm:$0xff]
    %v2045 = vld [vmem:[#allocation11 + $0xb0] sm:$0xff]
    %v2046 = vld [vmem:[#allocation11 + $0xb8] sm:$0xff]
    %v2047 = vld [vmem:[#allocation11 + $0xc0] sm:$0xff]
    %v2048 = vld [vmem:[#allocation11 + $0xc8] sm:$0xff]
    %v2049 = vld [vmem:[#allocation11 + $0xd0] sm:$0xff]
    %v2050 = vld [vmem:[#allocation11 + $0xd8] sm:$0xff]
    %v2051 = vld [vmem:[#allocation11 + $0xe0] sm:$0xff]
    %v2052 = vld [vmem:[#allocation11 + $0xe8] sm:$0xff]
    %v2053 = vld [vmem:[#allocation11 + $0xf0] sm:$0xff]
    %v2054 = vld [vmem:[#allocation11 + $0xf8] sm:$0xff]
    %v2055 = vld [vmem:[%s9] sm:$0x3]
    %v2057 = vperm.slane %v2055, 0
    %v2058 = vperm.slane %v2055, 1
    %v2093 = vunpack.c.l.b16 %v2023
    %v2094 = vunpack.c.h.b16 %v2023
    %v2095 = vunpack.c.l.b16 %v2024
    %v2096 = vunpack.c.h.b16 %v2024
    %v2097 = vunpack.c.l.b16 %v2025
    %v2098 = vunpack.c.h.b16 %v2025
    %v2099 = vunpack.c.l.b16 %v2026
    %v2100 = vunpack.c.h.b16 %v2026
    %v2101 = vunpack.c.l.b16 %v2027
    %v2102 = vunpack.c.h.b16 %v2027
    %v2103 = vunpack.c.l.b16 %v2028
    %v2104 = vunpack.c.h.b16 %v2028
    %v2105 = vunpack.c.l.b16 %v2029
    %v2106 = vunpack.c.h.b16 %v2029
    %v2107 = vunpack.c.l.b16 %v2030
    %v2108 = vunpack.c.h.b16 %v2030
    %v2109 = vunpack.c.l.b16 %v2031
    %v2110 = vunpack.c.h.b16 %v2031
    %v2111 = vunpack.c.l.b16 %v2032
    %v2112 = vunpack.c.h.b16 %v2032
    %v2113 = vunpack.c.l.b16 %v2033
    %v2114 = vunpack.c.h.b16 %v2033
    %v2115 = vunpack.c.l.b16 %v2034
    %v2116 = vunpack.c.h.b16 %v2034
    %v2117 = vunpack.c.l.b16 %v2035
    %v2118 = vunpack.c.h.b16 %v2035
    %v2119 = vunpack.c.l.b16 %v2036
    %v2120 = vunpack.c.h.b16 %v2036
    %v2121 = vunpack.c.l.b16 %v2037
    %v2122 = vunpack.c.h.b16 %v2037
    %v2123 = vunpack.c.l.b16 %v2038
    %v2124 = vunpack.c.h.b16 %v2038
    %v2125 = vunpack.c.l.b16 %v2039
    %v2126 = vunpack.c.h.b16 %v2039
    %v2127 = vunpack.c.l.b16 %v2040
    %v2128 = vunpack.c.h.b16 %v2040
    %v2129 = vunpack.c.l.b16 %v2041
    %v2130 = vunpack.c.h.b16 %v2041
    %v2131 = vunpack.c.l.b16 %v2042
    %v2132 = vunpack.c.h.b16 %v2042
    %v2133 = vunpack.c.l.b16 %v2043
    %v2134 = vunpack.c.h.b16 %v2043
    %v2135 = vunpack.c.l.b16 %v2044
    %v2136 = vunpack.c.h.b16 %v2044
    %v2137 = vunpack.c.l.b16 %v2045
    %v2138 = vunpack.c.h.b16 %v2045
    %v2139 = vunpack.c.l.b16 %v2046
    %v2140 = vunpack.c.h.b16 %v2046
    %v2141 = vunpack.c.l.b16 %v2047
    %v2142 = vunpack.c.h.b16 %v2047
    %v2143 = vunpack.c.l.b16 %v2048
    %v2144 = vunpack.c.h.b16 %v2048
    %v2145 = vunpack.c.l.b16 %v2049
    %v2146 = vunpack.c.h.b16 %v2049
    %v2147 = vunpack.c.l.b16 %v2050
    %v2148 = vunpack.c.h.b16 %v2050
    %v2149 = vunpack.c.l.b16 %v2051
    %v2150 = vunpack.c.h.b16 %v2051
    %v2151 = vunpack.c.l.b16 %v2052
    %v2152 = vunpack.c.h.b16 %v2052
    %v2153 = vunpack.c.l.b16 %v2053
    %v2154 = vunpack.c.h.b16 %v2053
    %v2155 = vunpack.c.l.b16 %v2054
    %v2156 = vunpack.c.h.b16 %v2054
    %v2157 = vpack.c.b16 %v2095, %v2093
    %v2158 = vpack.c.b16 %v2096, %v2094
    %v2159 = vpack.c.b16 %v2099, %v2097
    %v2160 = vpack.c.b16 %v2100, %v2098
    %v2161 = vpack.c.b16 %v2103, %v2101
    %v2162 = vpack.c.b16 %v2104, %v2102
    %v2163 = vpack.c.b16 %v2107, %v2105
    %v2164 = vpack.c.b16 %v2108, %v2106
    %v2165 = vpack.c.b16 %v2111, %v2109
    %v2166 = vpack.c.b16 %v2112, %v2110
    %v2167 = vpack.c.b16 %v2115, %v2113
    %v2168 = vpack.c.b16 %v2116, %v2114
    %v2169 = vpack.c.b16 %v2119, %v2117
    %v2170 = vpack.c.b16 %v2120, %v2118
    %v2171 = vpack.c.b16 %v2123, %v2121
    %v2172 = vpack.c.b16 %v2124, %v2122
    %v2173 = vpack.c.b16 %v2127, %v2125
    %v2174 = vpack.c.b16 %v2128, %v2126
    %v2175 = vpack.c.b16 %v2131, %v2129
    %v2176 = vpack.c.b16 %v2132, %v2130
    %v2177 = vpack.c.b16 %v2135, %v2133
    %v2178 = vpack.c.b16 %v2136, %v2134
    %v2179 = vpack.c.b16 %v2139, %v2137
    %v2180 = vpack.c.b16 %v2140, %v2138
    %v2181 = vpack.c.b16 %v2143, %v2141
    %v2182 = vpack.c.b16 %v2144, %v2142
    %v2183 = vpack.c.b16 %v2147, %v2145
    %v2184 = vpack.c.b16 %v2148, %v2146
    %v2185 = vpack.c.b16 %v2151, %v2149
    %v2186 = vpack.c.b16 %v2152, %v2150
    %v2187 = vpack.c.b16 %v2155, %v2153
    %v2188 = vpack.c.b16 %v2156, %v2154
    %2221 = vmatpush.bf16.msra.mxu0 %v2171
    %2222 = vmatpush.bf16.msra.mxu0 %v2169
    %2223 = vmatpush.bf16.msra.mxu0 %v2167
    %2224 = vmatpush.bf16.msra.mxu0 %v2165
    %2225 = vmatpush.bf16.msra.mxu0 %v2163
    %2226 = vmatpush.bf16.msra.mxu0 %v2161
    %2227 = vmatpush.bf16.msra.mxu0 %v2159
    %2228 = vmatpush.bf16.msra.mxu0 %v2157
    %2229 = vmatmul.bf16.gmra.mxu0 %v1991
    %v2230 = vpop.f32.mrf.mxu0
    %v2231 = vadd.f32 %v2057, %v2230
    %v2232 = vpop.f32.mrf.mxu0
    %v2233 = vadd.f32 %v2057, %v2232
    %2234 = vmatmul.bf16.gmra.mxu0 %v1993
    %v2235 = vpop.f32.mrf.mxu0
    %v2236 = vadd.f32 %v2057, %v2235
    %v2237 = vpop.f32.mrf.mxu0
    %v2238 = vadd.f32 %v2057, %v2237
    %2239 = vmatmul.bf16.gmra.mxu0 %v1995
    %v2240 = vpop.f32.mrf.mxu0
    %v2241 = vadd.f32 %v2057, %v2240
    %v2242 = vpop.f32.mrf.mxu0
    %v2243 = vadd.f32 %v2057, %v2242
    %2244 = vmatmul.bf16.gmra.mxu0 %v1997
    %v2245 = vpop.f32.mrf.mxu0
    %v2246 = vadd.f32 %v2057, %v2245
    %v2247 = vpop.f32.mrf.mxu0
    %v2248 = vadd.f32 %v2057, %v2247
    %2249 = vmatmul.bf16.gmra.mxu0 %v1999
    %v2250 = vpop.f32.mrf.mxu0
    %v2251 = vadd.f32 %v2057, %v2250
    %v2252 = vpop.f32.mrf.mxu0
    %v2253 = vadd.f32 %v2057, %v2252
    %2254 = vmatmul.bf16.gmra.mxu0 %v2001
    %v2255 = vpop.f32.mrf.mxu0
    %v2256 = vadd.f32 %v2057, %v2255
    %v2257 = vpop.f32.mrf.mxu0
    %v2258 = vadd.f32 %v2057, %v2257
    %2259 = vmatmul.bf16.gmra.mxu0 %v2003
    %v2260 = vpop.f32.mrf.mxu0
    %v2261 = vadd.f32 %v2057, %v2260
    %v2262 = vpop.f32.mrf.mxu0
    %v2263 = vadd.f32 %v2057, %v2262
    %2264 = vmatmul.bf16.gmra.mxu0 %v2005
    %v2265 = vpop.f32.mrf.mxu0
    %v2266 = vadd.f32 %v2057, %v2265
    %v2267 = vpop.f32.mrf.mxu0
    %v2268 = vadd.f32 %v2057, %v2267
    %2269 = vmatmul.bf16.gmra.mxu0 %v2007
    %v2270 = vpop.f32.mrf.mxu0
    %v2271 = vadd.f32 %v2057, %v2270
    %v2272 = vpop.f32.mrf.mxu0
    %v2273 = vadd.f32 %v2057, %v2272
    %2274 = vmatmul.bf16.gmra.mxu0 %v2009
    %v2275 = vpop.f32.mrf.mxu0
    %v2276 = vadd.f32 %v2057, %v2275
    %v2277 = vpop.f32.mrf.mxu0
    %v2278 = vadd.f32 %v2057, %v2277
    %2279 = vmatmul.bf16.gmra.mxu0 %v2011
    %v2280 = vpop.f32.mrf.mxu0
    %v2281 = vadd.f32 %v2057, %v2280
    %v2282 = vpop.f32.mrf.mxu0
    %v2283 = vadd.f32 %v2057, %v2282
    %2284 = vmatmul.bf16.gmra.mxu0 %v2013
    %v2285 = vpop.f32.mrf.mxu0
    %v2286 = vadd.f32 %v2057, %v2285
    %v2287 = vpop.f32.mrf.mxu0
    %v2288 = vadd.f32 %v2057, %v2287
    %2289 = vmatmul.bf16.gmra.mxu0 %v2015
    %v2290 = vpop.f32.mrf.mxu0
    %v2291 = vadd.f32 %v2057, %v2290
    %v2292 = vpop.f32.mrf.mxu0
    %v2293 = vadd.f32 %v2057, %v2292
    %2294 = vmatmul.bf16.gmra.mxu0 %v2017
    %v2295 = vpop.f32.mrf.mxu0
    %v2296 = vadd.f32 %v2057, %v2295
    %v2297 = vpop.f32.mrf.mxu0
    %v2298 = vadd.f32 %v2057, %v2297
    %2299 = vmatmul.bf16.gmra.mxu0 %v2019
    %v2300 = vpop.f32.mrf.mxu0
    %v2301 = vadd.f32 %v2057, %v2300
    %v2302 = vpop.f32.mrf.mxu0
    %v2303 = vadd.f32 %v2057, %v2302
    %2304 = vmatmul.bf16.gmra.mxu0 %v2021
    %v2305 = vpop.f32.mrf.mxu0
    %v2306 = vadd.f32 %v2057, %v2305
    %v2307 = vpop.f32.mrf.mxu0
    %v2308 = vadd.f32 %v2057, %v2307
    %2309 = vdwg.mxu0
    %2310 = vmatpush.bf16.msra.mxu0 %v2187
    %2311 = vmatpush.bf16.msra.mxu0 %v2185
    %2312 = vmatpush.bf16.msra.mxu0 %v2183
    %2313 = vmatpush.bf16.msra.mxu0 %v2181
    %2314 = vmatpush.bf16.msra.mxu0 %v2179
    %2315 = vmatpush.bf16.msra.mxu0 %v2177
    %2316 = vmatpush.bf16.msra.mxu0 %v2175
    %2317 = vmatpush.bf16.msra.mxu0 %v2173
    %2318 = vmatmul.bf16.gmra.mxu0 %v1992
    %v2319 = vpop.f32.mrf.mxu0
    %v2320 = vadd.f32 %v2231, %v2319
    %v2321 = vpop.f32.mrf.mxu0
    %v2322 = vadd.f32 %v2233, %v2321
    %2323 = vmatmul.bf16.gmra.mxu0 %v1994
    %v2324 = vpop.f32.mrf.mxu0
    %v2325 = vadd.f32 %v2236, %v2324
    %v2326 = vpop.f32.mrf.mxu0
    %v2327 = vadd.f32 %v2238, %v2326
    %2328 = vmatmul.bf16.gmra.mxu0 %v1996
    %v2329 = vpop.f32.mrf.mxu0
    %v2330 = vadd.f32 %v2241, %v2329
    %v2331 = vpop.f32.mrf.mxu0
    %v2332 = vadd.f32 %v2243, %v2331
    %2333 = vmatmul.bf16.gmra.mxu0 %v1998
    %v2334 = vpop.f32.mrf.mxu0
    %v2335 = vadd.f32 %v2246, %v2334
    %v2336 = vpop.f32.mrf.mxu0
    %v2337 = vadd.f32 %v2248, %v2336
    %2338 = vmatmul.bf16.gmra.mxu0 %v2000
    %v2339 = vpop.f32.mrf.mxu0
    %v2340 = vadd.f32 %v2251, %v2339
    %v2341 = vpop.f32.mrf.mxu0
    %v2342 = vadd.f32 %v2253, %v2341
    %2343 = vmatmul.bf16.gmra.mxu0 %v2002
    %v2344 = vpop.f32.mrf.mxu0
    %v2345 = vadd.f32 %v2256, %v2344
    %v2346 = vpop.f32.mrf.mxu0
    %v2347 = vadd.f32 %v2258, %v2346
    %2348 = vmatmul.bf16.gmra.mxu0 %v2004
    %v2349 = vpop.f32.mrf.mxu0
    %v2350 = vadd.f32 %v2261, %v2349
    %v2351 = vpop.f32.mrf.mxu0
    %v2352 = vadd.f32 %v2263, %v2351
    %2353 = vmatmul.bf16.gmra.mxu0 %v2006
    %v2354 = vpop.f32.mrf.mxu0
    %v2355 = vadd.f32 %v2266, %v2354
    %v2356 = vpop.f32.mrf.mxu0
    %v2357 = vadd.f32 %v2268, %v2356
    %2358 = vmatmul.bf16.gmra.mxu0 %v2008
    %v2359 = vpop.f32.mrf.mxu0
    %v2360 = vadd.f32 %v2271, %v2359
    %v2361 = vpop.f32.mrf.mxu0
    %v2362 = vadd.f32 %v2273, %v2361
    %2363 = vmatmul.bf16.gmra.mxu0 %v2010
    %v2364 = vpop.f32.mrf.mxu0
    %v2365 = vadd.f32 %v2276, %v2364
    %v2366 = vpop.f32.mrf.mxu0
    %v2367 = vadd.f32 %v2278, %v2366
    %2368 = vmatmul.bf16.gmra.mxu0 %v2012
    %v2369 = vpop.f32.mrf.mxu0
    %v2370 = vadd.f32 %v2281, %v2369
    %v2371 = vpop.f32.mrf.mxu0
    %v2372 = vadd.f32 %v2283, %v2371
    %2373 = vmatmul.bf16.gmra.mxu0 %v2014
    %v2374 = vpop.f32.mrf.mxu0
    %v2375 = vadd.f32 %v2286, %v2374
    %v2376 = vpop.f32.mrf.mxu0
    %v2377 = vadd.f32 %v2288, %v2376
    %2378 = vmatmul.bf16.gmra.mxu0 %v2016
    %v2379 = vpop.f32.mrf.mxu0
    %v2380 = vadd.f32 %v2291, %v2379
    %v2381 = vpop.f32.mrf.mxu0
    %v2382 = vadd.f32 %v2293, %v2381
    %2383 = vmatmul.bf16.gmra.mxu0 %v2018
    %v2384 = vpop.f32.mrf.mxu0
    %v2385 = vadd.f32 %v2296, %v2384
    %v2386 = vpop.f32.mrf.mxu0
    %v2387 = vadd.f32 %v2298, %v2386
    %2388 = vmatmul.bf16.gmra.mxu0 %v2020
    %v2389 = vpop.f32.mrf.mxu0
    %v2390 = vadd.f32 %v2301, %v2389
    %v2391 = vpop.f32.mrf.mxu0
    %v2392 = vadd.f32 %v2303, %v2391
    %2393 = vmatmul.bf16.gmra.mxu0 %v2022
    %v2394 = vpop.f32.mrf.mxu0
    %v2395 = vadd.f32 %v2306, %v2394
    %v2396 = vpop.f32.mrf.mxu0
    %v2397 = vadd.f32 %v2308, %v2396
    %2398 = vdwg.mxu0
    %2399 = vmatpush.bf16.msra.mxu0 %v2172
    %2400 = vmatpush.bf16.msra.mxu0 %v2170
    %2401 = vmatpush.bf16.msra.mxu0 %v2168
    %2402 = vmatpush.bf16.msra.mxu0 %v2166
    %2403 = vmatpush.bf16.msra.mxu0 %v2164
    %2404 = vmatpush.bf16.msra.mxu0 %v2162
    %2405 = vmatpush.bf16.msra.mxu0 %v2160
    %2406 = vmatpush.bf16.msra.mxu0 %v2158
    %2407 = vmatmul.bf16.gmra.mxu0 %v1991
    %v2408 = vpop.f32.mrf.mxu0
    %v2409 = vadd.f32 %v2058, %v2408
    %v2410 = vpop.f32.mrf.mxu0
    %v2411 = vadd.f32 %v2058, %v2410
    %2412 = vmatmul.bf16.gmra.mxu0 %v1993
    %v2413 = vpop.f32.mrf.mxu0
    %v2414 = vadd.f32 %v2058, %v2413
    %v2415 = vpop.f32.mrf.mxu0
    %v2416 = vadd.f32 %v2058, %v2415
    %2417 = vmatmul.bf16.gmra.mxu0 %v1995
    %v2418 = vpop.f32.mrf.mxu0
    %v2419 = vadd.f32 %v2058, %v2418
    %v2420 = vpop.f32.mrf.mxu0
    %v2421 = vadd.f32 %v2058, %v2420
    %2422 = vmatmul.bf16.gmra.mxu0 %v1997
    %v2423 = vpop.f32.mrf.mxu0
    %v2424 = vadd.f32 %v2058, %v2423
    %v2425 = vpop.f32.mrf.mxu0
    %v2426 = vadd.f32 %v2058, %v2425
    %2427 = vmatmul.bf16.gmra.mxu0 %v1999
    %v2428 = vpop.f32.mrf.mxu0
    %v2429 = vadd.f32 %v2058, %v2428
    %v2430 = vpop.f32.mrf.mxu0
    %v2431 = vadd.f32 %v2058, %v2430
    %2432 = vmatmul.bf16.gmra.mxu0 %v2001
    %v2433 = vpop.f32.mrf.mxu0
    %v2434 = vadd.f32 %v2058, %v2433
    %v2435 = vpop.f32.mrf.mxu0
    %v2436 = vadd.f32 %v2058, %v2435
    %2437 = vmatmul.bf16.gmra.mxu0 %v2003
    %v2438 = vpop.f32.mrf.mxu0
    %v2439 = vadd.f32 %v2058, %v2438
    %v2440 = vpop.f32.mrf.mxu0
    %v2441 = vadd.f32 %v2058, %v2440
    %2442 = vmatmul.bf16.gmra.mxu0 %v2005
    %v2443 = vpop.f32.mrf.mxu0
    %v2444 = vadd.f32 %v2058, %v2443
    %v2445 = vpop.f32.mrf.mxu0
    %v2446 = vadd.f32 %v2058, %v2445
    %2447 = vmatmul.bf16.gmra.mxu0 %v2007
    %v2448 = vpop.f32.mrf.mxu0
    %v2449 = vadd.f32 %v2058, %v2448
    %v2450 = vpop.f32.mrf.mxu0
    %v2451 = vadd.f32 %v2058, %v2450
    %2452 = vmatmul.bf16.gmra.mxu0 %v2009
    %v2453 = vpop.f32.mrf.mxu0
    %v2454 = vadd.f32 %v2058, %v2453
    %v2455 = vpop.f32.mrf.mxu0
    %v2456 = vadd.f32 %v2058, %v2455
    %2457 = vmatmul.bf16.gmra.mxu0 %v2011
    %v2458 = vpop.f32.mrf.mxu0
    %v2459 = vadd.f32 %v2058, %v2458
    %v2460 = vpop.f32.mrf.mxu0
    %v2461 = vadd.f32 %v2058, %v2460
    %2462 = vmatmul.bf16.gmra.mxu0 %v2013
    %v2463 = vpop.f32.mrf.mxu0
    %v2464 = vadd.f32 %v2058, %v2463
    %v2465 = vpop.f32.mrf.mxu0
    %v2466 = vadd.f32 %v2058, %v2465
    %2467 = vmatmul.bf16.gmra.mxu0 %v2015
    %v2468 = vpop.f32.mrf.mxu0
    %v2469 = vadd.f32 %v2058, %v2468
    %v2470 = vpop.f32.mrf.mxu0
    %v2471 = vadd.f32 %v2058, %v2470
    %2472 = vmatmul.bf16.gmra.mxu0 %v2017
    %v2473 = vpop.f32.mrf.mxu0
    %v2474 = vadd.f32 %v2058, %v2473
    %v2475 = vpop.f32.mrf.mxu0
    %v2476 = vadd.f32 %v2058, %v2475
    %2477 = vmatmul.bf16.gmra.mxu0 %v2019
    %v2478 = vpop.f32.mrf.mxu0
    %v2479 = vadd.f32 %v2058, %v2478
    %v2480 = vpop.f32.mrf.mxu0
    %v2481 = vadd.f32 %v2058, %v2480
    %2482 = vmatmul.bf16.gmra.mxu0 %v2021
    %v2483 = vpop.f32.mrf.mxu0
    %v2484 = vadd.f32 %v2058, %v2483
    %v2485 = vpop.f32.mrf.mxu0
    %v2486 = vadd.f32 %v2058, %v2485
    %2487 = vdwg.mxu0
    %2488 = vmatpush.bf16.msra.mxu0 %v2188
    %2489 = vmatpush.bf16.msra.mxu0 %v2186
    %2490 = vmatpush.bf16.msra.mxu0 %v2184
    %2491 = vmatpush.bf16.msra.mxu0 %v2182
    %2492 = vmatpush.bf16.msra.mxu0 %v2180
    %2493 = vmatpush.bf16.msra.mxu0 %v2178
    %2494 = vmatpush.bf16.msra.mxu0 %v2176
    %2495 = vmatpush.bf16.msra.mxu0 %v2174
    %2496 = vmatmul.bf16.gmra.mxu0 %v1992
    %v2497 = vpop.f32.mrf.mxu0
    %v2498 = vadd.f32 %v2409, %v2497
    %v2499 = vpop.f32.mrf.mxu0
    %v2500 = vadd.f32 %v2411, %v2499
    %2501 = vmatmul.bf16.gmra.mxu0 %v1994
    %v2502 = vpop.f32.mrf.mxu0
    %v2503 = vadd.f32 %v2414, %v2502
    %v2504 = vpop.f32.mrf.mxu0
    %v2505 = vadd.f32 %v2416, %v2504
    %2506 = vmatmul.bf16.gmra.mxu0 %v1996
    %v2507 = vpop.f32.mrf.mxu0
    %v2508 = vadd.f32 %v2419, %v2507
    %v2509 = vpop.f32.mrf.mxu0
    %v2510 = vadd.f32 %v2421, %v2509
    %2511 = vmatmul.bf16.gmra.mxu0 %v1998
    %v2512 = vpop.f32.mrf.mxu0
    %v2513 = vadd.f32 %v2424, %v2512
    %v2514 = vpop.f32.mrf.mxu0
    %v2515 = vadd.f32 %v2426, %v2514
    %2516 = vmatmul.bf16.gmra.mxu0 %v2000
    %v2517 = vpop.f32.mrf.mxu0
    %v2518 = vadd.f32 %v2429, %v2517
    %v2519 = vpop.f32.mrf.mxu0
    %v2520 = vadd.f32 %v2431, %v2519
    %2521 = vmatmul.bf16.gmra.mxu0 %v2002
    %v2522 = vpop.f32.mrf.mxu0
    %v2523 = vadd.f32 %v2434, %v2522
    %v2524 = vpop.f32.mrf.mxu0
    %v2525 = vadd.f32 %v2436, %v2524
    %2526 = vmatmul.bf16.gmra.mxu0 %v2004
    %v2527 = vpop.f32.mrf.mxu0
    %v2528 = vadd.f32 %v2439, %v2527
    %v2529 = vpop.f32.mrf.mxu0
    %v2530 = vadd.f32 %v2441, %v2529
    %2531 = vmatmul.bf16.gmra.mxu0 %v2006
    %v2532 = vpop.f32.mrf.mxu0
    %v2533 = vadd.f32 %v2444, %v2532
    %v2534 = vpop.f32.mrf.mxu0
    %v2535 = vadd.f32 %v2446, %v2534
    %2536 = vmatmul.bf16.gmra.mxu0 %v2008
    %v2537 = vpop.f32.mrf.mxu0
    %v2538 = vadd.f32 %v2449, %v2537
    %v2539 = vpop.f32.mrf.mxu0
    %v2540 = vadd.f32 %v2451, %v2539
    %2541 = vmatmul.bf16.gmra.mxu0 %v2010
    %v2542 = vpop.f32.mrf.mxu0
    %v2543 = vadd.f32 %v2454, %v2542
    %v2544 = vpop.f32.mrf.mxu0
    %v2545 = vadd.f32 %v2456, %v2544
    %2546 = vmatmul.bf16.gmra.mxu0 %v2012
    %v2547 = vpop.f32.mrf.mxu0
    %v2548 = vadd.f32 %v2459, %v2547
    %v2549 = vpop.f32.mrf.mxu0
    %v2550 = vadd.f32 %v2461, %v2549
    %2551 = vmatmul.bf16.gmra.mxu0 %v2014
    %v2552 = vpop.f32.mrf.mxu0
    %v2553 = vadd.f32 %v2464, %v2552
    %v2554 = vpop.f32.mrf.mxu0
    %v2555 = vadd.f32 %v2466, %v2554
    %2556 = vmatmul.bf16.gmra.mxu0 %v2016
    %v2557 = vpop.f32.mrf.mxu0
    %v2558 = vadd.f32 %v2469, %v2557
    %v2559 = vpop.f32.mrf.mxu0
    %v2560 = vadd.f32 %v2471, %v2559
    %2561 = vmatmul.bf16.gmra.mxu0 %v2018
    %v2562 = vpop.f32.mrf.mxu0
    %v2563 = vadd.f32 %v2474, %v2562
    %v2564 = vpop.f32.mrf.mxu0
    %v2565 = vadd.f32 %v2476, %v2564
    %2566 = vmatmul.bf16.gmra.mxu0 %v2020
    %v2567 = vpop.f32.mrf.mxu0
    %v2568 = vadd.f32 %v2479, %v2567
    %v2569 = vpop.f32.mrf.mxu0
    %v2570 = vadd.f32 %v2481, %v2569
    %2571 = vmatmul.bf16.gmra.mxu0 %v2022
    %v2572 = vpop.f32.mrf.mxu0
    %v2573 = vadd.f32 %v2484, %v2572
    %v2574 = vpop.f32.mrf.mxu0
    %v2575 = vadd.f32 %v2486, %v2574
    %2576 = vdwg.mxu0
    %v2577 = vsub.f32 %v139, %v2320
    %v2578 = vsub.f32 %v140, %v2498
    %v2579 = vsub.f32 %v141, %v2322
    %v2580 = vsub.f32 %v142, %v2500
    %v2581 = vsub.f32 %v143, %v2325
    %v2582 = vsub.f32 %v144, %v2503
    %v2583 = vsub.f32 %v145, %v2327
    %v2584 = vsub.f32 %v146, %v2505
    %v2585 = vsub.f32 %v147, %v2330
    %v2586 = vsub.f32 %v148, %v2508
    %v2587 = vsub.f32 %v149, %v2332
    %v2588 = vsub.f32 %v150, %v2510
    %v2589 = vsub.f32 %v151, %v2335
    %v2590 = vsub.f32 %v152, %v2513
    %v2591 = vsub.f32 %v153, %v2337
    %v2592 = vsub.f32 %v154, %v2515
    %v2593 = vsub.f32 %v155, %v2340
    %v2594 = vsub.f32 %v156, %v2518
    %v2595 = vsub.f32 %v157, %v2342
    %v2596 = vsub.f32 %v158, %v2520
    %v2597 = vsub.f32 %v159, %v2345
    %v2598 = vsub.f32 %v160, %v2523
    %v2599 = vsub.f32 %v161, %v2347
    %v2600 = vsub.f32 %v162, %v2525
    %v2601 = vsub.f32 %v163, %v2350
    %v2602 = vsub.f32 %v164, %v2528
    %v2603 = vsub.f32 %v165, %v2352
    %v2604 = vsub.f32 %v166, %v2530
    %v2605 = vsub.f32 %v167, %v2355
    %v2606 = vsub.f32 %v168, %v2533
    %v2607 = vsub.f32 %v169, %v2357
    %v2608 = vsub.f32 %v170, %v2535
    %v2609 = vsub.f32 %v171, %v2360
    %v2610 = vsub.f32 %v172, %v2538
    %v2611 = vsub.f32 %v173, %v2362
    %v2612 = vsub.f32 %v174, %v2540
    %v2613 = vsub.f32 %v175, %v2365
    %v2614 = vsub.f32 %v176, %v2543
    %v2615 = vsub.f32 %v177, %v2367
    %v2616 = vsub.f32 %v178, %v2545
    %v2617 = vsub.f32 %v179, %v2370
    %v2618 = vsub.f32 %v180, %v2548
    %v2619 = vsub.f32 %v181, %v2372
    %v2620 = vsub.f32 %v182, %v2550
    %v2621 = vsub.f32 %v183, %v2375
    %v2622 = vsub.f32 %v184, %v2553
    %v2623 = vsub.f32 %v185, %v2377
    %v2624 = vsub.f32 %v186, %v2555
    %v2625 = vsub.f32 %v187, %v2380
    %v2626 = vsub.f32 %v188, %v2558
    %v2627 = vsub.f32 %v189, %v2382
    %v2628 = vsub.f32 %v190, %v2560
    %v2629 = vsub.f32 %v191, %v2385
    %v2630 = vsub.f32 %v192, %v2563
    %v2631 = vsub.f32 %v193, %v2387
    %v2632 = vsub.f32 %v194, %v2565
    %v2633 = vsub.f32 %v195, %v2390
    %v2634 = vsub.f32 %v196, %v2568
    %v2635 = vsub.f32 %v197, %v2392
    %v2636 = vsub.f32 %v198, %v2570
    %v2637 = vsub.f32 %v199, %v2395
    %v2638 = vsub.f32 %v200, %v2573
    %v2639 = vsub.f32 %v201, %v2397
    %v2640 = vsub.f32 %v202, %v2575
    %v2641 = vmul.f32 %v2577, %v2577
    %v2642 = vmul.f32 %v2578, %v2578
    %v2643 = vmul.f32 %v2579, %v2579
    %v2644 = vmul.f32 %v2580, %v2580
    %v2645 = vmul.f32 %v2581, %v2581
    %v2646 = vmul.f32 %v2582, %v2582
    %v2647 = vmul.f32 %v2583, %v2583
    %v2648 = vmul.f32 %v2584, %v2584
    %v2649 = vmul.f32 %v2585, %v2585
    %v2650 = vmul.f32 %v2586, %v2586
    %v2651 = vmul.f32 %v2587, %v2587
    %v2652 = vmul.f32 %v2588, %v2588
    %v2653 = vmul.f32 %v2589, %v2589
    %v2654 = vmul.f32 %v2590, %v2590
    %v2655 = vmul.f32 %v2591, %v2591
    %v2656 = vmul.f32 %v2592, %v2592
    %v2657 = vmul.f32 %v2593, %v2593
    %v2658 = vmul.f32 %v2594, %v2594
    %v2659 = vmul.f32 %v2595, %v2595
    %v2660 = vmul.f32 %v2596, %v2596
    %v2661 = vmul.f32 %v2597, %v2597
    %v2662 = vmul.f32 %v2598, %v2598
    %v2663 = vmul.f32 %v2599, %v2599
    %v2664 = vmul.f32 %v2600, %v2600
    %v2665 = vmul.f32 %v2601, %v2601
    %v2666 = vmul.f32 %v2602, %v2602
    %v2667 = vmul.f32 %v2603, %v2603
    %v2668 = vmul.f32 %v2604, %v2604
    %v2669 = vmul.f32 %v2605, %v2605
    %v2670 = vmul.f32 %v2606, %v2606
    %v2671 = vmul.f32 %v2607, %v2607
    %v2672 = vmul.f32 %v2608, %v2608
    %v2673 = vmul.f32 %v2609, %v2609
    %v2674 = vmul.f32 %v2610, %v2610
    %v2675 = vmul.f32 %v2611, %v2611
    %v2676 = vmul.f32 %v2612, %v2612
    %v2677 = vmul.f32 %v2613, %v2613
    %v2678 = vmul.f32 %v2614, %v2614
    %v2679 = vmul.f32 %v2615, %v2615
    %v2680 = vmul.f32 %v2616, %v2616
    %v2681 = vmul.f32 %v2617, %v2617
    %v2682 = vmul.f32 %v2618, %v2618
    %v2683 = vmul.f32 %v2619, %v2619
    %v2684 = vmul.f32 %v2620, %v2620
    %v2685 = vmul.f32 %v2621, %v2621
    %v2686 = vmul.f32 %v2622, %v2622
    %v2687 = vmul.f32 %v2623, %v2623
    %v2688 = vmul.f32 %v2624, %v2624
    %v2689 = vmul.f32 %v2625, %v2625
    %v2690 = vmul.f32 %v2626, %v2626
    %v2691 = vmul.f32 %v2627, %v2627
    %v2692 = vmul.f32 %v2628, %v2628
    %v2693 = vmul.f32 %v2629, %v2629
    %v2694 = vmul.f32 %v2630, %v2630
    %v2695 = vmul.f32 %v2631, %v2631
    %v2696 = vmul.f32 %v2632, %v2632
    %v2697 = vmul.f32 %v2633, %v2633
    %v2698 = vmul.f32 %v2634, %v2634
    %v2699 = vmul.f32 %v2635, %v2635
    %v2700 = vmul.f32 %v2636, %v2636
    %v2701 = vmul.f32 %v2637, %v2637
    %v2702 = vmul.f32 %v2638, %v2638
    %v2703 = vmul.f32 %v2639, %v2639
    %v2704 = vmul.f32 %v2640, %v2640
    %v2705 = vadd.f32 %v2641, %v2642
    %2706 = vadd.xlane.f32.xlu0 %v2705
    %v2707 = vpop.xlane.xlu0 %2706
    %v2708 = vadd.f32 %v2643, %v2644
    %2709 = vadd.xlane.f32.xlu0 %v2708
    %v2710 = vpop.xlane.xlu0 %2709
    %v2711 = vadd.f32 %v2645, %v2646
    %2712 = vadd.xlane.f32.xlu0 %v2711
    %v2713 = vpop.xlane.xlu0 %2712
    %v2714 = vadd.f32 %v2647, %v2648
    %2715 = vadd.xlane.f32.xlu0 %v2714
    %v2716 = vpop.xlane.xlu0 %2715
    %v2717 = vadd.f32 %v2649, %v2650
    %2718 = vadd.xlane.f32.xlu0 %v2717
    %v2719 = vpop.xlane.xlu0 %2718
    %v2720 = vadd.f32 %v2651, %v2652
    %2721 = vadd.xlane.f32.xlu0 %v2720
    %v2722 = vpop.xlane.xlu0 %2721
    %v2723 = vadd.f32 %v2653, %v2654
    %2724 = vadd.xlane.f32.xlu0 %v2723
    %v2725 = vpop.xlane.xlu0 %2724
    %v2726 = vadd.f32 %v2655, %v2656
    %2727 = vadd.xlane.f32.xlu0 %v2726
    %v2728 = vpop.xlane.xlu0 %2727
    %v2729 = vadd.f32 %v2657, %v2658
    %2730 = vadd.xlane.f32.xlu0 %v2729
    %v2731 = vpop.xlane.xlu0 %2730
    %v2732 = vadd.f32 %v2659, %v2660
    %2733 = vadd.xlane.f32.xlu0 %v2732
    %v2734 = vpop.xlane.xlu0 %2733
    %v2735 = vadd.f32 %v2661, %v2662
    %2736 = vadd.xlane.f32.xlu0 %v2735
    %v2737 = vpop.xlane.xlu0 %2736
    %v2738 = vadd.f32 %v2663, %v2664
    %2739 = vadd.xlane.f32.xlu0 %v2738
    %v2740 = vpop.xlane.xlu0 %2739
    %v2741 = vadd.f32 %v2665, %v2666
    %2742 = vadd.xlane.f32.xlu0 %v2741
    %v2743 = vpop.xlane.xlu0 %2742
    %v2744 = vadd.f32 %v2667, %v2668
    %2745 = vadd.xlane.f32.xlu0 %v2744
    %v2746 = vpop.xlane.xlu0 %2745
    %v2747 = vadd.f32 %v2669, %v2670
    %2748 = vadd.xlane.f32.xlu0 %v2747
    %v2749 = vpop.xlane.xlu0 %2748
    %v2750 = vadd.f32 %v2671, %v2672
    %2751 = vadd.xlane.f32.xlu0 %v2750
    %v2752 = vpop.xlane.xlu0 %2751
    %v2753 = vadd.f32 %v2673, %v2674
    %2754 = vadd.xlane.f32.xlu0 %v2753
    %v2755 = vpop.xlane.xlu0 %2754
    %v2756 = vadd.f32 %v2675, %v2676
    %2757 = vadd.xlane.f32.xlu0 %v2756
    %v2758 = vpop.xlane.xlu0 %2757
    %v2759 = vadd.f32 %v2677, %v2678
    %2760 = vadd.xlane.f32.xlu0 %v2759
    %v2761 = vpop.xlane.xlu0 %2760
    %v2762 = vadd.f32 %v2679, %v2680
    %2763 = vadd.xlane.f32.xlu0 %v2762
    %v2764 = vpop.xlane.xlu0 %2763
    %v2765 = vadd.f32 %v2681, %v2682
    %2766 = vadd.xlane.f32.xlu0 %v2765
    %v2767 = vpop.xlane.xlu0 %2766
    %v2768 = vadd.f32 %v2683, %v2684
    %2769 = vadd.xlane.f32.xlu0 %v2768
    %v2770 = vpop.xlane.xlu0 %2769
    %v2771 = vadd.f32 %v2685, %v2686
    %2772 = vadd.xlane.f32.xlu0 %v2771
    %v2773 = vpop.xlane.xlu0 %2772
    %v2774 = vadd.f32 %v2687, %v2688
    %2775 = vadd.xlane.f32.xlu0 %v2774
    %v2776 = vpop.xlane.xlu0 %2775
    %v2777 = vadd.f32 %v2689, %v2690
    %2778 = vadd.xlane.f32.xlu0 %v2777
    %v2779 = vpop.xlane.xlu0 %2778
    %v2780 = vadd.f32 %v2691, %v2692
    %2781 = vadd.xlane.f32.xlu0 %v2780
    %v2782 = vpop.xlane.xlu0 %2781
    %v2783 = vadd.f32 %v2693, %v2694
    %2784 = vadd.xlane.f32.xlu0 %v2783
    %v2785 = vpop.xlane.xlu0 %2784
    %v2786 = vadd.f32 %v2695, %v2696
    %2787 = vadd.xlane.f32.xlu0 %v2786
    %v2788 = vpop.xlane.xlu0 %2787
    %v2789 = vadd.f32 %v2697, %v2698
    %2790 = vadd.xlane.f32.xlu0 %v2789
    %v2791 = vpop.xlane.xlu0 %2790
    %v2792 = vadd.f32 %v2699, %v2700
    %2793 = vadd.xlane.f32.xlu0 %v2792
    %v2794 = vpop.xlane.xlu0 %2793
    %v2795 = vadd.f32 %v2701, %v2702
    %2796 = vadd.xlane.f32.xlu0 %v2795
    %v2797 = vpop.xlane.xlu0 %2796
    %v2798 = vadd.f32 %v2703, %v2704
    %2799 = vadd.xlane.f32.xlu0 %v2798
    %v2800 = vpop.xlane.xlu0 %2799
    %v2801 = vmul.f32 %v2707, 0.5
    %v2802 = vmul.f32 %v2710, 0.5
    %v2803 = vmul.f32 %v2713, 0.5
    %v2804 = vmul.f32 %v2716, 0.5
    %v2805 = vmul.f32 %v2719, 0.5
    %v2806 = vmul.f32 %v2722, 0.5
    %v2807 = vmul.f32 %v2725, 0.5
    %v2808 = vmul.f32 %v2728, 0.5
    %v2809 = vmul.f32 %v2731, 0.5
    %v2810 = vmul.f32 %v2734, 0.5
    %v2811 = vmul.f32 %v2737, 0.5
    %v2812 = vmul.f32 %v2740, 0.5
    %v2813 = vmul.f32 %v2743, 0.5
    %v2814 = vmul.f32 %v2746, 0.5
    %v2815 = vmul.f32 %v2749, 0.5
    %v2816 = vmul.f32 %v2752, 0.5
    %v2817 = vmul.f32 %v2755, 0.5
    %v2818 = vmul.f32 %v2758, 0.5
    %v2819 = vmul.f32 %v2761, 0.5
    %v2820 = vmul.f32 %v2764, 0.5
    %v2821 = vmul.f32 %v2767, 0.5
    %v2822 = vmul.f32 %v2770, 0.5
    %v2823 = vmul.f32 %v2773, 0.5
    %v2824 = vmul.f32 %v2776, 0.5
    %v2825 = vmul.f32 %v2779, 0.5
    %v2826 = vmul.f32 %v2782, 0.5
    %v2827 = vmul.f32 %v2785, 0.5
    %v2828 = vmul.f32 %v2788, 0.5
    %v2829 = vmul.f32 %v2791, 0.5
    %v2830 = vmul.f32 %v2794, 0.5
    %v2831 = vmul.f32 %v2797, 0.5
    %v2832 = vmul.f32 %v2800, 0.5
    %v2833 = vadd.f32 %v1360, 1.0
    %v2834 = vadd.f32 %v1362, 1.0
    %v2835 = vadd.f32 %v1365, 1.0
    %v2836 = vadd.f32 %v1367, 1.0
    %v2837 = vadd.f32 %v1370, 1.0
    %v2838 = vadd.f32 %v1372, 1.0
    %v2839 = vadd.f32 %v1375, 1.0
    %v2840 = vadd.f32 %v1377, 1.0
    %v2841 = vadd.f32 %v1380, 1.0
    %v2842 = vadd.f32 %v1382, 1.0
    %v2843 = vadd.f32 %v1385, 1.0
    %v2844 = vadd.f32 %v1387, 1.0
    %v2845 = vadd.f32 %v1390, 1.0
    %v2846 = vadd.f32 %v1392, 1.0
    %v2847 = vadd.f32 %v1395, 1.0
    %v2848 = vadd.f32 %v1397, 1.0
    %v2849 = vadd.f32 %v1400, 1.0
    %v2850 = vadd.f32 %v1402, 1.0
    %v2851 = vadd.f32 %v1405, 1.0
    %v2852 = vadd.f32 %v1407, 1.0
    %v2853 = vadd.f32 %v1410, 1.0
    %v2854 = vadd.f32 %v1412, 1.0
    %v2855 = vadd.f32 %v1415, 1.0
    %v2856 = vadd.f32 %v1417, 1.0
    %v2857 = vadd.f32 %v1420, 1.0
    %v2858 = vadd.f32 %v1422, 1.0
    %v2859 = vadd.f32 %v1425, 1.0
    %v2860 = vadd.f32 %v1427, 1.0
    %v2861 = vadd.f32 %v1430, 1.0
    %v2862 = vadd.f32 %v1432, 1.0
    %v2863 = vadd.f32 %v1435, 1.0
    %v2864 = vadd.f32 %v1437, 1.0
    %v2865 = vmul.f32 %v1182, %v1182
    %v2866 = vmul.f32 %v1184, %v1184
    %v2867 = vmul.f32 %v1187, %v1187
    %v2868 = vmul.f32 %v1189, %v1189
    %v2869 = vmul.f32 %v1192, %v1192
    %v2870 = vmul.f32 %v1194, %v1194
    %v2871 = vmul.f32 %v1197, %v1197
    %v2872 = vmul.f32 %v1199, %v1199
    %v2873 = vmul.f32 %v1202, %v1202
    %v2874 = vmul.f32 %v1204, %v1204
    %v2875 = vmul.f32 %v1207, %v1207
    %v2876 = vmul.f32 %v1209, %v1209
    %v2877 = vmul.f32 %v1212, %v1212
    %v2878 = vmul.f32 %v1214, %v1214
    %v2879 = vmul.f32 %v1217, %v1217
    %v2880 = vmul.f32 %v1219, %v1219
    %v2881 = vmul.f32 %v1222, %v1222
    %v2882 = vmul.f32 %v1224, %v1224
    %v2883 = vmul.f32 %v1227, %v1227
    %v2884 = vmul.f32 %v1229, %v1229
    %v2885 = vmul.f32 %v1232, %v1232
    %v2886 = vmul.f32 %v1234, %v1234
    %v2887 = vmul.f32 %v1237, %v1237
    %v2888 = vmul.f32 %v1239, %v1239
    %v2889 = vmul.f32 %v1242, %v1242
    %v2890 = vmul.f32 %v1244, %v1244
    %v2891 = vmul.f32 %v1247, %v1247
    %v2892 = vmul.f32 %v1249, %v1249
    %v2893 = vmul.f32 %v1252, %v1252
    %v2894 = vmul.f32 %v1254, %v1254
    %v2895 = vmul.f32 %v1257, %v1257
    %v2896 = vmul.f32 %v1259, %v1259
    %v2897 = vsub.f32 %v2833, %v2865
    %v2898 = vsub.f32 %v2834, %v2866
    %v2899 = vsub.f32 %v2835, %v2867
    %v2900 = vsub.f32 %v2836, %v2868
    %v2901 = vsub.f32 %v2837, %v2869
    %v2902 = vsub.f32 %v2838, %v2870
    %v2903 = vsub.f32 %v2839, %v2871
    %v2904 = vsub.f32 %v2840, %v2872
    %v2905 = vsub.f32 %v2841, %v2873
    %v2906 = vsub.f32 %v2842, %v2874
    %v2907 = vsub.f32 %v2843, %v2875
    %v2908 = vsub.f32 %v2844, %v2876
    %v2909 = vsub.f32 %v2845, %v2877
    %v2910 = vsub.f32 %v2846, %v2878
    %v2911 = vsub.f32 %v2847, %v2879
    %v2912 = vsub.f32 %v2848, %v2880
    %v2913 = vsub.f32 %v2849, %v2881
    %v2914 = vsub.f32 %v2850, %v2882
    %v2915 = vsub.f32 %v2851, %v2883
    %v2916 = vsub.f32 %v2852, %v2884
    %v2917 = vsub.f32 %v2853, %v2885
    %v2918 = vsub.f32 %v2854, %v2886
    %v2919 = vsub.f32 %v2855, %v2887
    %v2920 = vsub.f32 %v2856, %v2888
    %v2921 = vsub.f32 %v2857, %v2889
    %v2922 = vsub.f32 %v2858, %v2890
    %v2923 = vsub.f32 %v2859, %v2891
    %v2924 = vsub.f32 %v2860, %v2892
    %v2925 = vsub.f32 %v2861, %v2893
    %v2926 = vsub.f32 %v2862, %v2894
    %v2927 = vsub.f32 %v2863, %v2895
    %v2928 = vsub.f32 %v2864, %v2896
    %v2929 = vmul.f32 %v1472, %v1472
    %v2930 = vmul.f32 %v1474, %v1474
    %v2931 = vmul.f32 %v1476, %v1476
    %v2932 = vmul.f32 %v1478, %v1478
    %v2933 = vmul.f32 %v1480, %v1480
    %v2934 = vmul.f32 %v1482, %v1482
    %v2935 = vmul.f32 %v1484, %v1484
    %v2936 = vmul.f32 %v1486, %v1486
    %v2937 = vmul.f32 %v1488, %v1488
    %v2938 = vmul.f32 %v1490, %v1490
    %v2939 = vmul.f32 %v1492, %v1492
    %v2940 = vmul.f32 %v1494, %v1494
    %v2941 = vmul.f32 %v1496, %v1496
    %v2942 = vmul.f32 %v1498, %v1498
    %v2943 = vmul.f32 %v1500, %v1500
    %v2944 = vmul.f32 %v1502, %v1502
    %v2945 = vmul.f32 %v1504, %v1504
    %v2946 = vmul.f32 %v1506, %v1506
    %v2947 = vmul.f32 %v1508, %v1508
    %v2948 = vmul.f32 %v1510, %v1510
    %v2949 = vmul.f32 %v1512, %v1512
    %v2950 = vmul.f32 %v1514, %v1514
    %v2951 = vmul.f32 %v1516, %v1516
    %v2952 = vmul.f32 %v1518, %v1518
    %v2953 = vmul.f32 %v1520, %v1520
    %v2954 = vmul.f32 %v1522, %v1522
    %v2955 = vmul.f32 %v1524, %v1524
    %v2956 = vmul.f32 %v1526, %v1526
    %v2957 = vmul.f32 %v1528, %v1528
    %v2958 = vmul.f32 %v1530, %v1530
    %v2959 = vmul.f32 %v1532, %v1532
    %v2960 = vmul.f32 %v1534, %v1534
    %v2961 = vsub.f32 %v2897, %v2929
    %v2962 = vsub.f32 %v2898, %v2930
    %v2963 = vsub.f32 %v2899, %v2931
    %v2964 = vsub.f32 %v2900, %v2932
    %v2965 = vsub.f32 %v2901, %v2933
    %v2966 = vsub.f32 %v2902, %v2934
    %v2967 = vsub.f32 %v2903, %v2935
    %v2968 = vsub.f32 %v2904, %v2936
    %v2969 = vsub.f32 %v2905, %v2937
    %v2970 = vsub.f32 %v2906, %v2938
    %v2971 = vsub.f32 %v2907, %v2939
    %v2972 = vsub.f32 %v2908, %v2940
    %v2973 = vsub.f32 %v2909, %v2941
    %v2974 = vsub.f32 %v2910, %v2942
    %v2975 = vsub.f32 %v2911, %v2943
    %v2976 = vsub.f32 %v2912, %v2944
    %v2977 = vsub.f32 %v2913, %v2945
    %v2978 = vsub.f32 %v2914, %v2946
    %v2979 = vsub.f32 %v2915, %v2947
    %v2980 = vsub.f32 %v2916, %v2948
    %v2981 = vsub.f32 %v2917, %v2949
    %v2982 = vsub.f32 %v2918, %v2950
    %v2983 = vsub.f32 %v2919, %v2951
    %v2984 = vsub.f32 %v2920, %v2952
    %v2985 = vsub.f32 %v2921, %v2953
    %v2986 = vsub.f32 %v2922, %v2954
    %v2987 = vsub.f32 %v2923, %v2955
    %v2988 = vsub.f32 %v2924, %v2956
    %v2989 = vsub.f32 %v2925, %v2957
    %v2990 = vsub.f32 %v2926, %v2958
    %v2991 = vsub.f32 %v2927, %v2959
    %v2992 = vsub.f32 %v2928, %v2960
    %2993 = vadd.xlane.f32.xlu0 %v2961
    %v2994 = vpop.xlane.xlu0 %2993
    %2995 = vadd.xlane.f32.xlu0 %v2962
    %v2996 = vpop.xlane.xlu0 %2995
    %2997 = vadd.xlane.f32.xlu0 %v2963
    %v2998 = vpop.xlane.xlu0 %2997
    %2999 = vadd.xlane.f32.xlu0 %v2964
    %v3000 = vpop.xlane.xlu0 %2999
    %3001 = vadd.xlane.f32.xlu0 %v2965
    %v3002 = vpop.xlane.xlu0 %3001
    %3003 = vadd.xlane.f32.xlu0 %v2966
    %v3004 = vpop.xlane.xlu0 %3003
    %3005 = vadd.xlane.f32.xlu0 %v2967
    %v3006 = vpop.xlane.xlu0 %3005
    %3007 = vadd.xlane.f32.xlu0 %v2968
    %v3008 = vpop.xlane.xlu0 %3007
    %3009 = vadd.xlane.f32.xlu0 %v2969
    %v3010 = vpop.xlane.xlu0 %3009
    %3011 = vadd.xlane.f32.xlu0 %v2970
    %v3012 = vpop.xlane.xlu0 %3011
    %3013 = vadd.xlane.f32.xlu0 %v2971
    %v3014 = vpop.xlane.xlu0 %3013
    %3015 = vadd.xlane.f32.xlu0 %v2972
    %v3016 = vpop.xlane.xlu0 %3015
    %3017 = vadd.xlane.f32.xlu0 %v2973
    %v3018 = vpop.xlane.xlu0 %3017
    %3019 = vadd.xlane.f32.xlu0 %v2974
    %v3020 = vpop.xlane.xlu0 %3019
    %3021 = vadd.xlane.f32.xlu0 %v2975
    %v3022 = vpop.xlane.xlu0 %3021
    %3023 = vadd.xlane.f32.xlu0 %v2976
    %v3024 = vpop.xlane.xlu0 %3023
    %3025 = vadd.xlane.f32.xlu0 %v2977
    %v3026 = vpop.xlane.xlu0 %3025
    %3027 = vadd.xlane.f32.xlu0 %v2978
    %v3028 = vpop.xlane.xlu0 %3027
    %3029 = vadd.xlane.f32.xlu0 %v2979
    %v3030 = vpop.xlane.xlu0 %3029
    %3031 = vadd.xlane.f32.xlu0 %v2980
    %v3032 = vpop.xlane.xlu0 %3031
    %3033 = vadd.xlane.f32.xlu0 %v2981
    %v3034 = vpop.xlane.xlu0 %3033
    %3035 = vadd.xlane.f32.xlu0 %v2982
    %v3036 = vpop.xlane.xlu0 %3035
    %3037 = vadd.xlane.f32.xlu0 %v2983
    %v3038 = vpop.xlane.xlu0 %3037
    %3039 = vadd.xlane.f32.xlu0 %v2984
    %v3040 = vpop.xlane.xlu0 %3039
    %3041 = vadd.xlane.f32.xlu0 %v2985
    %v3042 = vpop.xlane.xlu0 %3041
    %3043 = vadd.xlane.f32.xlu0 %v2986
    %v3044 = vpop.xlane.xlu0 %3043
    %3045 = vadd.xlane.f32.xlu0 %v2987
    %v3046 = vpop.xlane.xlu0 %3045
    %3047 = vadd.xlane.f32.xlu0 %v2988
    %v3048 = vpop.xlane.xlu0 %3047
    %3049 = vadd.xlane.f32.xlu0 %v2989
    %v3050 = vpop.xlane.xlu0 %3049
    %3051 = vadd.xlane.f32.xlu0 %v2990
    %v3052 = vpop.xlane.xlu0 %3051
    %3053 = vadd.xlane.f32.xlu0 %v2991
    %v3054 = vpop.xlane.xlu0 %3053
    %3055 = vadd.xlane.f32.xlu0 %v2992
    %v3056 = vpop.xlane.xlu0 %3055
    %v3057 = vmul.f32 %v2994, -0.5
    %v3058 = vmul.f32 %v2996, -0.5
    %v3059 = vmul.f32 %v2998, -0.5
    %v3060 = vmul.f32 %v3000, -0.5
    %v3061 = vmul.f32 %v3002, -0.5
    %v3062 = vmul.f32 %v3004, -0.5
    %v3063 = vmul.f32 %v3006, -0.5
    %v3064 = vmul.f32 %v3008, -0.5
    %v3065 = vmul.f32 %v3010, -0.5
    %v3066 = vmul.f32 %v3012, -0.5
    %v3067 = vmul.f32 %v3014, -0.5
    %v3068 = vmul.f32 %v3016, -0.5
    %v3069 = vmul.f32 %v3018, -0.5
    %v3070 = vmul.f32 %v3020, -0.5
    %v3071 = vmul.f32 %v3022, -0.5
    %v3072 = vmul.f32 %v3024, -0.5
    %v3073 = vmul.f32 %v3026, -0.5
    %v3074 = vmul.f32 %v3028, -0.5
    %v3075 = vmul.f32 %v3030, -0.5
    %v3076 = vmul.f32 %v3032, -0.5
    %v3077 = vmul.f32 %v3034, -0.5
    %v3078 = vmul.f32 %v3036, -0.5
    %v3079 = vmul.f32 %v3038, -0.5
    %v3080 = vmul.f32 %v3040, -0.5
    %v3081 = vmul.f32 %v3042, -0.5
    %v3082 = vmul.f32 %v3044, -0.5
    %v3083 = vmul.f32 %v3046, -0.5
    %v3084 = vmul.f32 %v3048, -0.5
    %v3085 = vmul.f32 %v3050, -0.5
    %v3086 = vmul.f32 %v3052, -0.5
    %v3087 = vmul.f32 %v3054, -0.5
    %v3088 = vmul.f32 %v3056, -0.5
    %3089 = vst [vmem:[#allocation13] sm:$0xff] %v1182
    %3090 = vst [vmem:[#allocation13 + $0x8] sm:$0xff] %v1184
    %3091 = vst [vmem:[#allocation13 + $0x10] sm:$0xff] %v1187
    %3092 = vst [vmem:[#allocation13 + $0x18] sm:$0xff] %v1189
    %3093 = vst [vmem:[#allocation13 + $0x20] sm:$0xff] %v1192
    %3094 = vst [vmem:[#allocation13 + $0x28] sm:$0xff] %v1194
    %3095 = vst [vmem:[#allocation13 + $0x30] sm:$0xff] %v1197
    %3096 = vst [vmem:[#allocation13 + $0x38] sm:$0xff] %v1199
    %3097 = vst [vmem:[#allocation13 + $0x40] sm:$0xff] %v1202
    %3098 = vst [vmem:[#allocation13 + $0x48] sm:$0xff] %v1204
    %3099 = vst [vmem:[#allocation13 + $0x50] sm:$0xff] %v1207
    %3100 = vst [vmem:[#allocation13 + $0x58] sm:$0xff] %v1209
    %3101 = vst [vmem:[#allocation13 + $0x60] sm:$0xff] %v1212
    %3102 = vst [vmem:[#allocation13 + $0x68] sm:$0xff] %v1214
    %3103 = vst [vmem:[#allocation13 + $0x70] sm:$0xff] %v1217
    %3104 = vst [vmem:[#allocation13 + $0x78] sm:$0xff] %v1219
    %3105 = vst [vmem:[#allocation13 + $0x80] sm:$0xff] %v1222
    %3106 = vst [vmem:[#allocation13 + $0x88] sm:$0xff] %v1224
    %3107 = vst [vmem:[#allocation13 + $0x90] sm:$0xff] %v1227
    %3108 = vst [vmem:[#allocation13 + $0x98] sm:$0xff] %v1229
    %3109 = vst [vmem:[#allocation13 + $0xa0] sm:$0xff] %v1232
    %3110 = vst [vmem:[#allocation13 + $0xa8] sm:$0xff] %v1234
    %3111 = vst [vmem:[#allocation13 + $0xb0] sm:$0xff] %v1237
    %3112 = vst [vmem:[#allocation13 + $0xb8] sm:$0xff] %v1239
    %3113 = vst [vmem:[#allocation13 + $0xc0] sm:$0xff] %v1242
    %3114 = vst [vmem:[#allocation13 + $0xc8] sm:$0xff] %v1244
    %3115 = vst [vmem:[#allocation13 + $0xd0] sm:$0xff] %v1247
    %3116 = vst [vmem:[#allocation13 + $0xd8] sm:$0xff] %v1249
    %3117 = vst [vmem:[#allocation13 + $0xe0] sm:$0xff] %v1252
    %3118 = vst [vmem:[#allocation13 + $0xe8] sm:$0xff] %v1254
    %3119 = vst [vmem:[#allocation13 + $0xf0] sm:$0xff] %v1257
    %3120 = vst [vmem:[#allocation13 + $0xf8] sm:$0xff] %v1259
    %3121 = vst [vmem:[#allocation14] sm:$0xff] %v1360
    %3122 = vst [vmem:[#allocation14 + $0x8] sm:$0xff] %v1362
    %3123 = vst [vmem:[#allocation14 + $0x10] sm:$0xff] %v1365
    %3124 = vst [vmem:[#allocation14 + $0x18] sm:$0xff] %v1367
    %3125 = vst [vmem:[#allocation14 + $0x20] sm:$0xff] %v1370
    %3126 = vst [vmem:[#allocation14 + $0x28] sm:$0xff] %v1372
    %3127 = vst [vmem:[#allocation14 + $0x30] sm:$0xff] %v1375
    %3128 = vst [vmem:[#allocation14 + $0x38] sm:$0xff] %v1377
    %3129 = vst [vmem:[#allocation14 + $0x40] sm:$0xff] %v1380
    %3130 = vst [vmem:[#allocation14 + $0x48] sm:$0xff] %v1382
    %3131 = vst [vmem:[#allocation14 + $0x50] sm:$0xff] %v1385
    %3132 = vst [vmem:[#allocation14 + $0x58] sm:$0xff] %v1387
    %3133 = vst [vmem:[#allocation14 + $0x60] sm:$0xff] %v1390
    %3134 = vst [vmem:[#allocation14 + $0x68] sm:$0xff] %v1392
    %3135 = vst [vmem:[#allocation14 + $0x70] sm:$0xff] %v1395
    %3136 = vst [vmem:[#allocation14 + $0x78] sm:$0xff] %v1397
    %3137 = vst [vmem:[#allocation14 + $0x80] sm:$0xff] %v1400
    %3138 = vst [vmem:[#allocation14 + $0x88] sm:$0xff] %v1402
    %3139 = vst [vmem:[#allocation14 + $0x90] sm:$0xff] %v1405
    %3140 = vst [vmem:[#allocation14 + $0x98] sm:$0xff] %v1407
    %3141 = vst [vmem:[#allocation14 + $0xa0] sm:$0xff] %v1410
    %3142 = vst [vmem:[#allocation14 + $0xa8] sm:$0xff] %v1412
    %3143 = vst [vmem:[#allocation14 + $0xb0] sm:$0xff] %v1415
    %3144 = vst [vmem:[#allocation14 + $0xb8] sm:$0xff] %v1417
    %3145 = vst [vmem:[#allocation14 + $0xc0] sm:$0xff] %v1420
    %3146 = vst [vmem:[#allocation14 + $0xc8] sm:$0xff] %v1422
    %3147 = vst [vmem:[#allocation14 + $0xd0] sm:$0xff] %v1425
    %3148 = vst [vmem:[#allocation14 + $0xd8] sm:$0xff] %v1427
    %3149 = vst [vmem:[#allocation14 + $0xe0] sm:$0xff] %v1430
    %3150 = vst [vmem:[#allocation14 + $0xe8] sm:$0xff] %v1432
    %3151 = vst [vmem:[#allocation14 + $0xf0] sm:$0xff] %v1435
    %3152 = vst [vmem:[#allocation14 + $0xf8] sm:$0xff] %v1437
    %3153 = vst [vmem:[#allocation16] sm:$0xff] %v1599
    %3154 = vst [vmem:[#allocation16 + $0x8] sm:$0xff] %v1600
    %3155 = vst [vmem:[#allocation16 + $0x10] sm:$0xff] %v1601
    %3156 = vst [vmem:[#allocation16 + $0x18] sm:$0xff] %v1602
    %3157 = vst [vmem:[#allocation16 + $0x20] sm:$0xff] %v1603
    %3158 = vst [vmem:[#allocation16 + $0x28] sm:$0xff] %v1604
    %3159 = vst [vmem:[#allocation16 + $0x30] sm:$0xff] %v1605
    %3160 = vst [vmem:[#allocation16 + $0x38] sm:$0xff] %v1606
    %3161 = vst [vmem:[#allocation16 + $0x40] sm:$0xff] %v1607
    %3162 = vst [vmem:[#allocation16 + $0x48] sm:$0xff] %v1608
    %3163 = vst [vmem:[#allocation16 + $0x50] sm:$0xff] %v1609
    %3164 = vst [vmem:[#allocation16 + $0x58] sm:$0xff] %v1610
    %3165 = vst [vmem:[#allocation16 + $0x60] sm:$0xff] %v1611
    %3166 = vst [vmem:[#allocation16 + $0x68] sm:$0xff] %v1612
    %3167 = vst [vmem:[#allocation16 + $0x70] sm:$0xff] %v1613
    %3168 = vst [vmem:[#allocation16 + $0x78] sm:$0xff] %v1614
    %3169 = vst [vmem:[#allocation16 + $0x80] sm:$0xff] %v1615
    %3170 = vst [vmem:[#allocation16 + $0x88] sm:$0xff] %v1616
    %3171 = vst [vmem:[#allocation16 + $0x90] sm:$0xff] %v1617
    %3172 = vst [vmem:[#allocation16 + $0x98] sm:$0xff] %v1618
    %3173 = vst [vmem:[#allocation16 + $0xa0] sm:$0xff] %v1619
    %3174 = vst [vmem:[#allocation16 + $0xa8] sm:$0xff] %v1620
    %3175 = vst [vmem:[#allocation16 + $0xb0] sm:$0xff] %v1621
    %3176 = vst [vmem:[#allocation16 + $0xb8] sm:$0xff] %v1622
    %3177 = vst [vmem:[#allocation16 + $0xc0] sm:$0xff] %v1623
    %3178 = vst [vmem:[#allocation16 + $0xc8] sm:$0xff] %v1624
    %3179 = vst [vmem:[#allocation16 + $0xd0] sm:$0xff] %v1625
    %3180 = vst [vmem:[#allocation16 + $0xd8] sm:$0xff] %v1626
    %3181 = vst [vmem:[#allocation16 + $0xe0] sm:$0xff] %v1627
    %3182 = vst [vmem:[#allocation16 + $0xe8] sm:$0xff] %v1628
    %3183 = vst [vmem:[#allocation16 + $0xf0] sm:$0xff] %v1629
    %3184 = vst [vmem:[#allocation16 + $0xf8] sm:$0xff] %v1630
    %v3185 = vpack.c.bf16 %v2498, %v2320
    %v3186 = vpack.c.bf16 %v2500, %v2322
    %v3187 = vpack.c.bf16 %v2503, %v2325
    %v3188 = vpack.c.bf16 %v2505, %v2327
    %v3189 = vpack.c.bf16 %v2508, %v2330
    %v3190 = vpack.c.bf16 %v2510, %v2332
    %v3191 = vpack.c.bf16 %v2513, %v2335
    %v3192 = vpack.c.bf16 %v2515, %v2337
    %v3193 = vpack.c.bf16 %v2518, %v2340
    %v3194 = vpack.c.bf16 %v2520, %v2342
    %v3195 = vpack.c.bf16 %v2523, %v2345
    %v3196 = vpack.c.bf16 %v2525, %v2347
    %v3197 = vpack.c.bf16 %v2528, %v2350
    %v3198 = vpack.c.bf16 %v2530, %v2352
    %v3199 = vpack.c.bf16 %v2533, %v2355
    %v3200 = vpack.c.bf16 %v2535, %v2357
    %v3201 = vpack.c.bf16 %v2538, %v2360
    %v3202 = vpack.c.bf16 %v2540, %v2362
    %v3203 = vpack.c.bf16 %v2543, %v2365
    %v3204 = vpack.c.bf16 %v2545, %v2367
    %v3205 = vpack.c.bf16 %v2548, %v2370
    %v3206 = vpack.c.bf16 %v2550, %v2372
    %v3207 = vpack.c.bf16 %v2553, %v2375
    %v3208 = vpack.c.bf16 %v2555, %v2377
    %v3209 = vpack.c.bf16 %v2558, %v2380
    %v3210 = vpack.c.bf16 %v2560, %v2382
    %v3211 = vpack.c.bf16 %v2563, %v2385
    %v3212 = vpack.c.bf16 %v2565, %v2387
    %v3213 = vpack.c.bf16 %v2568, %v2390
    %v3214 = vpack.c.bf16 %v2570, %v2392
    %v3215 = vpack.c.bf16 %v2573, %v2395
    %v3216 = vpack.c.bf16 %v2575, %v2397
    %3217 = vst [vmem:[#allocation17] sm:$0xff] %v3185
    %3218 = vst [vmem:[#allocation17 + $0x8] sm:$0xff] %v3186
    %3219 = vst [vmem:[#allocation17 + $0x10] sm:$0xff] %v3187
    %3220 = vst [vmem:[#allocation17 + $0x18] sm:$0xff] %v3188
    %3221 = vst [vmem:[#allocation17 + $0x20] sm:$0xff] %v3189
    %3222 = vst [vmem:[#allocation17 + $0x28] sm:$0xff] %v3190
    %3223 = vst [vmem:[#allocation17 + $0x30] sm:$0xff] %v3191
    %3224 = vst [vmem:[#allocation17 + $0x38] sm:$0xff] %v3192
    %3225 = vst [vmem:[#allocation17 + $0x40] sm:$0xff] %v3193
    %3226 = vst [vmem:[#allocation17 + $0x48] sm:$0xff] %v3194
    %3227 = vst [vmem:[#allocation17 + $0x50] sm:$0xff] %v3195
    %3228 = vst [vmem:[#allocation17 + $0x58] sm:$0xff] %v3196
    %3229 = vst [vmem:[#allocation17 + $0x60] sm:$0xff] %v3197
    %3230 = vst [vmem:[#allocation17 + $0x68] sm:$0xff] %v3198
    %3231 = vst [vmem:[#allocation17 + $0x70] sm:$0xff] %v3199
    %3232 = vst [vmem:[#allocation17 + $0x78] sm:$0xff] %v3200
    %3233 = vst [vmem:[#allocation17 + $0x80] sm:$0xff] %v3201
    %3234 = vst [vmem:[#allocation17 + $0x88] sm:$0xff] %v3202
    %3235 = vst [vmem:[#allocation17 + $0x90] sm:$0xff] %v3203
    %3236 = vst [vmem:[#allocation17 + $0x98] sm:$0xff] %v3204
    %3237 = vst [vmem:[#allocation17 + $0xa0] sm:$0xff] %v3205
    %3238 = vst [vmem:[#allocation17 + $0xa8] sm:$0xff] %v3206
    %3239 = vst [vmem:[#allocation17 + $0xb0] sm:$0xff] %v3207
    %3240 = vst [vmem:[#allocation17 + $0xb8] sm:$0xff] %v3208
    %3241 = vst [vmem:[#allocation17 + $0xc0] sm:$0xff] %v3209
    %3242 = vst [vmem:[#allocation17 + $0xc8] sm:$0xff] %v3210
    %3243 = vst [vmem:[#allocation17 + $0xd0] sm:$0xff] %v3211
    %3244 = vst [vmem:[#allocation17 + $0xd8] sm:$0xff] %v3212
    %3245 = vst [vmem:[#allocation17 + $0xe0] sm:$0xff] %v3213
    %3246 = vst [vmem:[#allocation17 + $0xe8] sm:$0xff] %v3214
    %3247 = vst [vmem:[#allocation17 + $0xf0] sm:$0xff] %v3215
    %3248 = vst [vmem:[#allocation17 + $0xf8] sm:$0xff] %v3216
    %v3281 = vperm.slane %v2801, 0
    %v3282 = vperm.slane %v2801, 1
    %v3283 = vperm.slane %v2801, 2
    %v3284 = vperm.slane %v2801, 3
    %v3285 = vperm.slane %v2801, 4
    %v3286 = vperm.slane %v2801, 5
    %v3287 = vperm.slane %v2801, 6
    %v3288 = vperm.slane %v2801, 7
    %v3289 = vperm.slane %v2802, 0
    %v3290 = vperm.slane %v2802, 1
    %v3291 = vperm.slane %v2802, 2
    %v3292 = vperm.slane %v2802, 3
    %v3293 = vperm.slane %v2802, 4
    %v3294 = vperm.slane %v2802, 5
    %v3295 = vperm.slane %v2802, 6
    %v3296 = vperm.slane %v2802, 7
    %v3297 = vperm.slane %v2803, 0
    %v3298 = vperm.slane %v2803, 1
    %v3299 = vperm.slane %v2803, 2
    %v3300 = vperm.slane %v2803, 3
    %v3301 = vperm.slane %v2803, 4
    %v3302 = vperm.slane %v2803, 5
    %v3303 = vperm.slane %v2803, 6
    %v3304 = vperm.slane %v2803, 7
    %v3305 = vperm.slane %v2804, 0
    %v3306 = vperm.slane %v2804, 1
    %v3307 = vperm.slane %v2804, 2
    %v3308 = vperm.slane %v2804, 3
    %v3309 = vperm.slane %v2804, 4
    %v3310 = vperm.slane %v2804, 5
    %v3311 = vperm.slane %v2804, 6
    %v3312 = vperm.slane %v2804, 7
    %v3313 = vperm.slane %v2805, 0
    %v3314 = vperm.slane %v2805, 1
    %v3315 = vperm.slane %v2805, 2
    %v3316 = vperm.slane %v2805, 3
    %v3317 = vperm.slane %v2805, 4
    %v3318 = vperm.slane %v2805, 5
    %v3319 = vperm.slane %v2805, 6
    %v3320 = vperm.slane %v2805, 7
    %v3321 = vperm.slane %v2806, 0
    %v3322 = vperm.slane %v2806, 1
    %v3323 = vperm.slane %v2806, 2
    %v3324 = vperm.slane %v2806, 3
    %v3325 = vperm.slane %v2806, 4
    %v3326 = vperm.slane %v2806, 5
    %v3327 = vperm.slane %v2806, 6
    %v3328 = vperm.slane %v2806, 7
    %v3329 = vperm.slane %v2807, 0
    %v3330 = vperm.slane %v2807, 1
    %v3331 = vperm.slane %v2807, 2
    %v3332 = vperm.slane %v2807, 3
    %v3333 = vperm.slane %v2807, 4
    %v3334 = vperm.slane %v2807, 5
    %v3335 = vperm.slane %v2807, 6
    %v3336 = vperm.slane %v2807, 7
    %v3337 = vperm.slane %v2808, 0
    %v3338 = vperm.slane %v2808, 1
    %v3339 = vperm.slane %v2808, 2
    %v3340 = vperm.slane %v2808, 3
    %v3341 = vperm.slane %v2808, 4
    %v3342 = vperm.slane %v2808, 5
    %v3343 = vperm.slane %v2808, 6
    %v3344 = vperm.slane %v2808, 7
    %v3345 = vperm.slane %v2809, 0
    %v3346 = vperm.slane %v2809, 1
    %v3347 = vperm.slane %v2809, 2
    %v3348 = vperm.slane %v2809, 3
    %v3349 = vperm.slane %v2809, 4
    %v3350 = vperm.slane %v2809, 5
    %v3351 = vperm.slane %v2809, 6
    %v3352 = vperm.slane %v2809, 7
    %v3353 = vperm.slane %v2810, 0
    %v3354 = vperm.slane %v2810, 1
    %v3355 = vperm.slane %v2810, 2
    %v3356 = vperm.slane %v2810, 3
    %v3357 = vperm.slane %v2810, 4
    %v3358 = vperm.slane %v2810, 5
    %v3359 = vperm.slane %v2810, 6
    %v3360 = vperm.slane %v2810, 7
    %v3361 = vperm.slane %v2811, 0
    %v3362 = vperm.slane %v2811, 1
    %v3363 = vperm.slane %v2811, 2
    %v3364 = vperm.slane %v2811, 3
    %v3365 = vperm.slane %v2811, 4
    %v3366 = vperm.slane %v2811, 5
    %v3367 = vperm.slane %v2811, 6
    %v3368 = vperm.slane %v2811, 7
    %v3369 = vperm.slane %v2812, 0
    %v3370 = vperm.slane %v2812, 1
    %v3371 = vperm.slane %v2812, 2
    %v3372 = vperm.slane %v2812, 3
    %v3373 = vperm.slane %v2812, 4
    %v3374 = vperm.slane %v2812, 5
    %v3375 = vperm.slane %v2812, 6
    %v3376 = vperm.slane %v2812, 7
    %v3377 = vperm.slane %v2813, 0
    %v3378 = vperm.slane %v2813, 1
    %v3379 = vperm.slane %v2813, 2
    %v3380 = vperm.slane %v2813, 3
    %v3381 = vperm.slane %v2813, 4
    %v3382 = vperm.slane %v2813, 5
    %v3383 = vperm.slane %v2813, 6
    %v3384 = vperm.slane %v2813, 7
    %v3385 = vperm.slane %v2814, 0
    %v3386 = vperm.slane %v2814, 1
    %v3387 = vperm.slane %v2814, 2
    %v3388 = vperm.slane %v2814, 3
    %v3389 = vperm.slane %v2814, 4
    %v3390 = vperm.slane %v2814, 5
    %v3391 = vperm.slane %v2814, 6
    %v3392 = vperm.slane %v2814, 7
    %v3393 = vperm.slane %v2815, 0
    %v3394 = vperm.slane %v2815, 1
    %v3395 = vperm.slane %v2815, 2
    %v3396 = vperm.slane %v2815, 3
    %v3397 = vperm.slane %v2815, 4
    %v3398 = vperm.slane %v2815, 5
    %v3399 = vperm.slane %v2815, 6
    %v3400 = vperm.slane %v2815, 7
    %v3401 = vperm.slane %v2816, 0
    %v3402 = vperm.slane %v2816, 1
    %v3403 = vperm.slane %v2816, 2
    %v3404 = vperm.slane %v2816, 3
    %v3405 = vperm.slane %v2816, 4
    %v3406 = vperm.slane %v2816, 5
    %v3407 = vperm.slane %v2816, 6
    %v3408 = vperm.slane %v2816, 7
    %v3409 = vperm.slane %v2817, 0
    %v3410 = vperm.slane %v2817, 1
    %v3411 = vperm.slane %v2817, 2
    %v3412 = vperm.slane %v2817, 3
    %v3413 = vperm.slane %v2817, 4
    %v3414 = vperm.slane %v2817, 5
    %v3415 = vperm.slane %v2817, 6
    %v3416 = vperm.slane %v2817, 7
    %v3417 = vperm.slane %v2818, 0
    %v3418 = vperm.slane %v2818, 1
    %v3419 = vperm.slane %v2818, 2
    %v3420 = vperm.slane %v2818, 3
    %v3421 = vperm.slane %v2818, 4
    %v3422 = vperm.slane %v2818, 5
    %v3423 = vperm.slane %v2818, 6
    %v3424 = vperm.slane %v2818, 7
    %v3425 = vperm.slane %v2819, 0
    %v3426 = vperm.slane %v2819, 1
    %v3427 = vperm.slane %v2819, 2
    %v3428 = vperm.slane %v2819, 3
    %v3429 = vperm.slane %v2819, 4
    %v3430 = vperm.slane %v2819, 5
    %v3431 = vperm.slane %v2819, 6
    %v3432 = vperm.slane %v2819, 7
    %v3433 = vperm.slane %v2820, 0
    %v3434 = vperm.slane %v2820, 1
    %v3435 = vperm.slane %v2820, 2
    %v3436 = vperm.slane %v2820, 3
    %v3437 = vperm.slane %v2820, 4
    %v3438 = vperm.slane %v2820, 5
    %v3439 = vperm.slane %v2820, 6
    %v3440 = vperm.slane %v2820, 7
    %v3441 = vperm.slane %v2821, 0
    %v3442 = vperm.slane %v2821, 1
    %v3443 = vperm.slane %v2821, 2
    %v3444 = vperm.slane %v2821, 3
    %v3445 = vperm.slane %v2821, 4
    %v3446 = vperm.slane %v2821, 5
    %v3447 = vperm.slane %v2821, 6
    %v3448 = vperm.slane %v2821, 7
    %v3449 = vperm.slane %v2822, 0
    %v3450 = vperm.slane %v2822, 1
    %v3451 = vperm.slane %v2822, 2
    %v3452 = vperm.slane %v2822, 3
    %v3453 = vperm.slane %v2822, 4
    %v3454 = vperm.slane %v2822, 5
    %v3455 = vperm.slane %v2822, 6
    %v3456 = vperm.slane %v2822, 7
    %v3457 = vperm.slane %v2823, 0
    %v3458 = vperm.slane %v2823, 1
    %v3459 = vperm.slane %v2823, 2
    %v3460 = vperm.slane %v2823, 3
    %v3461 = vperm.slane %v2823, 4
    %v3462 = vperm.slane %v2823, 5
    %v3463 = vperm.slane %v2823, 6
    %v3464 = vperm.slane %v2823, 7
    %v3465 = vperm.slane %v2824, 0
    %v3466 = vperm.slane %v2824, 1
    %v3467 = vperm.slane %v2824, 2
    %v3468 = vperm.slane %v2824, 3
    %v3469 = vperm.slane %v2824, 4
    %v3470 = vperm.slane %v2824, 5
    %v3471 = vperm.slane %v2824, 6
    %v3472 = vperm.slane %v2824, 7
    %v3473 = vperm.slane %v2825, 0
    %v3474 = vperm.slane %v2825, 1
    %v3475 = vperm.slane %v2825, 2
    %v3476 = vperm.slane %v2825, 3
    %v3477 = vperm.slane %v2825, 4
    %v3478 = vperm.slane %v2825, 5
    %v3479 = vperm.slane %v2825, 6
    %v3480 = vperm.slane %v2825, 7
    %v3481 = vperm.slane %v2826, 0
    %v3482 = vperm.slane %v2826, 1
    %v3483 = vperm.slane %v2826, 2
    %v3484 = vperm.slane %v2826, 3
    %v3485 = vperm.slane %v2826, 4
    %v3486 = vperm.slane %v2826, 5
    %v3487 = vperm.slane %v2826, 6
    %v3488 = vperm.slane %v2826, 7
    %v3489 = vperm.slane %v2827, 0
    %v3490 = vperm.slane %v2827, 1
    %v3491 = vperm.slane %v2827, 2
    %v3492 = vperm.slane %v2827, 3
    %v3493 = vperm.slane %v2827, 4
    %v3494 = vperm.slane %v2827, 5
    %v3495 = vperm.slane %v2827, 6
    %v3496 = vperm.slane %v2827, 7
    %v3497 = vperm.slane %v2828, 0
    %v3498 = vperm.slane %v2828, 1
    %v3499 = vperm.slane %v2828, 2
    %v3500 = vperm.slane %v2828, 3
    %v3501 = vperm.slane %v2828, 4
    %v3502 = vperm.slane %v2828, 5
    %v3503 = vperm.slane %v2828, 6
    %v3504 = vperm.slane %v2828, 7
    %v3505 = vperm.slane %v2829, 0
    %v3506 = vperm.slane %v2829, 1
    %v3507 = vperm.slane %v2829, 2
    %v3508 = vperm.slane %v2829, 3
    %v3509 = vperm.slane %v2829, 4
    %v3510 = vperm.slane %v2829, 5
    %v3511 = vperm.slane %v2829, 6
    %v3512 = vperm.slane %v2829, 7
    %v3513 = vperm.slane %v2830, 0
    %v3514 = vperm.slane %v2830, 1
    %v3515 = vperm.slane %v2830, 2
    %v3516 = vperm.slane %v2830, 3
    %v3517 = vperm.slane %v2830, 4
    %v3518 = vperm.slane %v2830, 5
    %v3519 = vperm.slane %v2830, 6
    %v3520 = vperm.slane %v2830, 7
    %v3521 = vperm.slane %v2831, 0
    %v3522 = vperm.slane %v2831, 1
    %v3523 = vperm.slane %v2831, 2
    %v3524 = vperm.slane %v2831, 3
    %v3525 = vperm.slane %v2831, 4
    %v3526 = vperm.slane %v2831, 5
    %v3527 = vperm.slane %v2831, 6
    %v3528 = vperm.slane %v2831, 7
    %v3529 = vperm.slane %v2832, 0
    %v3530 = vperm.slane %v2832, 1
    %v3531 = vperm.slane %v2832, 2
    %v3532 = vperm.slane %v2832, 3
    %v3533 = vperm.slane %v2832, 4
    %v3534 = vperm.slane %v2832, 5
    %v3535 = vperm.slane %v2832, 6
    %v3536 = vperm.slane %v2832, 7
    %3537 = vst [vmem:[#allocation1] ss:$9 sm:$0xff] %v3281
    %s3538 = scalar_lea.vmem [#allocation1], 1
    %3539 = vst [vmem:[%s3538] ss:$9 sm:$0xff] %v3282
    %s3540 = scalar_lea.vmem [#allocation1], 2
    %3541 = vst [vmem:[%s3540] ss:$9 sm:$0xff] %v3283
    %s3542 = scalar_lea.vmem [#allocation1], 3
    %3543 = vst [vmem:[%s3542] ss:$9 sm:$0xff] %v3284
    %s3544 = scalar_lea.vmem [#allocation1], 4
    %3545 = vst [vmem:[%s3544] ss:$9 sm:$0xff] %v3285
    %s3546 = scalar_lea.vmem [#allocation1], 5
    %3547 = vst [vmem:[%s3546] ss:$9 sm:$0xff] %v3286
    %s3548 = scalar_lea.vmem [#allocation1], 6
    %3549 = vst [vmem:[%s3548] ss:$9 sm:$0xff] %v3287
    %s3550 = scalar_lea.vmem [#allocation1], 7
    %3551 = vst [vmem:[%s3550] ss:$9 sm:$0xff] %v3288
    %v3552 = vld [vmem:[#allocation1] sm:$0xff]
    %3553 = vst [vmem:[#allocation1] ss:$9 sm:$0xff] %v3289
    %3554 = vst [vmem:[%s3538] ss:$9 sm:$0xff] %v3290
    %3555 = vst [vmem:[%s3540] ss:$9 sm:$0xff] %v3291
    %3556 = vst [vmem:[%s3542] ss:$9 sm:$0xff] %v3292
    %3557 = vst [vmem:[%s3544] ss:$9 sm:$0xff] %v3293
    %3558 = vst [vmem:[%s3546] ss:$9 sm:$0xff] %v3294
    %3559 = vst [vmem:[%s3548] ss:$9 sm:$0xff] %v3295
    %3560 = vst [vmem:[%s3550] ss:$9 sm:$0xff] %v3296
    %v3561 = vld [vmem:[#allocation1] sm:$0xff]
    %3562 = vst [vmem:[#allocation1] ss:$9 sm:$0xff] %v3297
    %3563 = vst [vmem:[%s3538] ss:$9 sm:$0xff] %v3298
    %3564 = vst [vmem:[%s3540] ss:$9 sm:$0xff] %v3299
    %3565 = vst [vmem:[%s3542] ss:$9 sm:$0xff] %v3300
    %3566 = vst [vmem:[%s3544] ss:$9 sm:$0xff] %v3301
    %3567 = vst [vmem:[%s3546] ss:$9 sm:$0xff] %v3302
    %3568 = vst [vmem:[%s3548] ss:$9 sm:$0xff] %v3303
    %3569 = vst [vmem:[%s3550] ss:$9 sm:$0xff] %v3304
    %v3570 = vld [vmem:[#allocation1] sm:$0xff]
    %3571 = vst [vmem:[#allocation1] ss:$9 sm:$0xff] %v3305
    %3572 = vst [vmem:[%s3538] ss:$9 sm:$0xff] %v3306
    %3573 = vst [vmem:[%s3540] ss:$9 sm:$0xff] %v3307
    %3574 = vst [vmem:[%s3542] ss:$9 sm:$0xff] %v3308
    %3575 = vst [vmem:[%s3544] ss:$9 sm:$0xff] %v3309
    %3576 = vst [vmem:[%s3546] ss:$9 sm:$0xff] %v3310
    %3577 = vst [vmem:[%s3548] ss:$9 sm:$0xff] %v3311
    %3578 = vst [vmem:[%s3550] ss:$9 sm:$0xff] %v3312
    %v3579 = vld [vmem:[#allocation1] sm:$0xff]
    %3580 = vst [vmem:[#allocation1] ss:$9 sm:$0xff] %v3313
    %3581 = vst [vmem:[%s3538] ss:$9 sm:$0xff] %v3314
    %3582 = vst [vmem:[%s3540] ss:$9 sm:$0xff] %v3315
    %3583 = vst [vmem:[%s3542] ss:$9 sm:$0xff] %v3316
    %3584 = vst [vmem:[%s3544] ss:$9 sm:$0xff] %v3317
    %3585 = vst [vmem:[%s3546] ss:$9 sm:$0xff] %v3318
    %3586 = vst [vmem:[%s3548] ss:$9 sm:$0xff] %v3319
    %3587 = vst [vmem:[%s3550] ss:$9 sm:$0xff] %v3320
    %v3588 = vld [vmem:[#allocation1] sm:$0xff]
    %3589 = vst [vmem:[#allocation1] ss:$9 sm:$0xff] %v3321
    %3590 = vst [vmem:[%s3538] ss:$9 sm:$0xff] %v3322
    %3591 = vst [vmem:[%s3540] ss:$9 sm:$0xff] %v3323
    %3592 = vst [vmem:[%s3542] ss:$9 sm:$0xff] %v3324
    %3593 = vst [vmem:[%s3544] ss:$9 sm:$0xff] %v3325
    %3594 = vst [vmem:[%s3546] ss:$9 sm:$0xff] %v3326
    %3595 = vst [vmem:[%s3548] ss:$9 sm:$0xff] %v3327
    %3596 = vst [vmem:[%s3550] ss:$9 sm:$0xff] %v3328
    %v3597 = vld [vmem:[#allocation1] sm:$0xff]
    %3598 = vst [vmem:[#allocation1] ss:$9 sm:$0xff] %v3329
    %3599 = vst [vmem:[%s3538] ss:$9 sm:$0xff] %v3330
    %3600 = vst [vmem:[%s3540] ss:$9 sm:$0xff] %v3331
    %3601 = vst [vmem:[%s3542] ss:$9 sm:$0xff] %v3332
    %3602 = vst [vmem:[%s3544] ss:$9 sm:$0xff] %v3333
    %3603 = vst [vmem:[%s3546] ss:$9 sm:$0xff] %v3334
    %3604 = vst [vmem:[%s3548] ss:$9 sm:$0xff] %v3335
    %3605 = vst [vmem:[%s3550] ss:$9 sm:$0xff] %v3336
    %v3606 = vld [vmem:[#allocation1] sm:$0xff]
    %3607 = vst [vmem:[#allocation1] ss:$9 sm:$0xff] %v3337
    %3608 = vst [vmem:[%s3538] ss:$9 sm:$0xff] %v3338
    %3609 = vst [vmem:[%s3540] ss:$9 sm:$0xff] %v3339
    %3610 = vst [vmem:[%s3542] ss:$9 sm:$0xff] %v3340
    %3611 = vst [vmem:[%s3544] ss:$9 sm:$0xff] %v3341
    %3612 = vst [vmem:[%s3546] ss:$9 sm:$0xff] %v3342
    %3613 = vst [vmem:[%s3548] ss:$9 sm:$0xff] %v3343
    %3614 = vst [vmem:[%s3550] ss:$9 sm:$0xff] %v3344
    %v3615 = vld [vmem:[#allocation1] sm:$0xff]
    %3616 = vst [vmem:[#allocation1] ss:$9 sm:$0xff] %v3345
    %3617 = vst [vmem:[%s3538] ss:$9 sm:$0xff] %v3346
    %3618 = vst [vmem:[%s3540] ss:$9 sm:$0xff] %v3347
    %3619 = vst [vmem:[%s3542] ss:$9 sm:$0xff] %v3348
    %3620 = vst [vmem:[%s3544] ss:$9 sm:$0xff] %v3349
    %3621 = vst [vmem:[%s3546] ss:$9 sm:$0xff] %v3350
    %3622 = vst [vmem:[%s3548] ss:$9 sm:$0xff] %v3351
    %3623 = vst [vmem:[%s3550] ss:$9 sm:$0xff] %v3352
    %v3624 = vld [vmem:[#allocation1] sm:$0xff]
    %3625 = vst [vmem:[#allocation1] ss:$9 sm:$0xff] %v3353
    %3626 = vst [vmem:[%s3538] ss:$9 sm:$0xff] %v3354
    %3627 = vst [vmem:[%s3540] ss:$9 sm:$0xff] %v3355
    %3628 = vst [vmem:[%s3542] ss:$9 sm:$0xff] %v3356
    %3629 = vst [vmem:[%s3544] ss:$9 sm:$0xff] %v3357
    %3630 = vst [vmem:[%s3546] ss:$9 sm:$0xff] %v3358
    %3631 = vst [vmem:[%s3548] ss:$9 sm:$0xff] %v3359
    %3632 = vst [vmem:[%s3550] ss:$9 sm:$0xff] %v3360
    %v3633 = vld [vmem:[#allocation1] sm:$0xff]
    %3634 = vst [vmem:[#allocation1] ss:$9 sm:$0xff] %v3361
    %3635 = vst [vmem:[%s3538] ss:$9 sm:$0xff] %v3362
    %3636 = vst [vmem:[%s3540] ss:$9 sm:$0xff] %v3363
    %3637 = vst [vmem:[%s3542] ss:$9 sm:$0xff] %v3364
    %3638 = vst [vmem:[%s3544] ss:$9 sm:$0xff] %v3365
    %3639 = vst [vmem:[%s3546] ss:$9 sm:$0xff] %v3366
    %3640 = vst [vmem:[%s3548] ss:$9 sm:$0xff] %v3367
    %3641 = vst [vmem:[%s3550] ss:$9 sm:$0xff] %v3368
    %v3642 = vld [vmem:[#allocation1] sm:$0xff]
    %3643 = vst [vmem:[#allocation1] ss:$9 sm:$0xff] %v3369
    %3644 = vst [vmem:[%s3538] ss:$9 sm:$0xff] %v3370
    %3645 = vst [vmem:[%s3540] ss:$9 sm:$0xff] %v3371
    %3646 = vst [vmem:[%s3542] ss:$9 sm:$0xff] %v3372
    %3647 = vst [vmem:[%s3544] ss:$9 sm:$0xff] %v3373
    %3648 = vst [vmem:[%s3546] ss:$9 sm:$0xff] %v3374
    %3649 = vst [vmem:[%s3548] ss:$9 sm:$0xff] %v3375
    %3650 = vst [vmem:[%s3550] ss:$9 sm:$0xff] %v3376
    %v3651 = vld [vmem:[#allocation1] sm:$0xff]
    %3652 = vst [vmem:[#allocation1] ss:$9 sm:$0xff] %v3377
    %3653 = vst [vmem:[%s3538] ss:$9 sm:$0xff] %v3378
    %3654 = vst [vmem:[%s3540] ss:$9 sm:$0xff] %v3379
    %3655 = vst [vmem:[%s3542] ss:$9 sm:$0xff] %v3380
    %3656 = vst [vmem:[%s3544] ss:$9 sm:$0xff] %v3381
    %3657 = vst [vmem:[%s3546] ss:$9 sm:$0xff] %v3382
    %3658 = vst [vmem:[%s3548] ss:$9 sm:$0xff] %v3383
    %3659 = vst [vmem:[%s3550] ss:$9 sm:$0xff] %v3384
    %v3660 = vld [vmem:[#allocation1] sm:$0xff]
    %3661 = vst [vmem:[#allocation1] ss:$9 sm:$0xff] %v3385
    %3662 = vst [vmem:[%s3538] ss:$9 sm:$0xff] %v3386
    %3663 = vst [vmem:[%s3540] ss:$9 sm:$0xff] %v3387
    %3664 = vst [vmem:[%s3542] ss:$9 sm:$0xff] %v3388
    %3665 = vst [vmem:[%s3544] ss:$9 sm:$0xff] %v3389
    %3666 = vst [vmem:[%s3546] ss:$9 sm:$0xff] %v3390
    %3667 = vst [vmem:[%s3548] ss:$9 sm:$0xff] %v3391
    %3668 = vst [vmem:[%s3550] ss:$9 sm:$0xff] %v3392
    %v3669 = vld [vmem:[#allocation1] sm:$0xff]
    %3670 = vst [vmem:[#allocation1] ss:$9 sm:$0xff] %v3393
    %3671 = vst [vmem:[%s3538] ss:$9 sm:$0xff] %v3394
    %3672 = vst [vmem:[%s3540] ss:$9 sm:$0xff] %v3395
    %3673 = vst [vmem:[%s3542] ss:$9 sm:$0xff] %v3396
    %3674 = vst [vmem:[%s3544] ss:$9 sm:$0xff] %v3397
    %3675 = vst [vmem:[%s3546] ss:$9 sm:$0xff] %v3398
    %3676 = vst [vmem:[%s3548] ss:$9 sm:$0xff] %v3399
    %3677 = vst [vmem:[%s3550] ss:$9 sm:$0xff] %v3400
    %v3678 = vld [vmem:[#allocation1] sm:$0xff]
    %3679 = vst [vmem:[#allocation1] ss:$9 sm:$0xff] %v3401
    %3680 = vst [vmem:[%s3538] ss:$9 sm:$0xff] %v3402
    %3681 = vst [vmem:[%s3540] ss:$9 sm:$0xff] %v3403
    %3682 = vst [vmem:[%s3542] ss:$9 sm:$0xff] %v3404
    %3683 = vst [vmem:[%s3544] ss:$9 sm:$0xff] %v3405
    %3684 = vst [vmem:[%s3546] ss:$9 sm:$0xff] %v3406
    %3685 = vst [vmem:[%s3548] ss:$9 sm:$0xff] %v3407
    %3686 = vst [vmem:[%s3550] ss:$9 sm:$0xff] %v3408
    %v3687 = vld [vmem:[#allocation1] sm:$0xff]
    %3688 = vst [vmem:[#allocation1] ss:$9 sm:$0xff] %v3409
    %3689 = vst [vmem:[%s3538] ss:$9 sm:$0xff] %v3410
    %3690 = vst [vmem:[%s3540] ss:$9 sm:$0xff] %v3411
    %3691 = vst [vmem:[%s3542] ss:$9 sm:$0xff] %v3412
    %3692 = vst [vmem:[%s3544] ss:$9 sm:$0xff] %v3413
    %3693 = vst [vmem:[%s3546] ss:$9 sm:$0xff] %v3414
    %3694 = vst [vmem:[%s3548] ss:$9 sm:$0xff] %v3415
    %3695 = vst [vmem:[%s3550] ss:$9 sm:$0xff] %v3416
    %v3696 = vld [vmem:[#allocation1] sm:$0xff]
    %3697 = vst [vmem:[#allocation1] ss:$9 sm:$0xff] %v3417
    %3698 = vst [vmem:[%s3538] ss:$9 sm:$0xff] %v3418
    %3699 = vst [vmem:[%s3540] ss:$9 sm:$0xff] %v3419
    %3700 = vst [vmem:[%s3542] ss:$9 sm:$0xff] %v3420
    %3701 = vst [vmem:[%s3544] ss:$9 sm:$0xff] %v3421
    %3702 = vst [vmem:[%s3546] ss:$9 sm:$0xff] %v3422
    %3703 = vst [vmem:[%s3548] ss:$9 sm:$0xff] %v3423
    %3704 = vst [vmem:[%s3550] ss:$9 sm:$0xff] %v3424
    %v3705 = vld [vmem:[#allocation1] sm:$0xff]
    %3706 = vst [vmem:[#allocation1] ss:$9 sm:$0xff] %v3425
    %3707 = vst [vmem:[%s3538] ss:$9 sm:$0xff] %v3426
    %3708 = vst [vmem:[%s3540] ss:$9 sm:$0xff] %v3427
    %3709 = vst [vmem:[%s3542] ss:$9 sm:$0xff] %v3428
    %3710 = vst [vmem:[%s3544] ss:$9 sm:$0xff] %v3429
    %3711 = vst [vmem:[%s3546] ss:$9 sm:$0xff] %v3430
    %3712 = vst [vmem:[%s3548] ss:$9 sm:$0xff] %v3431
    %3713 = vst [vmem:[%s3550] ss:$9 sm:$0xff] %v3432
    %v3714 = vld [vmem:[#allocation1] sm:$0xff]
    %3715 = vst [vmem:[#allocation1] ss:$9 sm:$0xff] %v3433
    %3716 = vst [vmem:[%s3538] ss:$9 sm:$0xff] %v3434
    %3717 = vst [vmem:[%s3540] ss:$9 sm:$0xff] %v3435
    %3718 = vst [vmem:[%s3542] ss:$9 sm:$0xff] %v3436
    %3719 = vst [vmem:[%s3544] ss:$9 sm:$0xff] %v3437
    %3720 = vst [vmem:[%s3546] ss:$9 sm:$0xff] %v3438
    %3721 = vst [vmem:[%s3548] ss:$9 sm:$0xff] %v3439
    %3722 = vst [vmem:[%s3550] ss:$9 sm:$0xff] %v3440
    %v3723 = vld [vmem:[#allocation1] sm:$0xff]
    %3724 = vst [vmem:[#allocation1] ss:$9 sm:$0xff] %v3441
    %3725 = vst [vmem:[%s3538] ss:$9 sm:$0xff] %v3442
    %3726 = vst [vmem:[%s3540] ss:$9 sm:$0xff] %v3443
    %3727 = vst [vmem:[%s3542] ss:$9 sm:$0xff] %v3444
    %3728 = vst [vmem:[%s3544] ss:$9 sm:$0xff] %v3445
    %3729 = vst [vmem:[%s3546] ss:$9 sm:$0xff] %v3446
    %3730 = vst [vmem:[%s3548] ss:$9 sm:$0xff] %v3447
    %3731 = vst [vmem:[%s3550] ss:$9 sm:$0xff] %v3448
    %v3732 = vld [vmem:[#allocation1] sm:$0xff]
    %3733 = vst [vmem:[#allocation1] ss:$9 sm:$0xff] %v3449
    %3734 = vst [vmem:[%s3538] ss:$9 sm:$0xff] %v3450
    %3735 = vst [vmem:[%s3540] ss:$9 sm:$0xff] %v3451
    %3736 = vst [vmem:[%s3542] ss:$9 sm:$0xff] %v3452
    %3737 = vst [vmem:[%s3544] ss:$9 sm:$0xff] %v3453
    %3738 = vst [vmem:[%s3546] ss:$9 sm:$0xff] %v3454
    %3739 = vst [vmem:[%s3548] ss:$9 sm:$0xff] %v3455
    %3740 = vst [vmem:[%s3550] ss:$9 sm:$0xff] %v3456
    %v3741 = vld [vmem:[#allocation1] sm:$0xff]
    %3742 = vst [vmem:[#allocation1] ss:$9 sm:$0xff] %v3457
    %3743 = vst [vmem:[%s3538] ss:$9 sm:$0xff] %v3458
    %3744 = vst [vmem:[%s3540] ss:$9 sm:$0xff] %v3459
    %3745 = vst [vmem:[%s3542] ss:$9 sm:$0xff] %v3460
    %3746 = vst [vmem:[%s3544] ss:$9 sm:$0xff] %v3461
    %3747 = vst [vmem:[%s3546] ss:$9 sm:$0xff] %v3462
    %3748 = vst [vmem:[%s3548] ss:$9 sm:$0xff] %v3463
    %3749 = vst [vmem:[%s3550] ss:$9 sm:$0xff] %v3464
    %v3750 = vld [vmem:[#allocation1] sm:$0xff]
    %3751 = vst [vmem:[#allocation1] ss:$9 sm:$0xff] %v3465
    %3752 = vst [vmem:[%s3538] ss:$9 sm:$0xff] %v3466
    %3753 = vst [vmem:[%s3540] ss:$9 sm:$0xff] %v3467
    %3754 = vst [vmem:[%s3542] ss:$9 sm:$0xff] %v3468
    %3755 = vst [vmem:[%s3544] ss:$9 sm:$0xff] %v3469
    %3756 = vst [vmem:[%s3546] ss:$9 sm:$0xff] %v3470
    %3757 = vst [vmem:[%s3548] ss:$9 sm:$0xff] %v3471
    %3758 = vst [vmem:[%s3550] ss:$9 sm:$0xff] %v3472
    %v3759 = vld [vmem:[#allocation1] sm:$0xff]
    %3760 = vst [vmem:[#allocation1] ss:$9 sm:$0xff] %v3473
    %3761 = vst [vmem:[%s3538] ss:$9 sm:$0xff] %v3474
    %3762 = vst [vmem:[%s3540] ss:$9 sm:$0xff] %v3475
    %3763 = vst [vmem:[%s3542] ss:$9 sm:$0xff] %v3476
    %3764 = vst [vmem:[%s3544] ss:$9 sm:$0xff] %v3477
    %3765 = vst [vmem:[%s3546] ss:$9 sm:$0xff] %v3478
    %3766 = vst [vmem:[%s3548] ss:$9 sm:$0xff] %v3479
    %3767 = vst [vmem:[%s3550] ss:$9 sm:$0xff] %v3480
    %v3768 = vld [vmem:[#allocation1] sm:$0xff]
    %3769 = vst [vmem:[#allocation1] ss:$9 sm:$0xff] %v3481
    %3770 = vst [vmem:[%s3538] ss:$9 sm:$0xff] %v3482
    %3771 = vst [vmem:[%s3540] ss:$9 sm:$0xff] %v3483
    %3772 = vst [vmem:[%s3542] ss:$9 sm:$0xff] %v3484
    %3773 = vst [vmem:[%s3544] ss:$9 sm:$0xff] %v3485
    %3774 = vst [vmem:[%s3546] ss:$9 sm:$0xff] %v3486
    %3775 = vst [vmem:[%s3548] ss:$9 sm:$0xff] %v3487
    %3776 = vst [vmem:[%s3550] ss:$9 sm:$0xff] %v3488
    %v3777 = vld [vmem:[#allocation1] sm:$0xff]
    %3778 = vst [vmem:[#allocation1] ss:$9 sm:$0xff] %v3489
    %3779 = vst [vmem:[%s3538] ss:$9 sm:$0xff] %v3490
    %3780 = vst [vmem:[%s3540] ss:$9 sm:$0xff] %v3491
    %3781 = vst [vmem:[%s3542] ss:$9 sm:$0xff] %v3492
    %3782 = vst [vmem:[%s3544] ss:$9 sm:$0xff] %v3493
    %3783 = vst [vmem:[%s3546] ss:$9 sm:$0xff] %v3494
    %3784 = vst [vmem:[%s3548] ss:$9 sm:$0xff] %v3495
    %3785 = vst [vmem:[%s3550] ss:$9 sm:$0xff] %v3496
    %v3786 = vld [vmem:[#allocation1] sm:$0xff]
    %3787 = vst [vmem:[#allocation1] ss:$9 sm:$0xff] %v3497
    %3788 = vst [vmem:[%s3538] ss:$9 sm:$0xff] %v3498
    %3789 = vst [vmem:[%s3540] ss:$9 sm:$0xff] %v3499
    %3790 = vst [vmem:[%s3542] ss:$9 sm:$0xff] %v3500
    %3791 = vst [vmem:[%s3544] ss:$9 sm:$0xff] %v3501
    %3792 = vst [vmem:[%s3546] ss:$9 sm:$0xff] %v3502
    %3793 = vst [vmem:[%s3548] ss:$9 sm:$0xff] %v3503
    %3794 = vst [vmem:[%s3550] ss:$9 sm:$0xff] %v3504
    %v3795 = vld [vmem:[#allocation1] sm:$0xff]
    %3796 = vst [vmem:[#allocation1] ss:$9 sm:$0xff] %v3505
    %3797 = vst [vmem:[%s3538] ss:$9 sm:$0xff] %v3506
    %3798 = vst [vmem:[%s3540] ss:$9 sm:$0xff] %v3507
    %3799 = vst [vmem:[%s3542] ss:$9 sm:$0xff] %v3508
    %3800 = vst [vmem:[%s3544] ss:$9 sm:$0xff] %v3509
    %3801 = vst [vmem:[%s3546] ss:$9 sm:$0xff] %v3510
    %3802 = vst [vmem:[%s3548] ss:$9 sm:$0xff] %v3511
    %3803 = vst [vmem:[%s3550] ss:$9 sm:$0xff] %v3512
    %v3804 = vld [vmem:[#allocation1] sm:$0xff]
    %3805 = vst [vmem:[#allocation1] ss:$9 sm:$0xff] %v3513
    %3806 = vst [vmem:[%s3538] ss:$9 sm:$0xff] %v3514
    %3807 = vst [vmem:[%s3540] ss:$9 sm:$0xff] %v3515
    %3808 = vst [vmem:[%s3542] ss:$9 sm:$0xff] %v3516
    %3809 = vst [vmem:[%s3544] ss:$9 sm:$0xff] %v3517
    %3810 = vst [vmem:[%s3546] ss:$9 sm:$0xff] %v3518
    %3811 = vst [vmem:[%s3548] ss:$9 sm:$0xff] %v3519
    %3812 = vst [vmem:[%s3550] ss:$9 sm:$0xff] %v3520
    %v3813 = vld [vmem:[#allocation1] sm:$0xff]
    %3814 = vst [vmem:[#allocation1] ss:$9 sm:$0xff] %v3521
    %3815 = vst [vmem:[%s3538] ss:$9 sm:$0xff] %v3522
    %3816 = vst [vmem:[%s3540] ss:$9 sm:$0xff] %v3523
    %3817 = vst [vmem:[%s3542] ss:$9 sm:$0xff] %v3524
    %3818 = vst [vmem:[%s3544] ss:$9 sm:$0xff] %v3525
    %3819 = vst [vmem:[%s3546] ss:$9 sm:$0xff] %v3526
    %3820 = vst [vmem:[%s3548] ss:$9 sm:$0xff] %v3527
    %3821 = vst [vmem:[%s3550] ss:$9 sm:$0xff] %v3528
    %v3822 = vld [vmem:[#allocation1] sm:$0xff]
    %3823 = vst [vmem:[#allocation1] ss:$9 sm:$0xff] %v3529
    %3824 = vst [vmem:[%s3538] ss:$9 sm:$0xff] %v3530
    %3825 = vst [vmem:[%s3540] ss:$9 sm:$0xff] %v3531
    %3826 = vst [vmem:[%s3542] ss:$9 sm:$0xff] %v3532
    %3827 = vst [vmem:[%s3544] ss:$9 sm:$0xff] %v3533
    %3828 = vst [vmem:[%s3546] ss:$9 sm:$0xff] %v3534
    %3829 = vst [vmem:[%s3548] ss:$9 sm:$0xff] %v3535
    %3830 = vst [vmem:[%s3550] ss:$9 sm:$0xff] %v3536
    %v3831 = vld [vmem:[#allocation1] sm:$0xff]
    %3832 = vset.pattern.permute.xlu0 0
    %3833 = vperm.xlu0 %3832, %v3552
    %v3834 = vpop.permute.xlu0 %3833
    %3835 = vset.pattern.permute.xlu0 0
    %3836 = vperm.xlu0 %3835, %v3561
    %v3837 = vpop.permute.xlu0 %3836
    %3838 = vset.pattern.permute.xlu0 0
    %3839 = vperm.xlu0 %3838, %v3570
    %v3840 = vpop.permute.xlu0 %3839
    %3841 = vset.pattern.permute.xlu0 0
    %3842 = vperm.xlu0 %3841, %v3579
    %v3843 = vpop.permute.xlu0 %3842
    %3844 = vset.pattern.permute.xlu0 0
    %3845 = vperm.xlu0 %3844, %v3588
    %v3846 = vpop.permute.xlu0 %3845
    %3847 = vset.pattern.permute.xlu0 0
    %3848 = vperm.xlu0 %3847, %v3597
    %v3849 = vpop.permute.xlu0 %3848
    %3850 = vset.pattern.permute.xlu0 0
    %3851 = vperm.xlu0 %3850, %v3606
    %v3852 = vpop.permute.xlu0 %3851
    %3853 = vset.pattern.permute.xlu0 0
    %3854 = vperm.xlu0 %3853, %v3615
    %v3855 = vpop.permute.xlu0 %3854
    %3856 = vset.pattern.permute.xlu0 0
    %3857 = vperm.xlu0 %3856, %v3624
    %v3858 = vpop.permute.xlu0 %3857
    %3859 = vset.pattern.permute.xlu0 0
    %3860 = vperm.xlu0 %3859, %v3633
    %v3861 = vpop.permute.xlu0 %3860
    %3862 = vset.pattern.permute.xlu0 0
    %3863 = vperm.xlu0 %3862, %v3642
    %v3864 = vpop.permute.xlu0 %3863
    %3865 = vset.pattern.permute.xlu0 0
    %3866 = vperm.xlu0 %3865, %v3651
    %v3867 = vpop.permute.xlu0 %3866
    %3868 = vset.pattern.permute.xlu0 0
    %3869 = vperm.xlu0 %3868, %v3660
    %v3870 = vpop.permute.xlu0 %3869
    %3871 = vset.pattern.permute.xlu0 0
    %3872 = vperm.xlu0 %3871, %v3669
    %v3873 = vpop.permute.xlu0 %3872
    %3874 = vset.pattern.permute.xlu0 0
    %3875 = vperm.xlu0 %3874, %v3678
    %v3876 = vpop.permute.xlu0 %3875
    %3877 = vset.pattern.permute.xlu0 0
    %3878 = vperm.xlu0 %3877, %v3687
    %v3879 = vpop.permute.xlu0 %3878
    %3880 = vset.pattern.permute.xlu0 0
    %3881 = vperm.xlu0 %3880, %v3696
    %v3882 = vpop.permute.xlu0 %3881
    %3883 = vset.pattern.permute.xlu0 0
    %3884 = vperm.xlu0 %3883, %v3705
    %v3885 = vpop.permute.xlu0 %3884
    %3886 = vset.pattern.permute.xlu0 0
    %3887 = vperm.xlu0 %3886, %v3714
    %v3888 = vpop.permute.xlu0 %3887
    %3889 = vset.pattern.permute.xlu0 0
    %3890 = vperm.xlu0 %3889, %v3723
    %v3891 = vpop.permute.xlu0 %3890
    %3892 = vset.pattern.permute.xlu0 0
    %3893 = vperm.xlu0 %3892, %v3732
    %v3894 = vpop.permute.xlu0 %3893
    %3895 = vset.pattern.permute.xlu0 0
    %3896 = vperm.xlu0 %3895, %v3741
    %v3897 = vpop.permute.xlu0 %3896
    %3898 = vset.pattern.permute.xlu0 0
    %3899 = vperm.xlu0 %3898, %v3750
    %v3900 = vpop.permute.xlu0 %3899
    %3901 = vset.pattern.permute.xlu0 0
    %3902 = vperm.xlu0 %3901, %v3759
    %v3903 = vpop.permute.xlu0 %3902
    %3904 = vset.pattern.permute.xlu0 0
    %3905 = vperm.xlu0 %3904, %v3768
    %v3906 = vpop.permute.xlu0 %3905
    %3907 = vset.pattern.permute.xlu0 0
    %3908 = vperm.xlu0 %3907, %v3777
    %v3909 = vpop.permute.xlu0 %3908
    %3910 = vset.pattern.permute.xlu0 0
    %3911 = vperm.xlu0 %3910, %v3786
    %v3912 = vpop.permute.xlu0 %3911
    %3913 = vset.pattern.permute.xlu0 0
    %3914 = vperm.xlu0 %3913, %v3795
    %v3915 = vpop.permute.xlu0 %3914
    %3916 = vset.pattern.permute.xlu0 0
    %3917 = vperm.xlu0 %3916, %v3804
    %v3918 = vpop.permute.xlu0 %3917
    %3919 = vset.pattern.permute.xlu0 0
    %3920 = vperm.xlu0 %3919, %v3813
    %v3921 = vpop.permute.xlu0 %3920
    %3922 = vset.pattern.permute.xlu0 0
    %3923 = vperm.xlu0 %3922, %v3822
    %v3924 = vpop.permute.xlu0 %3923
    %3925 = vset.pattern.permute.xlu0 0
    %3926 = vperm.xlu0 %3925, %v3831
    %v3927 = vpop.permute.xlu0 %3926
    %v3928 = vlaneseq
    %v3929 = vand.u32 %v3928, 127
    %v3930 = vperm.slane %v3834, %v3929
    %v3931 = vadd.s32 %v3929, 4294967288
    %v3932 = vperm.slane %v3837, %v3931
    %vm3933 = vcmask 130112
    %v3934 = vsel %vm3933, %v3932, %v3930
    %v3935 = vadd.s32 %v3929, 4294967280
    %v3936 = vperm.slane %v3840, %v3935
    %vm3937 = vcmask 195712
    %v3938 = vsel %vm3937, %v3936, %v3934
    %v3939 = vadd.s32 %v3929, 4294967272
    %v3940 = vperm.slane %v3843, %v3939
    %vm3941 = vcmask 261312
    %v3942 = vsel %vm3941, %v3940, %v3938
    %v3943 = vadd.s32 %v3929, 4294967264
    %v3944 = vperm.slane %v3846, %v3943
    %vm3945 = vcmask 326912
    %v3946 = vsel %vm3945, %v3944, %v3942
    %v3947 = vadd.s32 %v3929, 4294967256
    %v3948 = vperm.slane %v3849, %v3947
    %vm3949 = vcmask 392512
    %v3950 = vsel %vm3949, %v3948, %v3946
    %v3951 = vadd.s32 %v3929, 4294967248
    %v3952 = vperm.slane %v3852, %v3951
    %vm3953 = vcmask 458112
    %v3954 = vsel %vm3953, %v3952, %v3950
    %v3955 = vadd.s32 %v3929, 4294967240
    %v3956 = vperm.slane %v3855, %v3955
    %vm3957 = vcmask 523712
    %v3958 = vsel %vm3957, %v3956, %v3954
    %v3959 = vadd.s32 %v3929, 4294967232
    %v3960 = vperm.slane %v3858, %v3959
    %vm3961 = vcmask 589312
    %v3962 = vsel %vm3961, %v3960, %v3958
    %v3963 = vadd.s32 %v3929, 4294967224
    %v3964 = vperm.slane %v3861, %v3963
    %vm3965 = vcmask 654912
    %v3966 = vsel %vm3965, %v3964, %v3962
    %v3967 = vadd.s32 %v3929, 4294967216
    %v3968 = vperm.slane %v3864, %v3967
    %vm3969 = vcmask 720512
    %v3970 = vsel %vm3969, %v3968, %v3966
    %v3971 = vadd.s32 %v3929, 4294967208
    %v3972 = vperm.slane %v3867, %v3971
    %vm3973 = vcmask 786112
    %v3974 = vsel %vm3973, %v3972, %v3970
    %v3975 = vadd.s32 %v3929, 4294967200
    %v3976 = vperm.slane %v3870, %v3975
    %vm3977 = vcmask 851712
    %v3978 = vsel %vm3977, %v3976, %v3974
    %v3979 = vadd.s32 %v3929, 4294967192
    %v3980 = vperm.slane %v3873, %v3979
    %vm3981 = vcmask 917312
    %v3982 = vsel %vm3981, %v3980, %v3978
    %v3983 = vadd.s32 %v3929, 4294967184
    %v3984 = vperm.slane %v3876, %v3983
    %vm3985 = vcmask 982912
    %v3986 = vsel %vm3985, %v3984, %v3982
    %v3987 = vadd.s32 %v3929, 4294967176
    %v3988 = vperm.slane %v3879, %v3987
    %vm3989 = vcmask 1048512
    %v3990 = vsel %vm3989, %v3988, %v3986
    %v3991 = vperm.slane %v3882, %v3929
    %v3992 = vperm.slane %v3885, %v3931
    %v3993 = vsel %vm3933, %v3992, %v3991
    %v3994 = vperm.slane %v3888, %v3935
    %v3995 = vsel %vm3937, %v3994, %v3993
    %v3996 = vperm.slane %v3891, %v3939
    %v3997 = vsel %vm3941, %v3996, %v3995
    %v3998 = vperm.slane %v3894, %v3943
    %v3999 = vsel %vm3945, %v3998, %v3997
    %v4000 = vperm.slane %v3897, %v3947
    %v4001 = vsel %vm3949, %v4000, %v3999
    %v4002 = vperm.slane %v3900, %v3951
    %v4003 = vsel %vm3953, %v4002, %v4001
    %v4004 = vperm.slane %v3903, %v3955
    %v4005 = vsel %vm3957, %v4004, %v4003
    %v4006 = vperm.slane %v3906, %v3959
    %v4007 = vsel %vm3961, %v4006, %v4005
    %v4008 = vperm.slane %v3909, %v3963
    %v4009 = vsel %vm3965, %v4008, %v4007
    %v4010 = vperm.slane %v3912, %v3967
    %v4011 = vsel %vm3969, %v4010, %v4009
    %v4012 = vperm.slane %v3915, %v3971
    %v4013 = vsel %vm3973, %v4012, %v4011
    %v4014 = vperm.slane %v3918, %v3975
    %v4015 = vsel %vm3977, %v4014, %v4013
    %v4016 = vperm.slane %v3921, %v3979
    %v4017 = vsel %vm3981, %v4016, %v4015
    %v4018 = vperm.slane %v3924, %v3983
    %v4019 = vsel %vm3985, %v4018, %v4017
    %v4020 = vperm.slane %v3927, %v3987
    %v4021 = vsel %vm3989, %v4020, %v4019
    %v4022 = vrot.slane %v4021, 7
    %vm4023 = vcmask 1040384
    %v4024 = vsel %vm4023, %v3990, %v4022
    %v4026 = vlaneseq
    %vm4027 = vcmp.ge.s32.totalorder %v4026, 0
    %vm4028 = vcmp.lt.s32.totalorder %v4026, 256
    %vm4029 = vmand %vm4027, %vm4028
    %4030 = vst.msk [vmem:[#allocation19] sm:$0x3] %vm4029, %v4024
    %v4063 = vperm.slane %v3057, 0
    %v4064 = vperm.slane %v3057, 1
    %v4065 = vperm.slane %v3057, 2
    %v4066 = vperm.slane %v3057, 3
    %v4067 = vperm.slane %v3057, 4
    %v4068 = vperm.slane %v3057, 5
    %v4069 = vperm.slane %v3057, 6
    %v4070 = vperm.slane %v3057, 7
    %v4071 = vperm.slane %v3058, 0
    %v4072 = vperm.slane %v3058, 1
    %v4073 = vperm.slane %v3058, 2
    %v4074 = vperm.slane %v3058, 3
    %v4075 = vperm.slane %v3058, 4
    %v4076 = vperm.slane %v3058, 5
    %v4077 = vperm.slane %v3058, 6
    %v4078 = vperm.slane %v3058, 7
    %v4079 = vperm.slane %v3059, 0
    %v4080 = vperm.slane %v3059, 1
    %v4081 = vperm.slane %v3059, 2
    %v4082 = vperm.slane %v3059, 3
    %v4083 = vperm.slane %v3059, 4
    %v4084 = vperm.slane %v3059, 5
    %v4085 = vperm.slane %v3059, 6
    %v4086 = vperm.slane %v3059, 7
    %v4087 = vperm.slane %v3060, 0
    %v4088 = vperm.slane %v3060, 1
    %v4089 = vperm.slane %v3060, 2
    %v4090 = vperm.slane %v3060, 3
    %v4091 = vperm.slane %v3060, 4
    %v4092 = vperm.slane %v3060, 5
    %v4093 = vperm.slane %v3060, 6
    %v4094 = vperm.slane %v3060, 7
    %v4095 = vperm.slane %v3061, 0
    %v4096 = vperm.slane %v3061, 1
    %v4097 = vperm.slane %v3061, 2
    %v4098 = vperm.slane %v3061, 3
    %v4099 = vperm.slane %v3061, 4
    %v4100 = vperm.slane %v3061, 5
    %v4101 = vperm.slane %v3061, 6
    %v4102 = vperm.slane %v3061, 7
    %v4103 = vperm.slane %v3062, 0
    %v4104 = vperm.slane %v3062, 1
    %v4105 = vperm.slane %v3062, 2
    %v4106 = vperm.slane %v3062, 3
    %v4107 = vperm.slane %v3062, 4
    %v4108 = vperm.slane %v3062, 5
    %v4109 = vperm.slane %v3062, 6
    %v4110 = vperm.slane %v3062, 7
    %v4111 = vperm.slane %v3063, 0
    %v4112 = vperm.slane %v3063, 1
    %v4113 = vperm.slane %v3063, 2
    %v4114 = vperm.slane %v3063, 3
    %v4115 = vperm.slane %v3063, 4
    %v4116 = vperm.slane %v3063, 5
    %v4117 = vperm.slane %v3063, 6
    %v4118 = vperm.slane %v3063, 7
    %v4119 = vperm.slane %v3064, 0
    %v4120 = vperm.slane %v3064, 1
    %v4121 = vperm.slane %v3064, 2
    %v4122 = vperm.slane %v3064, 3
    %v4123 = vperm.slane %v3064, 4
    %v4124 = vperm.slane %v3064, 5
    %v4125 = vperm.slane %v3064, 6
    %v4126 = vperm.slane %v3064, 7
    %v4127 = vperm.slane %v3065, 0
    %v4128 = vperm.slane %v3065, 1
    %v4129 = vperm.slane %v3065, 2
    %v4130 = vperm.slane %v3065, 3
    %v4131 = vperm.slane %v3065, 4
    %v4132 = vperm.slane %v3065, 5
    %v4133 = vperm.slane %v3065, 6
    %v4134 = vperm.slane %v3065, 7
    %v4135 = vperm.slane %v3066, 0
    %v4136 = vperm.slane %v3066, 1
    %v4137 = vperm.slane %v3066, 2
    %v4138 = vperm.slane %v3066, 3
    %v4139 = vperm.slane %v3066, 4
    %v4140 = vperm.slane %v3066, 5
    %v4141 = vperm.slane %v3066, 6
    %v4142 = vperm.slane %v3066, 7
    %v4143 = vperm.slane %v3067, 0
    %v4144 = vperm.slane %v3067, 1
    %v4145 = vperm.slane %v3067, 2
    %v4146 = vperm.slane %v3067, 3
    %v4147 = vperm.slane %v3067, 4
    %v4148 = vperm.slane %v3067, 5
    %v4149 = vperm.slane %v3067, 6
    %v4150 = vperm.slane %v3067, 7
    %v4151 = vperm.slane %v3068, 0
    %v4152 = vperm.slane %v3068, 1
    %v4153 = vperm.slane %v3068, 2
    %v4154 = vperm.slane %v3068, 3
    %v4155 = vperm.slane %v3068, 4
    %v4156 = vperm.slane %v3068, 5
    %v4157 = vperm.slane %v3068, 6
    %v4158 = vperm.slane %v3068, 7
    %v4159 = vperm.slane %v3069, 0
    %v4160 = vperm.slane %v3069, 1
    %v4161 = vperm.slane %v3069, 2
    %v4162 = vperm.slane %v3069, 3
    %v4163 = vperm.slane %v3069, 4
    %v4164 = vperm.slane %v3069, 5
    %v4165 = vperm.slane %v3069, 6
    %v4166 = vperm.slane %v3069, 7
    %v4167 = vperm.slane %v3070, 0
    %v4168 = vperm.slane %v3070, 1
    %v4169 = vperm.slane %v3070, 2
    %v4170 = vperm.slane %v3070, 3
    %v4171 = vperm.slane %v3070, 4
    %v4172 = vperm.slane %v3070, 5
    %v4173 = vperm.slane %v3070, 6
    %v4174 = vperm.slane %v3070, 7
    %v4175 = vperm.slane %v3071, 0
    %v4176 = vperm.slane %v3071, 1
    %v4177 = vperm.slane %v3071, 2
    %v4178 = vperm.slane %v3071, 3
    %v4179 = vperm.slane %v3071, 4
    %v4180 = vperm.slane %v3071, 5
    %v4181 = vperm.slane %v3071, 6
    %v4182 = vperm.slane %v3071, 7
    %v4183 = vperm.slane %v3072, 0
    %v4184 = vperm.slane %v3072, 1
    %v4185 = vperm.slane %v3072, 2
    %v4186 = vperm.slane %v3072, 3
    %v4187 = vperm.slane %v3072, 4
    %v4188 = vperm.slane %v3072, 5
    %v4189 = vperm.slane %v3072, 6
    %v4190 = vperm.slane %v3072, 7
    %v4191 = vperm.slane %v3073, 0
    %v4192 = vperm.slane %v3073, 1
    %v4193 = vperm.slane %v3073, 2
    %v4194 = vperm.slane %v3073, 3
    %v4195 = vperm.slane %v3073, 4
    %v4196 = vperm.slane %v3073, 5
    %v4197 = vperm.slane %v3073, 6
    %v4198 = vperm.slane %v3073, 7
    %v4199 = vperm.slane %v3074, 0
    %v4200 = vperm.slane %v3074, 1
    %v4201 = vperm.slane %v3074, 2
    %v4202 = vperm.slane %v3074, 3
    %v4203 = vperm.slane %v3074, 4
    %v4204 = vperm.slane %v3074, 5
    %v4205 = vperm.slane %v3074, 6
    %v4206 = vperm.slane %v3074, 7
    %v4207 = vperm.slane %v3075, 0
    %v4208 = vperm.slane %v3075, 1
    %v4209 = vperm.slane %v3075, 2
    %v4210 = vperm.slane %v3075, 3
    %v4211 = vperm.slane %v3075, 4
    %v4212 = vperm.slane %v3075, 5
    %v4213 = vperm.slane %v3075, 6
    %v4214 = vperm.slane %v3075, 7
    %v4215 = vperm.slane %v3076, 0
    %v4216 = vperm.slane %v3076, 1
    %v4217 = vperm.slane %v3076, 2
    %v4218 = vperm.slane %v3076, 3
    %v4219 = vperm.slane %v3076, 4
    %v4220 = vperm.slane %v3076, 5
    %v4221 = vperm.slane %v3076, 6
    %v4222 = vperm.slane %v3076, 7
    %v4223 = vperm.slane %v3077, 0
    %v4224 = vperm.slane %v3077, 1
    %v4225 = vperm.slane %v3077, 2
    %v4226 = vperm.slane %v3077, 3
    %v4227 = vperm.slane %v3077, 4
    %v4228 = vperm.slane %v3077, 5
    %v4229 = vperm.slane %v3077, 6
    %v4230 = vperm.slane %v3077, 7
    %v4231 = vperm.slane %v3078, 0
    %v4232 = vperm.slane %v3078, 1
    %v4233 = vperm.slane %v3078, 2
    %v4234 = vperm.slane %v3078, 3
    %v4235 = vperm.slane %v3078, 4
    %v4236 = vperm.slane %v3078, 5
    %v4237 = vperm.slane %v3078, 6
    %v4238 = vperm.slane %v3078, 7
    %v4239 = vperm.slane %v3079, 0
    %v4240 = vperm.slane %v3079, 1
    %v4241 = vperm.slane %v3079, 2
    %v4242 = vperm.slane %v3079, 3
    %v4243 = vperm.slane %v3079, 4
    %v4244 = vperm.slane %v3079, 5
    %v4245 = vperm.slane %v3079, 6
    %v4246 = vperm.slane %v3079, 7
    %v4247 = vperm.slane %v3080, 0
    %v4248 = vperm.slane %v3080, 1
    %v4249 = vperm.slane %v3080, 2
    %v4250 = vperm.slane %v3080, 3
    %v4251 = vperm.slane %v3080, 4
    %v4252 = vperm.slane %v3080, 5
    %v4253 = vperm.slane %v3080, 6
    %v4254 = vperm.slane %v3080, 7
    %v4255 = vperm.slane %v3081, 0
    %v4256 = vperm.slane %v3081, 1
    %v4257 = vperm.slane %v3081, 2
    %v4258 = vperm.slane %v3081, 3
    %v4259 = vperm.slane %v3081, 4
    %v4260 = vperm.slane %v3081, 5
    %v4261 = vperm.slane %v3081, 6
    %v4262 = vperm.slane %v3081, 7
    %v4263 = vperm.slane %v3082, 0
    %v4264 = vperm.slane %v3082, 1
    %v4265 = vperm.slane %v3082, 2
    %v4266 = vperm.slane %v3082, 3
    %v4267 = vperm.slane %v3082, 4
    %v4268 = vperm.slane %v3082, 5
    %v4269 = vperm.slane %v3082, 6
    %v4270 = vperm.slane %v3082, 7
    %v4271 = vperm.slane %v3083, 0
    %v4272 = vperm.slane %v3083, 1
    %v4273 = vperm.slane %v3083, 2
    %v4274 = vperm.slane %v3083, 3
    %v4275 = vperm.slane %v3083, 4
    %v4276 = vperm.slane %v3083, 5
    %v4277 = vperm.slane %v3083, 6
    %v4278 = vperm.slane %v3083, 7
    %v4279 = vperm.slane %v3084, 0
    %v4280 = vperm.slane %v3084, 1
    %v4281 = vperm.slane %v3084, 2
    %v4282 = vperm.slane %v3084, 3
    %v4283 = vperm.slane %v3084, 4
    %v4284 = vperm.slane %v3084, 5
    %v4285 = vperm.slane %v3084, 6
    %v4286 = vperm.slane %v3084, 7
    %v4287 = vperm.slane %v3085, 0
    %v4288 = vperm.slane %v3085, 1
    %v4289 = vperm.slane %v3085, 2
    %v4290 = vperm.slane %v3085, 3
    %v4291 = vperm.slane %v3085, 4
    %v4292 = vperm.slane %v3085, 5
    %v4293 = vperm.slane %v3085, 6
    %v4294 = vperm.slane %v3085, 7
    %v4295 = vperm.slane %v3086, 0
    %v4296 = vperm.slane %v3086, 1
    %v4297 = vperm.slane %v3086, 2
    %v4298 = vperm.slane %v3086, 3
    %v4299 = vperm.slane %v3086, 4
    %v4300 = vperm.slane %v3086, 5
    %v4301 = vperm.slane %v3086, 6
    %v4302 = vperm.slane %v3086, 7
    %v4303 = vperm.slane %v3087, 0
    %v4304 = vperm.slane %v3087, 1
    %v4305 = vperm.slane %v3087, 2
    %v4306 = vperm.slane %v3087, 3
    %v4307 = vperm.slane %v3087, 4
    %v4308 = vperm.slane %v3087, 5
    %v4309 = vperm.slane %v3087, 6
    %v4310 = vperm.slane %v3087, 7
    %v4311 = vperm.slane %v3088, 0
    %v4312 = vperm.slane %v3088, 1
    %v4313 = vperm.slane %v3088, 2
    %v4314 = vperm.slane %v3088, 3
    %v4315 = vperm.slane %v3088, 4
    %v4316 = vperm.slane %v3088, 5
    %v4317 = vperm.slane %v3088, 6
    %v4318 = vperm.slane %v3088, 7
    %4319 = vst [vmem:[#allocation1] ss:$9 sm:$0xff] %v4063
    %s4320 = scalar_lea.vmem [#allocation1], 1
    %4321 = vst [vmem:[%s4320] ss:$9 sm:$0xff] %v4064
    %s4322 = scalar_lea.vmem [#allocation1], 2
    %4323 = vst [vmem:[%s4322] ss:$9 sm:$0xff] %v4065
    %s4324 = scalar_lea.vmem [#allocation1], 3
    %4325 = vst [vmem:[%s4324] ss:$9 sm:$0xff] %v4066
    %s4326 = scalar_lea.vmem [#allocation1], 4
    %4327 = vst [vmem:[%s4326] ss:$9 sm:$0xff] %v4067
    %s4328 = scalar_lea.vmem [#allocation1], 5
    %4329 = vst [vmem:[%s4328] ss:$9 sm:$0xff] %v4068
    %s4330 = scalar_lea.vmem [#allocation1], 6
    %4331 = vst [vmem:[%s4330] ss:$9 sm:$0xff] %v4069
    %s4332 = scalar_lea.vmem [#allocation1], 7
    %4333 = vst [vmem:[%s4332] ss:$9 sm:$0xff] %v4070
    %v4334 = vld [vmem:[#allocation1] sm:$0xff]
    %4335 = vst [vmem:[#allocation1] ss:$9 sm:$0xff] %v4071
    %4336 = vst [vmem:[%s4320] ss:$9 sm:$0xff] %v4072
    %4337 = vst [vmem:[%s4322] ss:$9 sm:$0xff] %v4073
    %4338 = vst [vmem:[%s4324] ss:$9 sm:$0xff] %v4074
    %4339 = vst [vmem:[%s4326] ss:$9 sm:$0xff] %v4075
    %4340 = vst [vmem:[%s4328] ss:$9 sm:$0xff] %v4076
    %4341 = vst [vmem:[%s4330] ss:$9 sm:$0xff] %v4077
    %4342 = vst [vmem:[%s4332] ss:$9 sm:$0xff] %v4078
    %v4343 = vld [vmem:[#allocation1] sm:$0xff]
    %4344 = vst [vmem:[#allocation1] ss:$9 sm:$0xff] %v4079
    %4345 = vst [vmem:[%s4320] ss:$9 sm:$0xff] %v4080
    %4346 = vst [vmem:[%s4322] ss:$9 sm:$0xff] %v4081
    %4347 = vst [vmem:[%s4324] ss:$9 sm:$0xff] %v4082
    %4348 = vst [vmem:[%s4326] ss:$9 sm:$0xff] %v4083
    %4349 = vst [vmem:[%s4328] ss:$9 sm:$0xff] %v4084
    %4350 = vst [vmem:[%s4330] ss:$9 sm:$0xff] %v4085
    %4351 = vst [vmem:[%s4332] ss:$9 sm:$0xff] %v4086
    %v4352 = vld [vmem:[#allocation1] sm:$0xff]
    %4353 = vst [vmem:[#allocation1] ss:$9 sm:$0xff] %v4087
    %4354 = vst [vmem:[%s4320] ss:$9 sm:$0xff] %v4088
    %4355 = vst [vmem:[%s4322] ss:$9 sm:$0xff] %v4089
    %4356 = vst [vmem:[%s4324] ss:$9 sm:$0xff] %v4090
    %4357 = vst [vmem:[%s4326] ss:$9 sm:$0xff] %v4091
    %4358 = vst [vmem:[%s4328] ss:$9 sm:$0xff] %v4092
    %4359 = vst [vmem:[%s4330] ss:$9 sm:$0xff] %v4093
    %4360 = vst [vmem:[%s4332] ss:$9 sm:$0xff] %v4094
    %v4361 = vld [vmem:[#allocation1] sm:$0xff]
    %4362 = vst [vmem:[#allocation1] ss:$9 sm:$0xff] %v4095
    %4363 = vst [vmem:[%s4320] ss:$9 sm:$0xff] %v4096
    %4364 = vst [vmem:[%s4322] ss:$9 sm:$0xff] %v4097
    %4365 = vst [vmem:[%s4324] ss:$9 sm:$0xff] %v4098
    %4366 = vst [vmem:[%s4326] ss:$9 sm:$0xff] %v4099
    %4367 = vst [vmem:[%s4328] ss:$9 sm:$0xff] %v4100
    %4368 = vst [vmem:[%s4330] ss:$9 sm:$0xff] %v4101
    %4369 = vst [vmem:[%s4332] ss:$9 sm:$0xff] %v4102
    %v4370 = vld [vmem:[#allocation1] sm:$0xff]
    %4371 = vst [vmem:[#allocation1] ss:$9 sm:$0xff] %v4103
    %4372 = vst [vmem:[%s4320] ss:$9 sm:$0xff] %v4104
    %4373 = vst [vmem:[%s4322] ss:$9 sm:$0xff] %v4105
    %4374 = vst [vmem:[%s4324] ss:$9 sm:$0xff] %v4106
    %4375 = vst [vmem:[%s4326] ss:$9 sm:$0xff] %v4107
    %4376 = vst [vmem:[%s4328] ss:$9 sm:$0xff] %v4108
    %4377 = vst [vmem:[%s4330] ss:$9 sm:$0xff] %v4109
    %4378 = vst [vmem:[%s4332] ss:$9 sm:$0xff] %v4110
    %v4379 = vld [vmem:[#allocation1] sm:$0xff]
    %4380 = vst [vmem:[#allocation1] ss:$9 sm:$0xff] %v4111
    %4381 = vst [vmem:[%s4320] ss:$9 sm:$0xff] %v4112
    %4382 = vst [vmem:[%s4322] ss:$9 sm:$0xff] %v4113
    %4383 = vst [vmem:[%s4324] ss:$9 sm:$0xff] %v4114
    %4384 = vst [vmem:[%s4326] ss:$9 sm:$0xff] %v4115
    %4385 = vst [vmem:[%s4328] ss:$9 sm:$0xff] %v4116
    %4386 = vst [vmem:[%s4330] ss:$9 sm:$0xff] %v4117
    %4387 = vst [vmem:[%s4332] ss:$9 sm:$0xff] %v4118
    %v4388 = vld [vmem:[#allocation1] sm:$0xff]
    %4389 = vst [vmem:[#allocation1] ss:$9 sm:$0xff] %v4119
    %4390 = vst [vmem:[%s4320] ss:$9 sm:$0xff] %v4120
    %4391 = vst [vmem:[%s4322] ss:$9 sm:$0xff] %v4121
    %4392 = vst [vmem:[%s4324] ss:$9 sm:$0xff] %v4122
    %4393 = vst [vmem:[%s4326] ss:$9 sm:$0xff] %v4123
    %4394 = vst [vmem:[%s4328] ss:$9 sm:$0xff] %v4124
    %4395 = vst [vmem:[%s4330] ss:$9 sm:$0xff] %v4125
    %4396 = vst [vmem:[%s4332] ss:$9 sm:$0xff] %v4126
    %v4397 = vld [vmem:[#allocation1] sm:$0xff]
    %4398 = vst [vmem:[#allocation1] ss:$9 sm:$0xff] %v4127
    %4399 = vst [vmem:[%s4320] ss:$9 sm:$0xff] %v4128
    %4400 = vst [vmem:[%s4322] ss:$9 sm:$0xff] %v4129
    %4401 = vst [vmem:[%s4324] ss:$9 sm:$0xff] %v4130
    %4402 = vst [vmem:[%s4326] ss:$9 sm:$0xff] %v4131
    %4403 = vst [vmem:[%s4328] ss:$9 sm:$0xff] %v4132
    %4404 = vst [vmem:[%s4330] ss:$9 sm:$0xff] %v4133
    %4405 = vst [vmem:[%s4332] ss:$9 sm:$0xff] %v4134
    %v4406 = vld [vmem:[#allocation1] sm:$0xff]
    %4407 = vst [vmem:[#allocation1] ss:$9 sm:$0xff] %v4135
    %4408 = vst [vmem:[%s4320] ss:$9 sm:$0xff] %v4136
    %4409 = vst [vmem:[%s4322] ss:$9 sm:$0xff] %v4137
    %4410 = vst [vmem:[%s4324] ss:$9 sm:$0xff] %v4138
    %4411 = vst [vmem:[%s4326] ss:$9 sm:$0xff] %v4139
    %4412 = vst [vmem:[%s4328] ss:$9 sm:$0xff] %v4140
    %4413 = vst [vmem:[%s4330] ss:$9 sm:$0xff] %v4141
    %4414 = vst [vmem:[%s4332] ss:$9 sm:$0xff] %v4142
    %v4415 = vld [vmem:[#allocation1] sm:$0xff]
    %4416 = vst [vmem:[#allocation1] ss:$9 sm:$0xff] %v4143
    %4417 = vst [vmem:[%s4320] ss:$9 sm:$0xff] %v4144
    %4418 = vst [vmem:[%s4322] ss:$9 sm:$0xff] %v4145
    %4419 = vst [vmem:[%s4324] ss:$9 sm:$0xff] %v4146
    %4420 = vst [vmem:[%s4326] ss:$9 sm:$0xff] %v4147
    %4421 = vst [vmem:[%s4328] ss:$9 sm:$0xff] %v4148
    %4422 = vst [vmem:[%s4330] ss:$9 sm:$0xff] %v4149
    %4423 = vst [vmem:[%s4332] ss:$9 sm:$0xff] %v4150
    %v4424 = vld [vmem:[#allocation1] sm:$0xff]
    %4425 = vst [vmem:[#allocation1] ss:$9 sm:$0xff] %v4151
    %4426 = vst [vmem:[%s4320] ss:$9 sm:$0xff] %v4152
    %4427 = vst [vmem:[%s4322] ss:$9 sm:$0xff] %v4153
    %4428 = vst [vmem:[%s4324] ss:$9 sm:$0xff] %v4154
    %4429 = vst [vmem:[%s4326] ss:$9 sm:$0xff] %v4155
    %4430 = vst [vmem:[%s4328] ss:$9 sm:$0xff] %v4156
    %4431 = vst [vmem:[%s4330] ss:$9 sm:$0xff] %v4157
    %4432 = vst [vmem:[%s4332] ss:$9 sm:$0xff] %v4158
    %v4433 = vld [vmem:[#allocation1] sm:$0xff]
    %4434 = vst [vmem:[#allocation1] ss:$9 sm:$0xff] %v4159
    %4435 = vst [vmem:[%s4320] ss:$9 sm:$0xff] %v4160
    %4436 = vst [vmem:[%s4322] ss:$9 sm:$0xff] %v4161
    %4437 = vst [vmem:[%s4324] ss:$9 sm:$0xff] %v4162
    %4438 = vst [vmem:[%s4326] ss:$9 sm:$0xff] %v4163
    %4439 = vst [vmem:[%s4328] ss:$9 sm:$0xff] %v4164
    %4440 = vst [vmem:[%s4330] ss:$9 sm:$0xff] %v4165
    %4441 = vst [vmem:[%s4332] ss:$9 sm:$0xff] %v4166
    %v4442 = vld [vmem:[#allocation1] sm:$0xff]
    %4443 = vst [vmem:[#allocation1] ss:$9 sm:$0xff] %v4167
    %4444 = vst [vmem:[%s4320] ss:$9 sm:$0xff] %v4168
    %4445 = vst [vmem:[%s4322] ss:$9 sm:$0xff] %v4169
    %4446 = vst [vmem:[%s4324] ss:$9 sm:$0xff] %v4170
    %4447 = vst [vmem:[%s4326] ss:$9 sm:$0xff] %v4171
    %4448 = vst [vmem:[%s4328] ss:$9 sm:$0xff] %v4172
    %4449 = vst [vmem:[%s4330] ss:$9 sm:$0xff] %v4173
    %4450 = vst [vmem:[%s4332] ss:$9 sm:$0xff] %v4174
    %v4451 = vld [vmem:[#allocation1] sm:$0xff]
    %4452 = vst [vmem:[#allocation1] ss:$9 sm:$0xff] %v4175
    %4453 = vst [vmem:[%s4320] ss:$9 sm:$0xff] %v4176
    %4454 = vst [vmem:[%s4322] ss:$9 sm:$0xff] %v4177
    %4455 = vst [vmem:[%s4324] ss:$9 sm:$0xff] %v4178
    %4456 = vst [vmem:[%s4326] ss:$9 sm:$0xff] %v4179
    %4457 = vst [vmem:[%s4328] ss:$9 sm:$0xff] %v4180
    %4458 = vst [vmem:[%s4330] ss:$9 sm:$0xff] %v4181
    %4459 = vst [vmem:[%s4332] ss:$9 sm:$0xff] %v4182
    %v4460 = vld [vmem:[#allocation1] sm:$0xff]
    %4461 = vst [vmem:[#allocation1] ss:$9 sm:$0xff] %v4183
    %4462 = vst [vmem:[%s4320] ss:$9 sm:$0xff] %v4184
    %4463 = vst [vmem:[%s4322] ss:$9 sm:$0xff] %v4185
    %4464 = vst [vmem:[%s4324] ss:$9 sm:$0xff] %v4186
    %4465 = vst [vmem:[%s4326] ss:$9 sm:$0xff] %v4187
    %4466 = vst [vmem:[%s4328] ss:$9 sm:$0xff] %v4188
    %4467 = vst [vmem:[%s4330] ss:$9 sm:$0xff] %v4189
    %4468 = vst [vmem:[%s4332] ss:$9 sm:$0xff] %v4190
    %v4469 = vld [vmem:[#allocation1] sm:$0xff]
    %4470 = vst [vmem:[#allocation1] ss:$9 sm:$0xff] %v4191
    %4471 = vst [vmem:[%s4320] ss:$9 sm:$0xff] %v4192
    %4472 = vst [vmem:[%s4322] ss:$9 sm:$0xff] %v4193
    %4473 = vst [vmem:[%s4324] ss:$9 sm:$0xff] %v4194
    %4474 = vst [vmem:[%s4326] ss:$9 sm:$0xff] %v4195
    %4475 = vst [vmem:[%s4328] ss:$9 sm:$0xff] %v4196
    %4476 = vst [vmem:[%s4330] ss:$9 sm:$0xff] %v4197
    %4477 = vst [vmem:[%s4332] ss:$9 sm:$0xff] %v4198
    %v4478 = vld [vmem:[#allocation1] sm:$0xff]
    %4479 = vst [vmem:[#allocation1] ss:$9 sm:$0xff] %v4199
    %4480 = vst [vmem:[%s4320] ss:$9 sm:$0xff] %v4200
    %4481 = vst [vmem:[%s4322] ss:$9 sm:$0xff] %v4201
    %4482 = vst [vmem:[%s4324] ss:$9 sm:$0xff] %v4202
    %4483 = vst [vmem:[%s4326] ss:$9 sm:$0xff] %v4203
    %4484 = vst [vmem:[%s4328] ss:$9 sm:$0xff] %v4204
    %4485 = vst [vmem:[%s4330] ss:$9 sm:$0xff] %v4205
    %4486 = vst [vmem:[%s4332] ss:$9 sm:$0xff] %v4206
    %v4487 = vld [vmem:[#allocation1] sm:$0xff]
    %4488 = vst [vmem:[#allocation1] ss:$9 sm:$0xff] %v4207
    %4489 = vst [vmem:[%s4320] ss:$9 sm:$0xff] %v4208
    %4490 = vst [vmem:[%s4322] ss:$9 sm:$0xff] %v4209
    %4491 = vst [vmem:[%s4324] ss:$9 sm:$0xff] %v4210
    %4492 = vst [vmem:[%s4326] ss:$9 sm:$0xff] %v4211
    %4493 = vst [vmem:[%s4328] ss:$9 sm:$0xff] %v4212
    %4494 = vst [vmem:[%s4330] ss:$9 sm:$0xff] %v4213
    %4495 = vst [vmem:[%s4332] ss:$9 sm:$0xff] %v4214
    %v4496 = vld [vmem:[#allocation1] sm:$0xff]
    %4497 = vst [vmem:[#allocation1] ss:$9 sm:$0xff] %v4215
    %4498 = vst [vmem:[%s4320] ss:$9 sm:$0xff] %v4216
    %4499 = vst [vmem:[%s4322] ss:$9 sm:$0xff] %v4217
    %4500 = vst [vmem:[%s4324] ss:$9 sm:$0xff] %v4218
    %4501 = vst [vmem:[%s4326] ss:$9 sm:$0xff] %v4219
    %4502 = vst [vmem:[%s4328] ss:$9 sm:$0xff] %v4220
    %4503 = vst [vmem:[%s4330] ss:$9 sm:$0xff] %v4221
    %4504 = vst [vmem:[%s4332] ss:$9 sm:$0xff] %v4222
    %v4505 = vld [vmem:[#allocation1] sm:$0xff]
    %4506 = vst [vmem:[#allocation1] ss:$9 sm:$0xff] %v4223
    %4507 = vst [vmem:[%s4320] ss:$9 sm:$0xff] %v4224
    %4508 = vst [vmem:[%s4322] ss:$9 sm:$0xff] %v4225
    %4509 = vst [vmem:[%s4324] ss:$9 sm:$0xff] %v4226
    %4510 = vst [vmem:[%s4326] ss:$9 sm:$0xff] %v4227
    %4511 = vst [vmem:[%s4328] ss:$9 sm:$0xff] %v4228
    %4512 = vst [vmem:[%s4330] ss:$9 sm:$0xff] %v4229
    %4513 = vst [vmem:[%s4332] ss:$9 sm:$0xff] %v4230
    %v4514 = vld [vmem:[#allocation1] sm:$0xff]
    %4515 = vst [vmem:[#allocation1] ss:$9 sm:$0xff] %v4231
    %4516 = vst [vmem:[%s4320] ss:$9 sm:$0xff] %v4232
    %4517 = vst [vmem:[%s4322] ss:$9 sm:$0xff] %v4233
    %4518 = vst [vmem:[%s4324] ss:$9 sm:$0xff] %v4234
    %4519 = vst [vmem:[%s4326] ss:$9 sm:$0xff] %v4235
    %4520 = vst [vmem:[%s4328] ss:$9 sm:$0xff] %v4236
    %4521 = vst [vmem:[%s4330] ss:$9 sm:$0xff] %v4237
    %4522 = vst [vmem:[%s4332] ss:$9 sm:$0xff] %v4238
    %v4523 = vld [vmem:[#allocation1] sm:$0xff]
    %4524 = vst [vmem:[#allocation1] ss:$9 sm:$0xff] %v4239
    %4525 = vst [vmem:[%s4320] ss:$9 sm:$0xff] %v4240
    %4526 = vst [vmem:[%s4322] ss:$9 sm:$0xff] %v4241
    %4527 = vst [vmem:[%s4324] ss:$9 sm:$0xff] %v4242
    %4528 = vst [vmem:[%s4326] ss:$9 sm:$0xff] %v4243
    %4529 = vst [vmem:[%s4328] ss:$9 sm:$0xff] %v4244
    %4530 = vst [vmem:[%s4330] ss:$9 sm:$0xff] %v4245
    %4531 = vst [vmem:[%s4332] ss:$9 sm:$0xff] %v4246
    %v4532 = vld [vmem:[#allocation1] sm:$0xff]
    %4533 = vst [vmem:[#allocation1] ss:$9 sm:$0xff] %v4247
    %4534 = vst [vmem:[%s4320] ss:$9 sm:$0xff] %v4248
    %4535 = vst [vmem:[%s4322] ss:$9 sm:$0xff] %v4249
    %4536 = vst [vmem:[%s4324] ss:$9 sm:$0xff] %v4250
    %4537 = vst [vmem:[%s4326] ss:$9 sm:$0xff] %v4251
    %4538 = vst [vmem:[%s4328] ss:$9 sm:$0xff] %v4252
    %4539 = vst [vmem:[%s4330] ss:$9 sm:$0xff] %v4253
    %4540 = vst [vmem:[%s4332] ss:$9 sm:$0xff] %v4254
    %v4541 = vld [vmem:[#allocation1] sm:$0xff]
    %4542 = vst [vmem:[#allocation1] ss:$9 sm:$0xff] %v4255
    %4543 = vst [vmem:[%s4320] ss:$9 sm:$0xff] %v4256
    %4544 = vst [vmem:[%s4322] ss:$9 sm:$0xff] %v4257
    %4545 = vst [vmem:[%s4324] ss:$9 sm:$0xff] %v4258
    %4546 = vst [vmem:[%s4326] ss:$9 sm:$0xff] %v4259
    %4547 = vst [vmem:[%s4328] ss:$9 sm:$0xff] %v4260
    %4548 = vst [vmem:[%s4330] ss:$9 sm:$0xff] %v4261
    %4549 = vst [vmem:[%s4332] ss:$9 sm:$0xff] %v4262
    %v4550 = vld [vmem:[#allocation1] sm:$0xff]
    %4551 = vst [vmem:[#allocation1] ss:$9 sm:$0xff] %v4263
    %4552 = vst [vmem:[%s4320] ss:$9 sm:$0xff] %v4264
    %4553 = vst [vmem:[%s4322] ss:$9 sm:$0xff] %v4265
    %4554 = vst [vmem:[%s4324] ss:$9 sm:$0xff] %v4266
    %4555 = vst [vmem:[%s4326] ss:$9 sm:$0xff] %v4267
    %4556 = vst [vmem:[%s4328] ss:$9 sm:$0xff] %v4268
    %4557 = vst [vmem:[%s4330] ss:$9 sm:$0xff] %v4269
    %4558 = vst [vmem:[%s4332] ss:$9 sm:$0xff] %v4270
    %v4559 = vld [vmem:[#allocation1] sm:$0xff]
    %4560 = vst [vmem:[#allocation1] ss:$9 sm:$0xff] %v4271
    %4561 = vst [vmem:[%s4320] ss:$9 sm:$0xff] %v4272
    %4562 = vst [vmem:[%s4322] ss:$9 sm:$0xff] %v4273
    %4563 = vst [vmem:[%s4324] ss:$9 sm:$0xff] %v4274
    %4564 = vst [vmem:[%s4326] ss:$9 sm:$0xff] %v4275
    %4565 = vst [vmem:[%s4328] ss:$9 sm:$0xff] %v4276
    %4566 = vst [vmem:[%s4330] ss:$9 sm:$0xff] %v4277
    %4567 = vst [vmem:[%s4332] ss:$9 sm:$0xff] %v4278
    %v4568 = vld [vmem:[#allocation1] sm:$0xff]
    %4569 = vst [vmem:[#allocation1] ss:$9 sm:$0xff] %v4279
    %4570 = vst [vmem:[%s4320] ss:$9 sm:$0xff] %v4280
    %4571 = vst [vmem:[%s4322] ss:$9 sm:$0xff] %v4281
    %4572 = vst [vmem:[%s4324] ss:$9 sm:$0xff] %v4282
    %4573 = vst [vmem:[%s4326] ss:$9 sm:$0xff] %v4283
    %4574 = vst [vmem:[%s4328] ss:$9 sm:$0xff] %v4284
    %4575 = vst [vmem:[%s4330] ss:$9 sm:$0xff] %v4285
    %4576 = vst [vmem:[%s4332] ss:$9 sm:$0xff] %v4286
    %v4577 = vld [vmem:[#allocation1] sm:$0xff]
    %4578 = vst [vmem:[#allocation1] ss:$9 sm:$0xff] %v4287
    %4579 = vst [vmem:[%s4320] ss:$9 sm:$0xff] %v4288
    %4580 = vst [vmem:[%s4322] ss:$9 sm:$0xff] %v4289
    %4581 = vst [vmem:[%s4324] ss:$9 sm:$0xff] %v4290
    %4582 = vst [vmem:[%s4326] ss:$9 sm:$0xff] %v4291
    %4583 = vst [vmem:[%s4328] ss:$9 sm:$0xff] %v4292
    %4584 = vst [vmem:[%s4330] ss:$9 sm:$0xff] %v4293
    %4585 = vst [vmem:[%s4332] ss:$9 sm:$0xff] %v4294
    %v4586 = vld [vmem:[#allocation1] sm:$0xff]
    %4587 = vst [vmem:[#allocation1] ss:$9 sm:$0xff] %v4295
    %4588 = vst [vmem:[%s4320] ss:$9 sm:$0xff] %v4296
    %4589 = vst [vmem:[%s4322] ss:$9 sm:$0xff] %v4297
    %4590 = vst [vmem:[%s4324] ss:$9 sm:$0xff] %v4298
    %4591 = vst [vmem:[%s4326] ss:$9 sm:$0xff] %v4299
    %4592 = vst [vmem:[%s4328] ss:$9 sm:$0xff] %v4300
    %4593 = vst [vmem:[%s4330] ss:$9 sm:$0xff] %v4301
    %4594 = vst [vmem:[%s4332] ss:$9 sm:$0xff] %v4302
    %v4595 = vld [vmem:[#allocation1] sm:$0xff]
    %4596 = vst [vmem:[#allocation1] ss:$9 sm:$0xff] %v4303
    %4597 = vst [vmem:[%s4320] ss:$9 sm:$0xff] %v4304
    %4598 = vst [vmem:[%s4322] ss:$9 sm:$0xff] %v4305
    %4599 = vst [vmem:[%s4324] ss:$9 sm:$0xff] %v4306
    %4600 = vst [vmem:[%s4326] ss:$9 sm:$0xff] %v4307
    %4601 = vst [vmem:[%s4328] ss:$9 sm:$0xff] %v4308
    %4602 = vst [vmem:[%s4330] ss:$9 sm:$0xff] %v4309
    %4603 = vst [vmem:[%s4332] ss:$9 sm:$0xff] %v4310
    %v4604 = vld [vmem:[#allocation1] sm:$0xff]
    %4605 = vst [vmem:[#allocation1] ss:$9 sm:$0xff] %v4311
    %4606 = vst [vmem:[%s4320] ss:$9 sm:$0xff] %v4312
    %4607 = vst [vmem:[%s4322] ss:$9 sm:$0xff] %v4313
    %4608 = vst [vmem:[%s4324] ss:$9 sm:$0xff] %v4314
    %4609 = vst [vmem:[%s4326] ss:$9 sm:$0xff] %v4315
    %4610 = vst [vmem:[%s4328] ss:$9 sm:$0xff] %v4316
    %4611 = vst [vmem:[%s4330] ss:$9 sm:$0xff] %v4317
    %4612 = vst [vmem:[%s4332] ss:$9 sm:$0xff] %v4318
    %v4613 = vld [vmem:[#allocation1] sm:$0xff]
    %4614 = vset.pattern.permute.xlu0 0
    %4615 = vperm.xlu0 %4614, %v4334
    %v4616 = vpop.permute.xlu0 %4615
    %4617 = vset.pattern.permute.xlu0 0
    %4618 = vperm.xlu0 %4617, %v4343
    %v4619 = vpop.permute.xlu0 %4618
    %4620 = vset.pattern.permute.xlu0 0
    %4621 = vperm.xlu0 %4620, %v4352
    %v4622 = vpop.permute.xlu0 %4621
    %4623 = vset.pattern.permute.xlu0 0
    %4624 = vperm.xlu0 %4623, %v4361
    %v4625 = vpop.permute.xlu0 %4624
    %4626 = vset.pattern.permute.xlu0 0
    %4627 = vperm.xlu0 %4626, %v4370
    %v4628 = vpop.permute.xlu0 %4627
    %4629 = vset.pattern.permute.xlu0 0
    %4630 = vperm.xlu0 %4629, %v4379
    %v4631 = vpop.permute.xlu0 %4630
    %4632 = vset.pattern.permute.xlu0 0
    %4633 = vperm.xlu0 %4632, %v4388
    %v4634 = vpop.permute.xlu0 %4633
    %4635 = vset.pattern.permute.xlu0 0
    %4636 = vperm.xlu0 %4635, %v4397
    %v4637 = vpop.permute.xlu0 %4636
    %4638 = vset.pattern.permute.xlu0 0
    %4639 = vperm.xlu0 %4638, %v4406
    %v4640 = vpop.permute.xlu0 %4639
    %4641 = vset.pattern.permute.xlu0 0
    %4642 = vperm.xlu0 %4641, %v4415
    %v4643 = vpop.permute.xlu0 %4642
    %4644 = vset.pattern.permute.xlu0 0
    %4645 = vperm.xlu0 %4644, %v4424
    %v4646 = vpop.permute.xlu0 %4645
    %4647 = vset.pattern.permute.xlu0 0
    %4648 = vperm.xlu0 %4647, %v4433
    %v4649 = vpop.permute.xlu0 %4648
    %4650 = vset.pattern.permute.xlu0 0
    %4651 = vperm.xlu0 %4650, %v4442
    %v4652 = vpop.permute.xlu0 %4651
    %4653 = vset.pattern.permute.xlu0 0
    %4654 = vperm.xlu0 %4653, %v4451
    %v4655 = vpop.permute.xlu0 %4654
    %4656 = vset.pattern.permute.xlu0 0
    %4657 = vperm.xlu0 %4656, %v4460
    %v4658 = vpop.permute.xlu0 %4657
    %4659 = vset.pattern.permute.xlu0 0
    %4660 = vperm.xlu0 %4659, %v4469
    %v4661 = vpop.permute.xlu0 %4660
    %4662 = vset.pattern.permute.xlu0 0
    %4663 = vperm.xlu0 %4662, %v4478
    %v4664 = vpop.permute.xlu0 %4663
    %4665 = vset.pattern.permute.xlu0 0
    %4666 = vperm.xlu0 %4665, %v4487
    %v4667 = vpop.permute.xlu0 %4666
    %4668 = vset.pattern.permute.xlu0 0
    %4669 = vperm.xlu0 %4668, %v4496
    %v4670 = vpop.permute.xlu0 %4669
    %4671 = vset.pattern.permute.xlu0 0
    %4672 = vperm.xlu0 %4671, %v4505
    %v4673 = vpop.permute.xlu0 %4672
    %4674 = vset.pattern.permute.xlu0 0
    %4675 = vperm.xlu0 %4674, %v4514
    %v4676 = vpop.permute.xlu0 %4675
    %4677 = vset.pattern.permute.xlu0 0
    %4678 = vperm.xlu0 %4677, %v4523
    %v4679 = vpop.permute.xlu0 %4678
    %4680 = vset.pattern.permute.xlu0 0
    %4681 = vperm.xlu0 %4680, %v4532
    %v4682 = vpop.permute.xlu0 %4681
    %4683 = vset.pattern.permute.xlu0 0
    %4684 = vperm.xlu0 %4683, %v4541
    %v4685 = vpop.permute.xlu0 %4684
    %4686 = vset.pattern.permute.xlu0 0
    %4687 = vperm.xlu0 %4686, %v4550
    %v4688 = vpop.permute.xlu0 %4687
    %4689 = vset.pattern.permute.xlu0 0
    %4690 = vperm.xlu0 %4689, %v4559
    %v4691 = vpop.permute.xlu0 %4690
    %4692 = vset.pattern.permute.xlu0 0
    %4693 = vperm.xlu0 %4692, %v4568
    %v4694 = vpop.permute.xlu0 %4693
    %4695 = vset.pattern.permute.xlu0 0
    %4696 = vperm.xlu0 %4695, %v4577
    %v4697 = vpop.permute.xlu0 %4696
    %4698 = vset.pattern.permute.xlu0 0
    %4699 = vperm.xlu0 %4698, %v4586
    %v4700 = vpop.permute.xlu0 %4699
    %4701 = vset.pattern.permute.xlu0 0
    %4702 = vperm.xlu0 %4701, %v4595
    %v4703 = vpop.permute.xlu0 %4702
    %4704 = vset.pattern.permute.xlu0 0
    %4705 = vperm.xlu0 %4704, %v4604
    %v4706 = vpop.permute.xlu0 %4705
    %4707 = vset.pattern.permute.xlu0 0
    %4708 = vperm.xlu0 %4707, %v4613
    %v4709 = vpop.permute.xlu0 %4708
    %v4710 = vperm.slane %v4616, %v3929
    %v4711 = vperm.slane %v4619, %v3931
    %v4712 = vsel %vm3933, %v4711, %v4710
    %v4713 = vperm.slane %v4622, %v3935
    %v4714 = vsel %vm3937, %v4713, %v4712
    %v4715 = vperm.slane %v4625, %v3939
    %v4716 = vsel %vm3941, %v4715, %v4714
    %v4717 = vperm.slane %v4628, %v3943
    %v4718 = vsel %vm3945, %v4717, %v4716
    %v4719 = vperm.slane %v4631, %v3947
    %v4720 = vsel %vm3949, %v4719, %v4718
    %v4721 = vperm.slane %v4634, %v3951
    %v4722 = vsel %vm3953, %v4721, %v4720
    %v4723 = vperm.slane %v4637, %v3955
    %v4724 = vsel %vm3957, %v4723, %v4722
    %v4725 = vperm.slane %v4640, %v3959
    %v4726 = vsel %vm3961, %v4725, %v4724
    %v4727 = vperm.slane %v4643, %v3963
    %v4728 = vsel %vm3965, %v4727, %v4726
    %v4729 = vperm.slane %v4646, %v3967
    %v4730 = vsel %vm3969, %v4729, %v4728
    %v4731 = vperm.slane %v4649, %v3971
    %v4732 = vsel %vm3973, %v4731, %v4730
    %v4733 = vperm.slane %v4652, %v3975
    %v4734 = vsel %vm3977, %v4733, %v4732
    %v4735 = vperm.slane %v4655, %v3979
    %v4736 = vsel %vm3981, %v4735, %v4734
    %v4737 = vperm.slane %v4658, %v3983
    %v4738 = vsel %vm3985, %v4737, %v4736
    %v4739 = vperm.slane %v4661, %v3987
    %v4740 = vsel %vm3989, %v4739, %v4738
    %v4741 = vperm.slane %v4664, %v3929
    %v4742 = vperm.slane %v4667, %v3931
    %v4743 = vsel %vm3933, %v4742, %v4741
    %v4744 = vperm.slane %v4670, %v3935
    %v4745 = vsel %vm3937, %v4744, %v4743
    %v4746 = vperm.slane %v4673, %v3939
    %v4747 = vsel %vm3941, %v4746, %v4745
    %v4748 = vperm.slane %v4676, %v3943
    %v4749 = vsel %vm3945, %v4748, %v4747
    %v4750 = vperm.slane %v4679, %v3947
    %v4751 = vsel %vm3949, %v4750, %v4749
    %v4752 = vperm.slane %v4682, %v3951
    %v4753 = vsel %vm3953, %v4752, %v4751
    %v4754 = vperm.slane %v4685, %v3955
    %v4755 = vsel %vm3957, %v4754, %v4753
    %v4756 = vperm.slane %v4688, %v3959
    %v4757 = vsel %vm3961, %v4756, %v4755
    %v4758 = vperm.slane %v4691, %v3963
    %v4759 = vsel %vm3965, %v4758, %v4757
    %v4760 = vperm.slane %v4694, %v3967
    %v4761 = vsel %vm3969, %v4760, %v4759
    %v4762 = vperm.slane %v4697, %v3971
    %v4763 = vsel %vm3973, %v4762, %v4761
    %v4764 = vperm.slane %v4700, %v3975
    %v4765 = vsel %vm3977, %v4764, %v4763
    %v4766 = vperm.slane %v4703, %v3979
    %v4767 = vsel %vm3981, %v4766, %v4765
    %v4768 = vperm.slane %v4706, %v3983
    %v4769 = vsel %vm3985, %v4768, %v4767
    %v4770 = vperm.slane %v4709, %v3987
    %v4771 = vsel %vm3989, %v4770, %v4769
    %v4772 = vrot.slane %v4771, 7
    %v4773 = vsel %vm4023, %v4740, %v4772
    %4775 = vst.msk [vmem:[#allocation20] sm:$0x3] %vm4029, %v4773
    // Predicated region
    $region66: #{tpu_custom_call.1} parent=1 // pred_check
      _
    $region67: #{tpu_custom_call.1} parent=1 // pred_check_branch
      %4777 = sbr.rel (0) target = $region69
    $region68: #{tpu_custom_call.1} parent=1 // pred_region
      %4779 = vsyncadd [#allocation4], 0
      %s4780 = sshll.u32 [#allocation13], 4
      %s4781 = int_to_ptr.vmem [resolvable:$true] %s4780
      %s4782 = sshll.u32 %s10, 4
      %s4783 = int_to_ptr.hbm [resolvable:$true] %s4782
      %4788 = dma.vmem_to_hbm [thread:$0]  %s4781, 4096, %s4783, [#allocation4], 128, 128, 8
    $region69: #{tpu_custom_call.1} parent=1 // pred_fallthru
      _
    // Predicated region
    $region70: #{tpu_custom_call.1} parent=1 // pred_check
      _
    $region71: #{tpu_custom_call.1} parent=1 // pred_check_branch
      %4790 = sbr.rel (0) target = $region73
    $region72: #{tpu_custom_call.1} parent=1 // pred_region
      %4792 = vsyncadd [#allocation15], 0
      %s4793 = sshll.u32 [#allocation14], 4
      %s4794 = int_to_ptr.vmem [resolvable:$true] %s4793
      %s4795 = sshll.u32 %s11, 4
      %s4796 = int_to_ptr.hbm [resolvable:$true] %s4795
      %4801 = dma.vmem_to_hbm [thread:$0]  %s4794, 4096, %s4796, [#allocation15], 128, 128, 8
    $region73: #{tpu_custom_call.1} parent=1 // pred_fallthru
      _
    // Predicated region
    $region74: #{tpu_custom_call.1} parent=1 // pred_check
      _
    $region75: #{tpu_custom_call.1} parent=1 // pred_check_branch
      %4803 = sbr.rel (0) target = $region77
    $region76: #{tpu_custom_call.1} parent=1 // pred_region
      %4805 = vsyncadd [#allocation15], 0
      %s4806 = sshll.u32 [#allocation16], 4
      %s4807 = int_to_ptr.vmem [resolvable:$true] %s4806
      %s4808 = sshll.u32 %s12, 4
      %s4809 = int_to_ptr.hbm [resolvable:$true] %s4808
      %4814 = dma.vmem_to_hbm [thread:$0]  %s4807, 4096, %s4809, [#allocation15], 128, 128, 8
    $region77: #{tpu_custom_call.1} parent=1 // pred_fallthru
      _
    // Predicated region
    $region78: #{tpu_custom_call.1} parent=1 // pred_check
      _
    $region79: #{tpu_custom_call.1} parent=1 // pred_check_branch
      %4816 = sbr.rel (0) target = $region81
    $region80: #{tpu_custom_call.1} parent=1 // pred_region
      %4818 = vsyncadd [#allocation18], 0
      %s4819 = sshll.u32 [#allocation17], 4
      %s4820 = int_to_ptr.vmem [resolvable:$true] %s4819
      %s4821 = sshll.u32 %s13, 4
      %s4822 = int_to_ptr.hbm [resolvable:$true] %s4821
      %4827 = dma.vmem_to_hbm [thread:$0]  %s4820, 4096, %s4822, [#allocation18], 128, 128, 8
    $region81: #{tpu_custom_call.1} parent=1 // pred_fallthru
      _
    // Predicated region
    $region82: #{tpu_custom_call.1} parent=1 // pred_check
      _
    $region83: #{tpu_custom_call.1} parent=1 // pred_check_branch
      %4829 = sbr.rel (0) target = $region85
    $region84: #{tpu_custom_call.1} parent=1 // pred_region
      %4831 = vsyncadd [#allocation18], 0
      %s4833 = sshll.u32 [#allocation19], 4
      %s4834 = int_to_ptr.vmem [resolvable:$true] %s4833
      %s4835 = sshll.u32 %s14, 4
      %s4836 = int_to_ptr.hbm [resolvable:$true] %s4835
      %4838 = dma.vmem_to_hbm [thread:$0]  %s4834, 32, %s4836, [#allocation18]
    $region85: #{tpu_custom_call.1} parent=1 // pred_fallthru
      _
    // Predicated region
    $region86: #{tpu_custom_call.1} parent=1 // pred_check
      _
    $region87: #{tpu_custom_call.1} parent=1 // pred_check_branch
      %4840 = sbr.rel (0) target = $region89
    $region88: #{tpu_custom_call.1} parent=1 // pred_region
      %4842 = vsyncadd [#allocation21], 0
      %s4844 = sshll.u32 [#allocation20], 4
      %s4845 = int_to_ptr.vmem [resolvable:$true] %s4844
      %s4846 = sshll.u32 %s15, 4
      %s4847 = int_to_ptr.hbm [resolvable:$true] %s4846
      %4849 = dma.vmem_to_hbm [thread:$0]  %s4845, 32, %s4847, [#allocation21]
    $region89: #{tpu_custom_call.1} parent=1 // pred_fallthru
      _
    // Predicated region
    $region90: #{tpu_custom_call.1} parent=1 // pred_check
      _
    $region91: #{tpu_custom_call.1} parent=1 // pred_check_branch
      %4851 = sbr.rel (0) target = $region93
    $region92: #{tpu_custom_call.1} parent=1 // pred_region
      %4853 = dma.done [#allocation4], 4096
    $region93: #{tpu_custom_call.1} parent=1 // pred_fallthru
      _
    // Predicated region
    $region94: #{tpu_custom_call.1} parent=1 // pred_check
      _
    $region95: #{tpu_custom_call.1} parent=1 // pred_check_branch
      %4855 = sbr.rel (0) target = $region97
    $region96: #{tpu_custom_call.1} parent=1 // pred_region
      %4857 = dma.done [#allocation15], 4096
    $region97: #{tpu_custom_call.1} parent=1 // pred_fallthru
      _
    // Predicated region
    $region98: #{tpu_custom_call.1} parent=1 // pred_check
      _
    $region99: #{tpu_custom_call.1} parent=1 // pred_check_branch
      %4859 = sbr.rel (0) target = $region101
    $region100: #{tpu_custom_call.1} parent=1 // pred_region
      %4861 = dma.done [#allocation15], 4096
    $region101: #{tpu_custom_call.1} parent=1 // pred_fallthru
      _
    // Predicated region
    $region102: #{tpu_custom_call.1} parent=1 // pred_check
      _
    $region103: #{tpu_custom_call.1} parent=1 // pred_check_branch
      %4863 = sbr.rel (0) target = $region105
    $region104: #{tpu_custom_call.1} parent=1 // pred_region
      %4865 = dma.done [#allocation18], 4096
    $region105: #{tpu_custom_call.1} parent=1 // pred_fallthru
      _
    // Predicated region
    $region106: #{tpu_custom_call.1} parent=1 // pred_check
      _
    $region107: #{tpu_custom_call.1} parent=1 // pred_check_branch
      %4867 = sbr.rel (0) target = $region109
    $region108: #{tpu_custom_call.1} parent=1 // pred_region
      %4869 = dma.done [#allocation18], 32
    $region109: #{tpu_custom_call.1} parent=1 // pred_fallthru
      _
    // Predicated region
    $region110: #{tpu_custom_call.1} parent=1 // pred_check
      _
    $region111: #{tpu_custom_call.1} parent=1 // pred_check_branch
      %4871 = sbr.rel (0) target = $region113
    $region112: #{tpu_custom_call.1} parent=1 // pred_region
      %4873 = dma.done [#allocation21], 32
    $region113: #{tpu_custom_call.1} parent=1 // pred_fallthru
      _
    %4874 = vsyncpa [#allocation3], 1
    %4875 = vsyncpa [#allocation6], 1
    %4876 = vsyncpa [#allocation9], 1
    %4877 = vsyncpa [#allocation12], 1
    %4878 = vsyncpa [#allocation4], 1
    %4879 = vsyncpa [#allocation15], 1
    %4880 = vsyncpa [#allocation18], 1
    %4881 = vsyncpa [#allocation21], 1

</llo_original>
